<compile_context>
chip_gen: v5e
topology: v5e:2x2
jax: 0.10.0
libtpu: 0.0.40
codegen_flags: <defaults>
</compile_context>

<pallas_src>
import functools
import math

import jax
import jax.numpy as jnp
from jax.experimental import pallas as pl
from jax.experimental.pallas import tpu as pltpu


def _rup(v, m):
    return ((v + m - 1) // m) * m


# ---------------------------------------------------------------------------
# Fused Bottleneck kernel: one grid step == one image (all layers fused).
# ---------------------------------------------------------------------------
def _bottleneck_kernel(x_ref, w1_ref, b1_ref, w2_ref, b2_ref, w3_ref, b3_ref,
                       *rest, Ho, Wo, has_down):
    if has_down:
        wd_ref, bd_ref, o_ref, p1_ref, acc_ref = rest
    else:
        o_ref, p1_ref, acc_ref = rest

    M = Ho * Wo
    Cb = acc_ref.shape[-1]                      # padded "base" channels
    x2d = x_ref[0]                              # (M, Cin_p) bf16

    # ---- conv1 (1x1; stride already applied wrapper-side) + bn1 + relu -----
    y1 = jnp.dot(x2d, w1_ref[...], preferred_element_type=jnp.float32)
    y1 = jnp.maximum(y1 + b1_ref[...], 0.0)

    # ---- SamePad2d(3, 1): 1-pixel zero halo, kept entirely in VMEM ---------
    # (The reference's swapped H/W computation is irrelevant for k=3, s=1:
    #  padding is 1 on every side regardless.)
    p1_ref[...] = jnp.zeros_like(p1_ref)
    p1_ref[1:Ho + 1, 1:Wo + 1, :] = y1.reshape(Ho, Wo, Cb)

    # ---- conv2 (3x3, stride 1) + bn2 + relu: 9 shifted-window matmuls ------
    acc_ref[...] = jnp.zeros_like(acc_ref)
    for t in range(9):                          # static unroll (dy, dx taps)
        dy, dx = t // 3, t % 3
        win = p1_ref[dy:dy + Ho, dx:dx + Wo, :].reshape(M, Cb)
        acc_ref[...] += jnp.dot(win.astype(jnp.bfloat16), w2_ref[t],
                                preferred_element_type=jnp.float32)
    y2 = jnp.maximum(acc_ref[...] + b2_ref[...], 0.0).astype(jnp.bfloat16)

    # ---- conv3 (1x1) + bn3 + relu -------------------------------------------
    y3 = jnp.dot(y2, w3_ref[...], preferred_element_type=jnp.float32)
    y3 = jnp.maximum(y3 + b3_ref[...], 0.0)

    # ---- residual add (ReLU happens BEFORE the add, per the reference) -----
    if has_down:
        r = jnp.dot(x2d, wd_ref[...], preferred_element_type=jnp.float32)
        r = r + bd_ref[...]
    else:
        # TODO(synk): identity residual flows through the bf16 input cast.
        r = x2d.astype(jnp.float32)
    o_ref[0] = (y3 + r).astype(o_ref.dtype)


# ---------------------------------------------------------------------------
# Wrapper: NCHW in/out, NHWC + channel padding + bf16 cast inside one jit.
# ---------------------------------------------------------------------------
@functools.partial(jax.jit, static_argnames=("stride", "has_down", "cout"))
def _forward_impl(x_nchw, w1, b1, w2, b2, w3, b3, wd, bd, *,
                  stride, has_down, cout):
    x = jnp.transpose(x_nchw, (0, 2, 3, 1)).astype(jnp.float32)   # NCHW -> NHWC
    if stride > 1:
        # conv1 and downsample are both 1x1 stride-s convs with no padding:
        # subsampling x once up front is exactly equivalent.
        x = x[:, ::stride, ::stride, :]
    N, Ho, Wo, Cin = x.shape
    Cin_p, Cb_p = w1.shape
    Co_p = w3.shape[1]
    M = Ho * Wo

    # Channel-pad to the 128-lane width and cast to bf16 in one fused pass.
    xf = jnp.pad(x, ((0, 0), (0, 0), (0, 0), (0, Cin_p - Cin)))
    xf = xf.astype(jnp.bfloat16).reshape(N, M, Cin_p)

    # Conservative double-buffered VMEM footprint check (v5e scoped default
    # is 16 MiB; v7x physical VMEM is 64 MiB).
    vmem_est = 2 * (M * Cin_p * 2 + Cin_p * Cb_p * 2 + 9 * Cb_p * Cb_p * 2
                    + Cb_p * Co_p * 2 + M * Co_p * 4
                    + (2 * Cb_p + Co_p) * 4)
    if has_down:
        vmem_est += 2 * (Cin_p * Co_p * 2 + Co_p * 4)
    vmem_est += (Ho + 2) * (Wo + 2) * Cb_p * 4 + M * Cb_p * 4
    assert vmem_est <= 16 * 1024 * 1024, ("per-image VMEM footprint too large; "
                                          "needs row-band tiling", vmem_est)

    kernel = functools.partial(_bottleneck_kernel, Ho=Ho, Wo=Wo,
                               has_down=has_down)
    in_specs = [
        pl.BlockSpec((1, M, Cin_p), lambda n: (n, 0, 0)),      # x (per image)
        pl.BlockSpec((Cin_p, Cb_p), lambda n: (0, 0)),         # w1 (resident)
        pl.BlockSpec((1, Cb_p), lambda n: (0, 0)),             # b1
        pl.BlockSpec((9, Cb_p, Cb_p), lambda n: (0, 0, 0)),    # w2 taps
        pl.BlockSpec((1, Cb_p), lambda n: (0, 0)),             # b2
        pl.BlockSpec((Cb_p, Co_p), lambda n: (0, 0)),          # w3
        pl.BlockSpec((1, Co_p), lambda n: (0, 0)),             # b3
    ]
    args = [xf, w1, b1, w2, b2, w3, b3]
    if has_down:
        in_specs += [pl.BlockSpec((Cin_p, Co_p), lambda n: (0, 0)),   # wd
                     pl.BlockSpec((1, Co_p), lambda n: (0, 0))]       # bd
        args += [wd, bd]

    out = pl.pallas_call(
        kernel,
        out_shape=jax.ShapeDtypeStruct((N, M, Co_p), jnp.float32),
        grid_spec=pltpu.PrefetchScalarGridSpec(
            num_scalar_prefetch=0,
            grid=(N,),
            in_specs=in_specs,
            out_specs=pl.BlockSpec((1, M, Co_p), lambda n: (n, 0, 0)),
            scratch_shapes=[
                pltpu.VMEM((Ho + 2, Wo + 2, Cb_p), jnp.float32),  # padded conv1 out
                pltpu.VMEM((M, Cb_p), jnp.float32),               # conv2 f32 acc
            ]),
        compiler_params=pltpu.CompilerParams(
            dimension_semantics=("parallel",)),
    )(*args)

    out = out[:, :, :cout].reshape(N, Ho, Wo, cout)
    return jnp.transpose(out, (0, 3, 1, 2))                       # NHWC -> NCHW


def bottleneck_forward(x_nchw, blk):
    c1, c2, c3, dn = blk["conv1"], blk["conv2"], blk["conv3"], blk["down"]
    wd = dn["w"] if dn is not None else None
    bd = dn["bias"] if dn is not None else None
    return _forward_impl(x_nchw, c1["w"], c1["bias"], c2["w"], c2["bias"],
                         c3["w"], c3["bias"], wd, bd,
                         stride=blk["stride"], has_down=dn is not None,
                         cout=blk["cout"])


# ---------------------------------------------------------------------------
# Deterministic parameter init.  BN (eval mode, running stats (0,1)) is folded:
# the scale goes into the weight columns, the shift stays as a per-channel add.
# Weights are stored per 3x3 tap as (k*k, Cin_p, Cout_p), pre-padded to
# 128-lane multiples and pre-cast to bf16 once.
# ---------------------------------------------------------------------------
def init_conv_bn(key, cin, cout, k, cin_p, cout_p):
    k1, k2, k3, k4 = jax.random.split(key, 4)
    fan_in = cin * k * k
    w = jax.random.normal(k1, (cout, cin, k, k), jnp.float32) / math.sqrt(fan_in)
    b = 0.01 * jax.random.normal(k2, (cout,), jnp.float32)
    gamma = 1.0 + 0.1 * jax.random.normal(k3, (cout,), jnp.float32)
    beta = 0.1 * jax.random.normal(k4, (cout,), jnp.float32)
    eps = 1e-5
    scale = gamma / jnp.sqrt(1.0 + eps)          # running_var=1, running_mean=0
    bias = beta + b * scale
    # (Cout,Cin,kh,kw) -> (kh,kw,Cin,Cout) -> (kh*kw, Cin, Cout); tap t = dy*3+dx.
    w_taps = (jnp.transpose(w, (2, 3, 1, 0)).reshape(k * k, cin, cout)
              * scale[None, None, :])
    w_pad = jnp.pad(w_taps, ((0, 0), (0, cin_p - cin),
                             (0, cout_p - cout))).astype(jnp.bfloat16)
    if k == 1:
        w_pad = w_pad[0]                         # (Cin_p, Cout_p)
    b_pad = jnp.pad(bias, (0, cout_p - cout)).reshape(1, cout_p)
    return {"w": w_pad, "bias": b_pad}


def init_bottleneck(key, in_channel, base, stride=1):
    k1, k2, k3, k4 = jax.random.split(key, 4)
    cin_p = _rup(in_channel, 128)
    cb_p = _rup(base, 128)
    co_p = _rup(base * 4, 128)
    blk = {
        "conv1": init_conv_bn(k1, in_channel, base, 1, cin_p, cb_p),
        "conv2": init_conv_bn(k2, base, base, 3, cb_p, cb_p),
        "conv3": init_conv_bn(k3, base, base * 4, 1, cb_p, co_p),
        "down": None,
        "stride": stride,
        "cout": base * 4,
    }
    if stride != 1 or in_channel != base * 4:
        # downsample assumed to be Conv2d(in, base*4, 1, stride) + BN (no relu)
        blk["down"] = init_conv_bn(k4, in_channel, base * 4, 1, cin_p, co_p)
    return blk


# ---------------------------------------------------------------------------
if __name__ == "__main__":
    key = jax.random.PRNGKey(0)
    pkey, xkey = jax.random.split(key)

    in_channel, base, stride = 64, 32, 1          # downsample needed (64 != 128)
    blk = init_bottleneck(pkey, in_channel, base, stride)
    x = jax.random.normal(xkey, (2, in_channel, 16, 16), jnp.float32)  # NCHW

    out = bottleneck_forward(x, blk)
    out = jax.block_until_ready(out)

    assert out.shape == (2, base * 4, 16, 16), out.shape
    assert bool(jnp.all(jnp.isfinite(out)))
    print("KERNEL_OK")
</pallas_src>

<mosaic_0001>
module attributes {stable_mosaic.version = 11 : i64} {
  func.func @_bottleneck_kernel(%arg0: i32, %arg1: memref<1x256x128xbf16, #tpu.memory_space<vmem>>, %arg2: memref<128x128xbf16, #tpu.memory_space<vmem>>, %arg3: memref<1x128xf32, #tpu.memory_space<vmem>>, %arg4: memref<9x128x128xbf16, #tpu.memory_space<vmem>>, %arg5: memref<1x128xf32, #tpu.memory_space<vmem>>, %arg6: memref<128x128xbf16, #tpu.memory_space<vmem>>, %arg7: memref<1x128xf32, #tpu.memory_space<vmem>>, %arg8: memref<128x128xbf16, #tpu.memory_space<vmem>>, %arg9: memref<1x128xf32, #tpu.memory_space<vmem>>, %arg10: memref<1x256x128xf32, #tpu.memory_space<vmem>>, %arg11: memref<18x18x128xf32, #tpu.memory_space<vmem>>, %arg12: memref<256x128xf32, #tpu.memory_space<vmem>>) attributes {dimension_semantics = [#tpu.dimension_semantics<parallel>], iteration_bounds = array<i64: 2>, scalar_prefetch = 0 : i64, scratch_operands = 2 : i64, tpu.core_type = #tpu.core_type<tc>, window_params = [{transform_indices = @transform_0, window_bounds = array<i64: 1, 256, 128>}, {pipeline_mode = #tpu.pipeline_mode<synchronous>, transform_indices = @transform_1, window_bounds = array<i64: 128, 128>}, {pipeline_mode = #tpu.pipeline_mode<synchronous>, transform_indices = @transform_2, window_bounds = array<i64: 1, 128>}, {pipeline_mode = #tpu.pipeline_mode<synchronous>, transform_indices = @transform_3, window_bounds = array<i64: 9, 128, 128>}, {pipeline_mode = #tpu.pipeline_mode<synchronous>, transform_indices = @transform_4, window_bounds = array<i64: 1, 128>}, {pipeline_mode = #tpu.pipeline_mode<synchronous>, transform_indices = @transform_5, window_bounds = array<i64: 128, 128>}, {pipeline_mode = #tpu.pipeline_mode<synchronous>, transform_indices = @transform_6, window_bounds = array<i64: 1, 128>}, {pipeline_mode = #tpu.pipeline_mode<synchronous>, transform_indices = @transform_7, window_bounds = array<i64: 128, 128>}, {pipeline_mode = #tpu.pipeline_mode<synchronous>, transform_indices = @transform_8, window_bounds = array<i64: 1, 128>}, {transform_indices = @transform_9, window_bounds = array<i64: 1, 256, 128>}]} {
    %c0 = arith.constant 0 : index
    %c0_0 = arith.constant 0 : index
    %c0_1 = arith.constant 0 : index
    %0 = vector.load %arg1[%c0, %c0_0, %c0_1] : memref<1x256x128xbf16, #tpu.memory_space<vmem>>, vector<1x256x128xbf16>
    %1 = vector.shape_cast %0 : vector<1x256x128xbf16> to vector<256x128xbf16>
    %c0_2 = arith.constant 0 : index
    %c0_3 = arith.constant 0 : index
    %2 = vector.load %arg2[%c0_2, %c0_3] : memref<128x128xbf16, #tpu.memory_space<vmem>>, vector<128x128xbf16>
    %cst = arith.constant dense<0.000000e+00> : vector<256x128xf32>
    %3 = tpu.matmul %1, %2, %cst {dimension_numbers = #tpu.dot_dimension_numbers<[1], [0], [0], [1], [0, 0, 1, 1], [], []>} : vector<256x128xbf16>, vector<128x128xbf16>, vector<256x128xf32> -> vector<256x128xf32>
    %c0_4 = arith.constant 0 : index
    %c0_5 = arith.constant 0 : index
    %4 = vector.load %arg3[%c0_4, %c0_5] : memref<1x128xf32, #tpu.memory_space<vmem>>, vector<1x128xf32>
    %5 = vector.broadcast %4 : vector<1x128xf32> to vector<256x128xf32>
    %6 = arith.addf %3, %5 : vector<256x128xf32>
    %cst_6 = arith.constant 0.000000e+00 : f32
    %7 = vector.broadcast %cst_6 : f32 to vector<256x128xf32>
    %8 = arith.maximumf %6, %7 : vector<256x128xf32>
    %cst_7 = arith.constant 0.000000e+00 : f32
    %9 = vector.broadcast %cst_7 : f32 to vector<18x18x128xf32>
    %c0_8 = arith.constant 0 : index
    %c0_9 = arith.constant 0 : index
    %c0_10 = arith.constant 0 : index
    %10 = vector.load %arg11[%c0_8, %c0_9, %c0_10] : memref<18x18x128xf32, #tpu.memory_space<vmem>>, vector<18x18x128xf32>
    tpu.vector_store %arg11[%c0_8, %c0_9, %c0_10], %9 {strides = array<i32>} : memref<18x18x128xf32, #tpu.memory_space<vmem>>, vector<18x18x128xf32>,
    %11 = vector.shape_cast %8 : vector<256x128xf32> to vector<16x16x128xf32>
    %c1 = arith.constant 1 : index
    %c1_11 = arith.constant 1 : index
    %c0_12 = arith.constant 0 : index
    %12 = vector.load %arg11[%c1, %c1_11, %c0_12] : memref<18x18x128xf32, #tpu.memory_space<vmem>>, vector<16x16x128xf32>
    tpu.vector_store %arg11[%c1, %c1_11, %c0_12], %11 {strides = array<i32>} : memref<18x18x128xf32, #tpu.memory_space<vmem>>, vector<16x16x128xf32>,
    %cst_13 = arith.constant 0.000000e+00 : f32
    %13 = vector.broadcast %cst_13 : f32 to vector<256x128xf32>
    %c0_14 = arith.constant 0 : index
    %c0_15 = arith.constant 0 : index
    %14 = vector.load %arg12[%c0_14, %c0_15] : memref<256x128xf32, #tpu.memory_space<vmem>>, vector<256x128xf32>
    tpu.vector_store %arg12[%c0_14, %c0_15], %13 {strides = array<i32>} : memref<256x128xf32, #tpu.memory_space<vmem>>, vector<256x128xf32>,
    %c0_16 = arith.constant 0 : index
    %c0_17 = arith.constant 0 : index
    %c0_18 = arith.constant 0 : index
    %15 = vector.load %arg11[%c0_16, %c0_17, %c0_18] : memref<18x18x128xf32, #tpu.memory_space<vmem>>, vector<16x16x128xf32>
    %16 = vector.shape_cast %15 : vector<16x16x128xf32> to vector<256x128xf32>
    %c0_19 = arith.constant 0 : index
    %c0_20 = arith.constant 0 : index
    %17 = vector.load %arg12[%c0_19, %c0_20] : memref<256x128xf32, #tpu.memory_space<vmem>>, vector<256x128xf32>
    %18 = arith.truncf %16 : vector<256x128xf32> to vector<256x128xbf16>
    %c0_21 = arith.constant 0 : index
    %c0_22 = arith.constant 0 : index
    %c0_23 = arith.constant 0 : index
    %19 = vector.load %arg4[%c0_21, %c0_22, %c0_23] : memref<9x128x128xbf16, #tpu.memory_space<vmem>>, vector<1x128x128xbf16>
    %20 = vector.shape_cast %19 : vector<1x128x128xbf16> to vector<128x128xbf16>
    %cst_24 = arith.constant dense<0.000000e+00> : vector<256x128xf32>
    %21 = tpu.matmul %18, %20, %cst_24 {dimension_numbers = #tpu.dot_dimension_numbers<[1], [0], [0], [1], [0, 0, 1, 1], [], []>} : vector<256x128xbf16>, vector<128x128xbf16>, vector<256x128xf32> -> vector<256x128xf32>
    %22 = arith.addf %17, %21 : vector<256x128xf32>
    %c0_25 = arith.constant 0 : index
    %c0_26 = arith.constant 0 : index
    %23 = vector.load %arg12[%c0_25, %c0_26] : memref<256x128xf32, #tpu.memory_space<vmem>>, vector<256x128xf32>
    tpu.vector_store %arg12[%c0_25, %c0_26], %22 {strides = array<i32>} : memref<256x128xf32, #tpu.memory_space<vmem>>, vector<256x128xf32>,
    %c0_27 = arith.constant 0 : index
    %c1_28 = arith.constant 1 : index
    %c0_29 = arith.constant 0 : index
    %24 = vector.load %arg11[%c0_27, %c1_28, %c0_29] : memref<18x18x128xf32, #tpu.memory_space<vmem>>, vector<16x16x128xf32>
    %25 = vector.shape_cast %24 : vector<16x16x128xf32> to vector<256x128xf32>
    %c0_30 = arith.constant 0 : index
    %c0_31 = arith.constant 0 : index
    %26 = vector.load %arg12[%c0_30, %c0_31] : memref<256x128xf32, #tpu.memory_space<vmem>>, vector<256x128xf32>
    %27 = arith.truncf %25 : vector<256x128xf32> to vector<256x128xbf16>
    %c1_32 = arith.constant 1 : index
    %c0_33 = arith.constant 0 : index
    %c0_34 = arith.constant 0 : index
    %28 = vector.load %arg4[%c1_32, %c0_33, %c0_34] : memref<9x128x128xbf16, #tpu.memory_space<vmem>>, vector<1x128x128xbf16>
    %29 = vector.shape_cast %28 : vector<1x128x128xbf16> to vector<128x128xbf16>
    %cst_35 = arith.constant dense<0.000000e+00> : vector<256x128xf32>
    %30 = tpu.matmul %27, %29, %cst_35 {dimension_numbers = #tpu.dot_dimension_numbers<[1], [0], [0], [1], [0, 0, 1, 1], [], []>} : vector<256x128xbf16>, vector<128x128xbf16>, vector<256x128xf32> -> vector<256x128xf32>
    %31 = arith.addf %26, %30 : vector<256x128xf32>
    %c0_36 = arith.constant 0 : index
    %c0_37 = arith.constant 0 : index
    %32 = vector.load %arg12[%c0_36, %c0_37] : memref<256x128xf32, #tpu.memory_space<vmem>>, vector<256x128xf32>
    tpu.vector_store %arg12[%c0_36, %c0_37], %31 {strides = array<i32>} : memref<256x128xf32, #tpu.memory_space<vmem>>, vector<256x128xf32>,
    %c0_38 = arith.constant 0 : index
    %c2 = arith.constant 2 : index
    %c0_39 = arith.constant 0 : index
    %33 = vector.load %arg11[%c0_38, %c2, %c0_39] : memref<18x18x128xf32, #tpu.memory_space<vmem>>, vector<16x16x128xf32>
    %34 = vector.shape_cast %33 : vector<16x16x128xf32> to vector<256x128xf32>
    %c0_40 = arith.constant 0 : index
    %c0_41 = arith.constant 0 : index
    %35 = vector.load %arg12[%c0_40, %c0_41] : memref<256x128xf32, #tpu.memory_space<vmem>>, vector<256x128xf32>
    %36 = arith.truncf %34 : vector<256x128xf32> to vector<256x128xbf16>
    %c2_42 = arith.constant 2 : index
    %c0_43 = arith.constant 0 : index
    %c0_44 = arith.constant 0 : index
    %37 = vector.load %arg4[%c2_42, %c0_43, %c0_44] : memref<9x128x128xbf16, #tpu.memory_space<vmem>>, vector<1x128x128xbf16>
    %38 = vector.shape_cast %37 : vector<1x128x128xbf16> to vector<128x128xbf16>
    %cst_45 = arith.constant dense<0.000000e+00> : vector<256x128xf32>
    %39 = tpu.matmul %36, %38, %cst_45 {dimension_numbers = #tpu.dot_dimension_numbers<[1], [0], [0], [1], [0, 0, 1, 1], [], []>} : vector<256x128xbf16>, vector<128x128xbf16>, vector<256x128xf32> -> vector<256x128xf32>
    %40 = arith.addf %35, %39 : vector<256x128xf32>
    %c0_46 = arith.constant 0 : index
    %c0_47 = arith.constant 0 : index
    %41 = vector.load %arg12[%c0_46, %c0_47] : memref<256x128xf32, #tpu.memory_space<vmem>>, vector<256x128xf32>
    tpu.vector_store %arg12[%c0_46, %c0_47], %40 {strides = array<i32>} : memref<256x128xf32, #tpu.memory_space<vmem>>, vector<256x128xf32>,
    %c1_48 = arith.constant 1 : index
    %c0_49 = arith.constant 0 : index
    %c0_50 = arith.constant 0 : index
    %42 = vector.load %arg11[%c1_48, %c0_49, %c0_50] : memref<18x18x128xf32, #tpu.memory_space<vmem>>, vector<16x16x128xf32>
    %43 = vector.shape_cast %42 : vector<16x16x128xf32> to vector<256x128xf32>
    %c0_51 = arith.constant 0 : index
    %c0_52 = arith.constant 0 : index
    %44 = vector.load %arg12[%c0_51, %c0_52] : memref<256x128xf32, #tpu.memory_space<vmem>>, vector<256x128xf32>
    %45 = arith.truncf %43 : vector<256x128xf32> to vector<256x128xbf16>
    %c3 = arith.constant 3 : index
    %c0_53 = arith.constant 0 : index
    %c0_54 = arith.constant 0 : index
    %46 = vector.load %arg4[%c3, %c0_53, %c0_54] : memref<9x128x128xbf16, #tpu.memory_space<vmem>>, vector<1x128x128xbf16>
    %47 = vector.shape_cast %46 : vector<1x128x128xbf16> to vector<128x128xbf16>
    %cst_55 = arith.constant dense<0.000000e+00> : vector<256x128xf32>
    %48 = tpu.matmul %45, %47, %cst_55 {dimension_numbers = #tpu.dot_dimension_numbers<[1], [0], [0], [1], [0, 0, 1, 1], [], []>} : vector<256x128xbf16>, vector<128x128xbf16>, vector<256x128xf32> -> vector<256x128xf32>
    %49 = arith.addf %44, %48 : vector<256x128xf32>
    %c0_56 = arith.constant 0 : index
    %c0_57 = arith.constant 0 : index
    %50 = vector.load %arg12[%c0_56, %c0_57] : memref<256x128xf32, #tpu.memory_space<vmem>>, vector<256x128xf32>
    tpu.vector_store %arg12[%c0_56, %c0_57], %49 {strides = array<i32>} : memref<256x128xf32, #tpu.memory_space<vmem>>, vector<256x128xf32>,
    %c1_58 = arith.constant 1 : index
    %c1_59 = arith.constant 1 : index
    %c0_60 = arith.constant 0 : index
    %51 = vector.load %arg11[%c1_58, %c1_59, %c0_60] : memref<18x18x128xf32, #tpu.memory_space<vmem>>, vector<16x16x128xf32>
    %52 = vector.shape_cast %51 : vector<16x16x128xf32> to vector<256x128xf32>
    %c0_61 = arith.constant 0 : index
    %c0_62 = arith.constant 0 : index
    %53 = vector.load %arg12[%c0_61, %c0_62] : memref<256x128xf32, #tpu.memory_space<vmem>>, vector<256x128xf32>
    %54 = arith.truncf %52 : vector<256x128xf32> to vector<256x128xbf16>
    %c4 = arith.constant 4 : index
    %c0_63 = arith.constant 0 : index
    %c0_64 = arith.constant 0 : index
    %55 = vector.load %arg4[%c4, %c0_63, %c0_64] : memref<9x128x128xbf16, #tpu.memory_space<vmem>>, vector<1x128x128xbf16>
    %56 = vector.shape_cast %55 : vector<1x128x128xbf16> to vector<128x128xbf16>
    %cst_65 = arith.constant dense<0.000000e+00> : vector<256x128xf32>
    %57 = tpu.matmul %54, %56, %cst_65 {dimension_numbers = #tpu.dot_dimension_numbers<[1], [0], [0], [1], [0, 0, 1, 1], [], []>} : vector<256x128xbf16>, vector<128x128xbf16>, vector<256x128xf32> -> vector<256x128xf32>
    %58 = arith.addf %53, %57 : vector<256x128xf32>
    %c0_66 = arith.constant 0 : index
    %c0_67 = arith.constant 0 : index
    %59 = vector.load %arg12[%c0_66, %c0_67] : memref<256x128xf32, #tpu.memory_space<vmem>>, vector<256x128xf32>
    tpu.vector_store %arg12[%c0_66, %c0_67], %58 {strides = array<i32>} : memref<256x128xf32, #tpu.memory_space<vmem>>, vector<256x128xf32>,
    %c1_68 = arith.constant 1 : index
    %c2_69 = arith.constant 2 : index
    %c0_70 = arith.constant 0 : index
    %60 = vector.load %arg11[%c1_68, %c2_69, %c0_70] : memref<18x18x128xf32, #tpu.memory_space<vmem>>, vector<16x16x128xf32>
    %61 = vector.shape_cast %60 : vector<16x16x128xf32> to vector<256x128xf32>
    %c0_71 = arith.constant 0 : index
    %c0_72 = arith.constant 0 : index
    %62 = vector.load %arg12[%c0_71, %c0_72] : memref<256x128xf32, #tpu.memory_space<vmem>>, vector<256x128xf32>
    %63 = arith.truncf %61 : vector<256x128xf32> to vector<256x128xbf16>
    %c5 = arith.constant 5 : index
    %c0_73 = arith.constant 0 : index
    %c0_74 = arith.constant 0 : index
    %64 = vector.load %arg4[%c5, %c0_73, %c0_74] : memref<9x128x128xbf16, #tpu.memory_space<vmem>>, vector<1x128x128xbf16>
    %65 = vector.shape_cast %64 : vector<1x128x128xbf16> to vector<128x128xbf16>
    %cst_75 = arith.constant dense<0.000000e+00> : vector<256x128xf32>
    %66 = tpu.matmul %63, %65, %cst_75 {dimension_numbers = #tpu.dot_dimension_numbers<[1], [0], [0], [1], [0, 0, 1, 1], [], []>} : vector<256x128xbf16>, vector<128x128xbf16>, vector<256x128xf32> -> vector<256x128xf32>
    %67 = arith.addf %62, %66 : vector<256x128xf32>
    %c0_76 = arith.constant 0 : index
    %c0_77 = arith.constant 0 : index
    %68 = vector.load %arg12[%c0_76, %c0_77] : memref<256x128xf32, #tpu.memory_space<vmem>>, vector<256x128xf32>
    tpu.vector_store %arg12[%c0_76, %c0_77], %67 {strides = array<i32>} : memref<256x128xf32, #tpu.memory_space<vmem>>, vector<256x128xf32>,
    %c2_78 = arith.constant 2 : index
    %c0_79 = arith.constant 0 : index
    %c0_80 = arith.constant 0 : index
    %69 = vector.load %arg11[%c2_78, %c0_79, %c0_80] : memref<18x18x128xf32, #tpu.memory_space<vmem>>, vector<16x16x128xf32>
    %70 = vector.shape_cast %69 : vector<16x16x128xf32> to vector<256x128xf32>
    %c0_81 = arith.constant 0 : index
    %c0_82 = arith.constant 0 : index
    %71 = vector.load %arg12[%c0_81, %c0_82] : memref<256x128xf32, #tpu.memory_space<vmem>>, vector<256x128xf32>
    %72 = arith.truncf %70 : vector<256x128xf32> to vector<256x128xbf16>
    %c6 = arith.constant 6 : index
    %c0_83 = arith.constant 0 : index
    %c0_84 = arith.constant 0 : index
    %73 = vector.load %arg4[%c6, %c0_83, %c0_84] : memref<9x128x128xbf16, #tpu.memory_space<vmem>>, vector<1x128x128xbf16>
    %74 = vector.shape_cast %73 : vector<1x128x128xbf16> to vector<128x128xbf16>
    %cst_85 = arith.constant dense<0.000000e+00> : vector<256x128xf32>
    %75 = tpu.matmul %72, %74, %cst_85 {dimension_numbers = #tpu.dot_dimension_numbers<[1], [0], [0], [1], [0, 0, 1, 1], [], []>} : vector<256x128xbf16>, vector<128x128xbf16>, vector<256x128xf32> -> vector<256x128xf32>
    %76 = arith.addf %71, %75 : vector<256x128xf32>
    %c0_86 = arith.constant 0 : index
    %c0_87 = arith.constant 0 : index
    %77 = vector.load %arg12[%c0_86, %c0_87] : memref<256x128xf32, #tpu.memory_space<vmem>>, vector<256x128xf32>
    tpu.vector_store %arg12[%c0_86, %c0_87], %76 {strides = array<i32>} : memref<256x128xf32, #tpu.memory_space<vmem>>, vector<256x128xf32>,
    %c2_88 = arith.constant 2 : index
    %c1_89 = arith.constant 1 : index
    %c0_90 = arith.constant 0 : index
    %78 = vector.load %arg11[%c2_88, %c1_89, %c0_90] : memref<18x18x128xf32, #tpu.memory_space<vmem>>, vector<16x16x128xf32>
    %79 = vector.shape_cast %78 : vector<16x16x128xf32> to vector<256x128xf32>
    %c0_91 = arith.constant 0 : index
    %c0_92 = arith.constant 0 : index
    %80 = vector.load %arg12[%c0_91, %c0_92] : memref<256x128xf32, #tpu.memory_space<vmem>>, vector<256x128xf32>
    %81 = arith.truncf %79 : vector<256x128xf32> to vector<256x128xbf16>
    %c7 = arith.constant 7 : index
    %c0_93 = arith.constant 0 : index
    %c0_94 = arith.constant 0 : index
    %82 = vector.load %arg4[%c7, %c0_93, %c0_94] : memref<9x128x128xbf16, #tpu.memory_space<vmem>>, vector<1x128x128xbf16>
    %83 = vector.shape_cast %82 : vector<1x128x128xbf16> to vector<128x128xbf16>
    %cst_95 = arith.constant dense<0.000000e+00> : vector<256x128xf32>
    %84 = tpu.matmul %81, %83, %cst_95 {dimension_numbers = #tpu.dot_dimension_numbers<[1], [0], [0], [1], [0, 0, 1, 1], [], []>} : vector<256x128xbf16>, vector<128x128xbf16>, vector<256x128xf32> -> vector<256x128xf32>
    %85 = arith.addf %80, %84 : vector<256x128xf32>
    %c0_96 = arith.constant 0 : index
    %c0_97 = arith.constant 0 : index
    %86 = vector.load %arg12[%c0_96, %c0_97] : memref<256x128xf32, #tpu.memory_space<vmem>>, vector<256x128xf32>
    tpu.vector_store %arg12[%c0_96, %c0_97], %85 {strides = array<i32>} : memref<256x128xf32, #tpu.memory_space<vmem>>, vector<256x128xf32>,
    %c2_98 = arith.constant 2 : index
    %c2_99 = arith.constant 2 : index
    %c0_100 = arith.constant 0 : index
    %87 = vector.load %arg11[%c2_98, %c2_99, %c0_100] : memref<18x18x128xf32, #tpu.memory_space<vmem>>, vector<16x16x128xf32>
    %88 = vector.shape_cast %87 : vector<16x16x128xf32> to vector<256x128xf32>
    %c0_101 = arith.constant 0 : index
    %c0_102 = arith.constant 0 : index
    %89 = vector.load %arg12[%c0_101, %c0_102] : memref<256x128xf32, #tpu.memory_space<vmem>>, vector<256x128xf32>
    %90 = arith.truncf %88 : vector<256x128xf32> to vector<256x128xbf16>
    %c8 = arith.constant 8 : index
    %c0_103 = arith.constant 0 : index
    %c0_104 = arith.constant 0 : index
    %91 = vector.load %arg4[%c8, %c0_103, %c0_104] : memref<9x128x128xbf16, #tpu.memory_space<vmem>>, vector<1x128x128xbf16>
    %92 = vector.shape_cast %91 : vector<1x128x128xbf16> to vector<128x128xbf16>
    %cst_105 = arith.constant dense<0.000000e+00> : vector<256x128xf32>
    %93 = tpu.matmul %90, %92, %cst_105 {dimension_numbers = #tpu.dot_dimension_numbers<[1], [0], [0], [1], [0, 0, 1, 1], [], []>} : vector<256x128xbf16>, vector<128x128xbf16>, vector<256x128xf32> -> vector<256x128xf32>
    %94 = arith.addf %89, %93 : vector<256x128xf32>
    %c0_106 = arith.constant 0 : index
    %c0_107 = arith.constant 0 : index
    %95 = vector.load %arg12[%c0_106, %c0_107] : memref<256x128xf32, #tpu.memory_space<vmem>>, vector<256x128xf32>
    tpu.vector_store %arg12[%c0_106, %c0_107], %94 {strides = array<i32>} : memref<256x128xf32, #tpu.memory_space<vmem>>, vector<256x128xf32>,
    %c0_108 = arith.constant 0 : index
    %c0_109 = arith.constant 0 : index
    %96 = vector.load %arg12[%c0_108, %c0_109] : memref<256x128xf32, #tpu.memory_space<vmem>>, vector<256x128xf32>
    %c0_110 = arith.constant 0 : index
    %c0_111 = arith.constant 0 : index
    %97 = vector.load %arg5[%c0_110, %c0_111] : memref<1x128xf32, #tpu.memory_space<vmem>>, vector<1x128xf32>
    %98 = vector.broadcast %97 : vector<1x128xf32> to vector<256x128xf32>
    %99 = arith.addf %96, %98 : vector<256x128xf32>
    %cst_112 = arith.constant 0.000000e+00 : f32
    %100 = vector.broadcast %cst_112 : f32 to vector<256x128xf32>
    %101 = arith.maximumf %99, %100 : vector<256x128xf32>
    %102 = arith.truncf %101 : vector<256x128xf32> to vector<256x128xbf16>
    %c0_113 = arith.constant 0 : index
    %c0_114 = arith.constant 0 : index
    %103 = vector.load %arg6[%c0_113, %c0_114] : memref<128x128xbf16, #tpu.memory_space<vmem>>, vector<128x128xbf16>
    %cst_115 = arith.constant dense<0.000000e+00> : vector<256x128xf32>
    %104 = tpu.matmul %102, %103, %cst_115 {dimension_numbers = #tpu.dot_dimension_numbers<[1], [0], [0], [1], [0, 0, 1, 1], [], []>} : vector<256x128xbf16>, vector<128x128xbf16>, vector<256x128xf32> -> vector<256x128xf32>
    %c0_116 = arith.constant 0 : index
    %c0_117 = arith.constant 0 : index
    %105 = vector.load %arg7[%c0_116, %c0_117] : memref<1x128xf32, #tpu.memory_space<vmem>>, vector<1x128xf32>
    %106 = vector.broadcast %105 : vector<1x128xf32> to vector<256x128xf32>
    %107 = arith.addf %104, %106 : vector<256x128xf32>
    %cst_118 = arith.constant 0.000000e+00 : f32
    %108 = vector.broadcast %cst_118 : f32 to vector<256x128xf32>
    %109 = arith.maximumf %107, %108 : vector<256x128xf32>
    %c0_119 = arith.constant 0 : index
    %c0_120 = arith.constant 0 : index
    %110 = vector.load %arg8[%c0_119, %c0_120] : memref<128x128xbf16, #tpu.memory_space<vmem>>, vector<128x128xbf16>
    %cst_121 = arith.constant dense<0.000000e+00> : vector<256x128xf32>
    %111 = tpu.matmul %1, %110, %cst_121 {dimension_numbers = #tpu.dot_dimension_numbers<[1], [0], [0], [1], [0, 0, 1, 1], [], []>} : vector<256x128xbf16>, vector<128x128xbf16>, vector<256x128xf32> -> vector<256x128xf32>
    %c0_122 = arith.constant 0 : index
    %c0_123 = arith.constant 0 : index
    %112 = vector.load %arg9[%c0_122, %c0_123] : memref<1x128xf32, #tpu.memory_space<vmem>>, vector<1x128xf32>
    %113 = vector.broadcast %112 : vector<1x128xf32> to vector<256x128xf32>
    %114 = arith.addf %111, %113 : vector<256x128xf32>
    %115 = arith.addf %109, %114 : vector<256x128xf32>
    %c0_124 = arith.constant 0 : index
    %c0_125 = arith.constant 0 : index
    %c0_126 = arith.constant 0 : index
    %116 = vector.load %arg10[%c0_124, %c0_125, %c0_126] : memref<1x256x128xf32, #tpu.memory_space<vmem>>, vector<1x256x128xf32>
    %117 = vector.shape_cast %116 : vector<1x256x128xf32> to vector<256x128xf32>
    %118 = vector.shape_cast %115 : vector<256x128xf32> to vector<1x256x128xf32>
    tpu.vector_store %arg10[%c0_124, %c0_125, %c0_126], %118 {strides = array<i32>} : memref<1x256x128xf32, #tpu.memory_space<vmem>>, vector<1x256x128xf32>,
    return
  }
  func.func @transform_0(%arg0: i32) -> (i32, i32, i32) {
    %c0_i32 = arith.constant 0 : i32
    %c0_i32_0 = arith.constant 0 : i32
    %c0_i32_1 = arith.constant 0 : i32
    return %arg0, %c0_i32, %c0_i32_0 : i32, i32, i32
  }
  func.func @transform_1(%arg0: i32) -> (i32, i32) {
    %c0_i32 = arith.constant 0 : i32
    %c0_i32_0 = arith.constant 0 : i32
    %c0_i32_1 = arith.constant 0 : i32
    return %c0_i32, %c0_i32_0 : i32, i32
  }
  func.func @transform_2(%arg0: i32) -> (i32, i32) {
    %c0_i32 = arith.constant 0 : i32
    %c0_i32_0 = arith.constant 0 : i32
    %c0_i32_1 = arith.constant 0 : i32
    return %c0_i32, %c0_i32_0 : i32, i32
  }
  func.func @transform_3(%arg0: i32) -> (i32, i32, i32) {
    %c0_i32 = arith.constant 0 : i32
    %c0_i32_0 = arith.constant 0 : i32
    %c0_i32_1 = arith.constant 0 : i32
    %c0_i32_2 = arith.constant 0 : i32
    return %c0_i32, %c0_i32_0, %c0_i32_1 : i32, i32, i32
  }
  func.func @transform_4(%arg0: i32) -> (i32, i32) {
    %c0_i32 = arith.constant 0 : i32
    %c0_i32_0 = arith.constant 0 : i32
    %c0_i32_1 = arith.constant 0 : i32
    return %c0_i32, %c0_i32_0 : i32, i32
  }
  func.func @transform_5(%arg0: i32) -> (i32, i32) {
    %c0_i32 = arith.constant 0 : i32
    %c0_i32_0 = arith.constant 0 : i32
    %c0_i32_1 = arith.constant 0 : i32
    return %c0_i32, %c0_i32_0 : i32, i32
  }
  func.func @transform_6(%arg0: i32) -> (i32, i32) {
    %c0_i32 = arith.constant 0 : i32
    %c0_i32_0 = arith.constant 0 : i32
    %c0_i32_1 = arith.constant 0 : i32
    return %c0_i32, %c0_i32_0 : i32, i32
  }
  func.func @transform_7(%arg0: i32) -> (i32, i32) {
    %c0_i32 = arith.constant 0 : i32
    %c0_i32_0 = arith.constant 0 : i32
    %c0_i32_1 = arith.constant 0 : i32
    return %c0_i32, %c0_i32_0 : i32, i32
  }
  func.func @transform_8(%arg0: i32) -> (i32, i32) {
    %c0_i32 = arith.constant 0 : i32
    %c0_i32_0 = arith.constant 0 : i32
    %c0_i32_1 = arith.constant 0 : i32
    return %c0_i32, %c0_i32_0 : i32, i32
  }
  func.func @transform_9(%arg0: i32) -> (i32, i32, i32) {
    %c0_i32 = arith.constant 0 : i32
    %c0_i32_0 = arith.constant 0 : i32
    %c0_i32_1 = arith.constant 0 : i32
    return %arg0, %c0_i32, %c0_i32_0 : i32, i32, i32
  }
}

</mosaic_0001>

<llo_original>
// kernel: _forward_impl.1
$region0: #{_forward_impl.1}
  #allocation0 [shape = 'u32[]', space=smem, size = 0x4, offset = 0x4, fixed_abs, tag = 'smem constant byte address 0x4 - core index']
  #allocation1 [shape = 'u32[72,128]{1,0:T(1,128)}', space=vmem, size = 0x9000, scoped, tag = 'internal scratch']
  #allocation2 [shape = 'f32[18,18,128]{2,1,0:T(8,128)}', space=vmem, size = 0x36000, scoped, tag = 'scratch operand']
  #allocation3 [shape = 'f32[256,128]{1,0:T(8,128)}', space=vmem, size = 0x20000, scoped, tag = 'scratch operand']
  %s0 = inlined_call_operand.vmem [shape: bf16[2,256,128], index: 0, kind: input, shape index: {}]
  %s1 = inlined_call_operand.vmem [shape: bf16[128,128], index: 1, kind: input, shape index: {}]
  %s2 = inlined_call_operand.vmem [shape: f32[1,128], index: 2, kind: input, shape index: {}]
  %s3 = inlined_call_operand.vmem [shape: bf16[9,128,128], index: 3, kind: input, shape index: {}]
  %s4 = inlined_call_operand.vmem [shape: f32[1,128], index: 4, kind: input, shape index: {}]
  %s5 = inlined_call_operand.vmem [shape: bf16[128,128], index: 5, kind: input, shape index: {}]
  %s6 = inlined_call_operand.vmem [shape: f32[1,128], index: 6, kind: input, shape index: {}]
  %s7 = inlined_call_operand.vmem [shape: bf16[128,128], index: 7, kind: input, shape index: {}]
  %s8 = inlined_call_operand.vmem [shape: f32[1,128], index: 8, kind: input, shape index: {}]
  %s9 = inlined_call_operand.hbm [shape: f32[2,256,128], index: 9, kind: output, shape index: {}]
  %s10 = sld [smem:[#allocation0]]
  $region69: #{_forward_impl.1} parent=0
    _
  %s12 = ssub.s32 1, %s10
  %s13 = scalar_select 0, %s12, %s10
  $region1: #{_forward_impl.1} parent=0
    #allocation4 [shape = 'u8[262144]{0}', space=vmem, size = 0x40000, scoped, tag = 'output window, operand 0']
    #allocation5 [shape = 's32[2]{0}', space=sflag, size = 0x8, scoped, tag = 'scoped memory for _forward_impl.1']
    %14 = vsyncpa [#allocation5], 0
    %s15 = scalar_lea.sflag [#allocation5], 1
    %16 = vsyncpa %s15, 0
    loop: start=0, step=1, limit=4
    $region2: #{_forward_impl.1} parent=1 // loop_pre_header
      _
    $region3: #{_forward_impl.1} parent=1 // loop_header
      %s18 = sphi 0, %s22
      %p19 = scmp.ge.s32.totalorder %s18, 4
      %s28 = sphi 0, %s30
      %s31 = sphi 0, %s28
      %s32 = sphi 0, %s31
      %s48 = sphi 0, %s32
      %s52 = sphi 0, %s52
      %s54 = sphi 0, %s52
      %s55 = sphi 0, %s54
      %s69 = sphi 0, %s55
      %s73 = sphi 0, %s73
      %s75 = sphi 0, %s73
      %s76 = sphi 0, %s75
      %s90 = sphi 0, %s76
      %s94 = sphi 0, %s94
      %s96 = sphi 0, %s94
      %s97 = sphi 0, %s96
      %s111 = sphi 0, %s97
      %s115 = sphi 0, %s115
      %s117 = sphi 0, %s115
      %s118 = sphi 0, %s117
      %s132 = sphi 0, %s118
      %s136 = sphi 0, %s136
      %s138 = sphi 0, %s136
      %s139 = sphi 0, %s138
      %s153 = sphi 0, %s139
      %s157 = sphi 0, %s157
      %s159 = sphi 0, %s157
      %s160 = sphi 0, %s159
      %s174 = sphi 0, %s160
      %s178 = sphi 0, %s178
      %s180 = sphi 0, %s178
      %s181 = sphi 0, %s180
      %s195 = sphi 0, %s181
      %s199 = sphi 0, %s199
      %s201 = sphi 0, %s199
      %s202 = sphi 0, %s201
      %s216 = sphi 0, %s202
      %s222 = sphi 0, %s224
      %s225 = sphi 0, %s222
      %s226 = sphi 0, %s225
      %s242 = sphi 0, %s226
    $region4: #{_forward_impl.1} parent=1 // loop_header_branch
      %21 = sbr.rel (%p19) target = $region8
    $region5: #{_forward_impl.1} parent=1 // loop_body
      %s23 = ssub.s32 %s18, 1
      %s24 = ssub.s32 %s18, 2
      %s25 = sadd.s32 %s18, 1
      %s26 = ssub.s32 %s18, %s25
      %p27 = scmp.eq.s32.totalorder %s26, 0
      %s29 = sadd.s32 %s28, 1
      %s30 = scalar_select %p27, %s28, %s29
      %p33 = pneg %p27
      %p34 = scmp.eq.s32.totalorder %s18, 1
      %p35 = por %p33, %p34
      %p36 = scmp.ne.s32.totalorder %s28, %s31
      %p37 = scmp.eq.s32.totalorder %s18, 0
      %p38 = por %p36, %p37
      %p39 = scmp.ne.s32.totalorder %s28, %s31
      %p40 = scmp.eq.s32.totalorder %s23, 1
      %p41 = por %p39, %p40
      %p42 = scmp.ne.s32.totalorder %s31, %s32
      %p43 = scmp.eq.s32.totalorder %s23, 0
      %p44 = por %p42, %p43
      %p45 = scmp.ne.s32.totalorder %s31, %s32
      %p46 = scmp.eq.s32.totalorder %s24, 1
      %p47 = por %p45, %p46
      %p49 = scmp.ne.s32.totalorder %s32, %s48
      %p50 = scmp.eq.s32.totalorder %s24, 0
      %p51 = por %p49, %p50
      %s53 = sadd.s32 %s52, 1
      %p56 = scmp.eq.s32.totalorder %s18, 1
      %p57 = scmp.ne.s32.totalorder %s52, %s54
      %p58 = scmp.eq.s32.totalorder %s18, 0
      %p59 = por %p57, %p58
      %p60 = scmp.ne.s32.totalorder %s52, %s54
      %p61 = scmp.eq.s32.totalorder %s23, 1
      %p62 = por %p60, %p61
      %p63 = scmp.ne.s32.totalorder %s54, %s55
      %p64 = scmp.eq.s32.totalorder %s23, 0
      %p65 = por %p63, %p64
      %p66 = scmp.ne.s32.totalorder %s54, %s55
      %p67 = scmp.eq.s32.totalorder %s24, 1
      %p68 = por %p66, %p67
      %p70 = scmp.ne.s32.totalorder %s55, %s69
      %p71 = scmp.eq.s32.totalorder %s24, 0
      %p72 = por %p70, %p71
      %s74 = sadd.s32 %s73, 1
      %p77 = scmp.eq.s32.totalorder %s18, 1
      %p78 = scmp.ne.s32.totalorder %s73, %s75
      %p79 = scmp.eq.s32.totalorder %s18, 0
      %p80 = por %p78, %p79
      %p81 = scmp.ne.s32.totalorder %s73, %s75
      %p82 = scmp.eq.s32.totalorder %s23, 1
      %p83 = por %p81, %p82
      %p84 = scmp.ne.s32.totalorder %s75, %s76
      %p85 = scmp.eq.s32.totalorder %s23, 0
      %p86 = por %p84, %p85
      %p87 = scmp.ne.s32.totalorder %s75, %s76
      %p88 = scmp.eq.s32.totalorder %s24, 1
      %p89 = por %p87, %p88
      %p91 = scmp.ne.s32.totalorder %s76, %s90
      %p92 = scmp.eq.s32.totalorder %s24, 0
      %p93 = por %p91, %p92
      %s95 = sadd.s32 %s94, 1
      %p98 = scmp.eq.s32.totalorder %s18, 1
      %p99 = scmp.ne.s32.totalorder %s94, %s96
      %p100 = scmp.eq.s32.totalorder %s18, 0
      %p101 = por %p99, %p100
      %p102 = scmp.ne.s32.totalorder %s94, %s96
      %p103 = scmp.eq.s32.totalorder %s23, 1
      %p104 = por %p102, %p103
      %p105 = scmp.ne.s32.totalorder %s96, %s97
      %p106 = scmp.eq.s32.totalorder %s23, 0
      %p107 = por %p105, %p106
      %p108 = scmp.ne.s32.totalorder %s96, %s97
      %p109 = scmp.eq.s32.totalorder %s24, 1
      %p110 = por %p108, %p109
      %p112 = scmp.ne.s32.totalorder %s97, %s111
      %p113 = scmp.eq.s32.totalorder %s24, 0
      %p114 = por %p112, %p113
      %s116 = sadd.s32 %s115, 1
      %p119 = scmp.eq.s32.totalorder %s18, 1
      %p120 = scmp.ne.s32.totalorder %s115, %s117
      %p121 = scmp.eq.s32.totalorder %s18, 0
      %p122 = por %p120, %p121
      %p123 = scmp.ne.s32.totalorder %s115, %s117
      %p124 = scmp.eq.s32.totalorder %s23, 1
      %p125 = por %p123, %p124
      %p126 = scmp.ne.s32.totalorder %s117, %s118
      %p127 = scmp.eq.s32.totalorder %s23, 0
      %p128 = por %p126, %p127
      %p129 = scmp.ne.s32.totalorder %s117, %s118
      %p130 = scmp.eq.s32.totalorder %s24, 1
      %p131 = por %p129, %p130
      %p133 = scmp.ne.s32.totalorder %s118, %s132
      %p134 = scmp.eq.s32.totalorder %s24, 0
      %p135 = por %p133, %p134
      %s137 = sadd.s32 %s136, 1
      %p140 = scmp.eq.s32.totalorder %s18, 1
      %p141 = scmp.ne.s32.totalorder %s136, %s138
      %p142 = scmp.eq.s32.totalorder %s18, 0
      %p143 = por %p141, %p142
      %p144 = scmp.ne.s32.totalorder %s136, %s138
      %p145 = scmp.eq.s32.totalorder %s23, 1
      %p146 = por %p144, %p145
      %p147 = scmp.ne.s32.totalorder %s138, %s139
      %p148 = scmp.eq.s32.totalorder %s23, 0
      %p149 = por %p147, %p148
      %p150 = scmp.ne.s32.totalorder %s138, %s139
      %p151 = scmp.eq.s32.totalorder %s24, 1
      %p152 = por %p150, %p151
      %p154 = scmp.ne.s32.totalorder %s139, %s153
      %p155 = scmp.eq.s32.totalorder %s24, 0
      %p156 = por %p154, %p155
      %s158 = sadd.s32 %s157, 1
      %p161 = scmp.eq.s32.totalorder %s18, 1
      %p162 = scmp.ne.s32.totalorder %s157, %s159
      %p163 = scmp.eq.s32.totalorder %s18, 0
      %p164 = por %p162, %p163
      %p165 = scmp.ne.s32.totalorder %s157, %s159
      %p166 = scmp.eq.s32.totalorder %s23, 1
      %p167 = por %p165, %p166
      %p168 = scmp.ne.s32.totalorder %s159, %s160
      %p169 = scmp.eq.s32.totalorder %s23, 0
      %p170 = por %p168, %p169
      %p171 = scmp.ne.s32.totalorder %s159, %s160
      %p172 = scmp.eq.s32.totalorder %s24, 1
      %p173 = por %p171, %p172
      %p175 = scmp.ne.s32.totalorder %s160, %s174
      %p176 = scmp.eq.s32.totalorder %s24, 0
      %p177 = por %p175, %p176
      %s179 = sadd.s32 %s178, 1
      %p182 = scmp.eq.s32.totalorder %s18, 1
      %p183 = scmp.ne.s32.totalorder %s178, %s180
      %p184 = scmp.eq.s32.totalorder %s18, 0
      %p185 = por %p183, %p184
      %p186 = scmp.ne.s32.totalorder %s178, %s180
      %p187 = scmp.eq.s32.totalorder %s23, 1
      %p188 = por %p186, %p187
      %p189 = scmp.ne.s32.totalorder %s180, %s181
      %p190 = scmp.eq.s32.totalorder %s23, 0
      %p191 = por %p189, %p190
      %p192 = scmp.ne.s32.totalorder %s180, %s181
      %p193 = scmp.eq.s32.totalorder %s24, 1
      %p194 = por %p192, %p193
      %p196 = scmp.ne.s32.totalorder %s181, %s195
      %p197 = scmp.eq.s32.totalorder %s24, 0
      %p198 = por %p196, %p197
      %s200 = sadd.s32 %s199, 1
      %p203 = scmp.eq.s32.totalorder %s18, 1
      %p204 = scmp.ne.s32.totalorder %s199, %s201
      %p205 = scmp.eq.s32.totalorder %s18, 0
      %p206 = por %p204, %p205
      %p207 = scmp.ne.s32.totalorder %s199, %s201
      %p208 = scmp.eq.s32.totalorder %s23, 1
      %p209 = por %p207, %p208
      %p210 = scmp.ne.s32.totalorder %s201, %s202
      %p211 = scmp.eq.s32.totalorder %s23, 0
      %p212 = por %p210, %p211
      %p213 = scmp.ne.s32.totalorder %s201, %s202
      %p214 = scmp.eq.s32.totalorder %s24, 1
      %p215 = por %p213, %p214
      %p217 = scmp.ne.s32.totalorder %s202, %s216
      %p218 = scmp.eq.s32.totalorder %s24, 0
      %p219 = por %p217, %p218
      %s220 = ssub.s32 %s18, %s25
      %p221 = scmp.eq.s32.totalorder %s220, 0
      %s223 = sadd.s32 %s222, 1
      %s224 = scalar_select %p221, %s222, %s223
      %p227 = pneg %p221
      %p228 = scmp.eq.s32.totalorder %s18, 1
      %p229 = por %p227, %p228
      %p230 = scmp.ne.s32.totalorder %s222, %s225
      %p231 = scmp.eq.s32.totalorder %s18, 0
      %p232 = por %p230, %p231
      %p233 = scmp.ne.s32.totalorder %s222, %s225
      %p234 = scmp.eq.s32.totalorder %s23, 1
      %p235 = por %p233, %p234
      %p236 = scmp.ne.s32.totalorder %s225, %s226
      %p237 = scmp.eq.s32.totalorder %s23, 0
      %p238 = por %p236, %p237
      %p239 = scmp.ne.s32.totalorder %s225, %s226
      %p240 = scmp.eq.s32.totalorder %s24, 1
      %p241 = por %p239, %p240
      %p243 = scmp.ne.s32.totalorder %s226, %s242
      %p244 = scmp.eq.s32.totalorder %s24, 0
      %p245 = por %p243, %p244
      %p246 = scmp.le.s32.totalorder 1, %s18
      %p247 = scmp.lt.s32.totalorder %s18, 3
      %p248 = pnand %p246, %p247
      %p249 = pneg %p248
      // Predicated region
      $region9: #{_forward_impl.1} parent=5 // pred_check
        _
      $region10: #{_forward_impl.1} parent=5 // pred_check_branch
        %251 = sbr.rel (%p248) target = $region12
      $region11: #{_forward_impl.1} parent=5 // pred_region
        %s252 = ssub.s32 %s18, 1
        // Predicated region
        $region13: #{_forward_impl.1} parent=11 // pred_check
          %p253 = pneg %p65
        $region14: #{_forward_impl.1} parent=11 // pred_check_branch
          %255 = sbr.rel (%p253) target = $region16
        $region15: #{_forward_impl.1} parent=11 // pred_region
          _
        $region16: #{_forward_impl.1} parent=11 // pred_fallthru
          _
        // Predicated region
        $region17: #{_forward_impl.1} parent=11 // pred_check
          %p256 = pneg %p86
        $region18: #{_forward_impl.1} parent=11 // pred_check_branch
          %258 = sbr.rel (%p256) target = $region20
        $region19: #{_forward_impl.1} parent=11 // pred_region
          _
        $region20: #{_forward_impl.1} parent=11 // pred_fallthru
          _
        // Predicated region
        $region21: #{_forward_impl.1} parent=11 // pred_check
          %p259 = pneg %p107
        $region22: #{_forward_impl.1} parent=11 // pred_check_branch
          %261 = sbr.rel (%p259) target = $region24
        $region23: #{_forward_impl.1} parent=11 // pred_region
          _
        $region24: #{_forward_impl.1} parent=11 // pred_fallthru
          _
        // Predicated region
        $region25: #{_forward_impl.1} parent=11 // pred_check
          %p262 = pneg %p128
        $region26: #{_forward_impl.1} parent=11 // pred_check_branch
          %264 = sbr.rel (%p262) target = $region28
        $region27: #{_forward_impl.1} parent=11 // pred_region
          _
        $region28: #{_forward_impl.1} parent=11 // pred_fallthru
          _
        // Predicated region
        $region29: #{_forward_impl.1} parent=11 // pred_check
          %p265 = pneg %p149
        $region30: #{_forward_impl.1} parent=11 // pred_check_branch
          %267 = sbr.rel (%p265) target = $region32
        $region31: #{_forward_impl.1} parent=11 // pred_region
          _
        $region32: #{_forward_impl.1} parent=11 // pred_fallthru
          _
        // Predicated region
        $region33: #{_forward_impl.1} parent=11 // pred_check
          %p268 = pneg %p170
        $region34: #{_forward_impl.1} parent=11 // pred_check_branch
          %270 = sbr.rel (%p268) target = $region36
        $region35: #{_forward_impl.1} parent=11 // pred_region
          _
        $region36: #{_forward_impl.1} parent=11 // pred_fallthru
          _
        // Predicated region
        $region37: #{_forward_impl.1} parent=11 // pred_check
          %p271 = pneg %p191
        $region38: #{_forward_impl.1} parent=11 // pred_check_branch
          %273 = sbr.rel (%p271) target = $region40
        $region39: #{_forward_impl.1} parent=11 // pred_region
          _
        $region40: #{_forward_impl.1} parent=11 // pred_fallthru
          _
        // Predicated region
        $region41: #{_forward_impl.1} parent=11 // pred_check
          %p274 = pneg %p212
        $region42: #{_forward_impl.1} parent=11 // pred_check_branch
          %276 = sbr.rel (%p274) target = $region44
        $region43: #{_forward_impl.1} parent=11 // pred_region
          _
        $region44: #{_forward_impl.1} parent=11 // pred_fallthru
          _
      $region12: #{_forward_impl.1} parent=5 // pred_fallthru
        _
      %p277 = scmp.lt.s32.totalorder %s18, 2
      // Predicated region
      $region45: #{_forward_impl.1} parent=5 // pred_check
        %p278 = pneg %p277
      $region46: #{_forward_impl.1} parent=5 // pred_check_branch
        %280 = sbr.rel (%p278) target = $region48
      $region47: #{_forward_impl.1} parent=5 // pred_region
        // Predicated region
        $region49: #{_forward_impl.1} parent=47 // pred_check
          %p281 = pneg %p38
        $region50: #{_forward_impl.1} parent=47 // pred_check_branch
          %283 = sbr.rel (%p281) target = $region52
        $region51: #{_forward_impl.1} parent=47 // pred_region
          %p284 = scmp.lt.s32.totalorder %s18, 1
          %s285 = scalar_select %p284, %s18, 1
          %s286 = smul.addr %s285, 32
          %s287 = smul.addr %s286, 4
          %s288 = scalar_lea.vmem %s0, %s287
        $region52: #{_forward_impl.1} parent=47 // pred_fallthru
          _
      $region48: #{_forward_impl.1} parent=5 // pred_fallthru
        _
      %p289 = scmp.le.s32.totalorder 1, %s18
      %p290 = scmp.lt.s32.totalorder %s18, 3
      %p291 = pnand %p289, %p290
      %p292 = pneg %p291
      // Predicated region
      $region53: #{_forward_impl.1} parent=5 // pred_check
        _
      $region54: #{_forward_impl.1} parent=5 // pred_check_branch
        %294 = sbr.rel (%p291) target = $region56
      $region55: #{_forward_impl.1} parent=5 // pred_region
        %s295 = ssub.s32 %s18, 1
        %p296 = scmp.lt.s32.totalorder %s23, 1
        %s297 = scalar_select %p296, %s23, 1
        %s298 = smul.addr %s297, 32
        %s299 = smul.addr %s298, 4
        %s300 = scalar_lea.vmem %s0, %s299
        %p301 = pneg %p44
        %p302 = pneg %p41
        %p303 = pneg %p65
        %p304 = pneg %p62
        %p305 = pneg %p86
        %p306 = pneg %p83
        %p307 = pneg %p107
        %p308 = pneg %p104
        %p309 = pneg %p128
        %p310 = pneg %p125
        %p311 = pneg %p149
        %p312 = pneg %p146
        %p313 = pneg %p170
        %p314 = pneg %p167
        %p315 = pneg %p191
        %p316 = pneg %p188
        %p317 = pneg %p212
        %p318 = pneg %p209
        %p319 = pneg %p238
        %p320 = pneg %p235
        %s321 = sand.u32 %s225, 1
        %s322 = scalar_lea.sflag [#allocation5], %s321
        %s323 = sand.u32 %s225, 1
        %s324 = smul.addr %s323, 256
        %s325 = scalar_lea.vmem [#allocation4], %s324
        %p326 = scmp.lt.s32.totalorder %s23, 1
        %s327 = scalar_select %p326, %s23, 1
        %s328 = smul.addr %s327, 32
        %s329 = smul.addr %s328, 4
        %s330 = scalar_lea.vmem %s0, %s329
        %v331 = vld [vmem:[%s330] sm:$0xf]
        %v332 = vld [vmem:[%s330 + $0x4] sm:$0xf]
        %v333 = vld [vmem:[%s330 + $0x8] sm:$0xf]
        %v334 = vld [vmem:[%s330 + $0xc] sm:$0xf]
        %v335 = vld [vmem:[%s330 + $0x10] sm:$0xf]
        %v336 = vld [vmem:[%s330 + $0x14] sm:$0xf]
        %v337 = vld [vmem:[%s330 + $0x18] sm:$0xf]
        %v338 = vld [vmem:[%s330 + $0x1c] sm:$0xf]
        %v339 = vld [vmem:[%s330 + $0x20] sm:$0xf]
        %v340 = vld [vmem:[%s330 + $0x24] sm:$0xf]
        %v341 = vld [vmem:[%s330 + $0x28] sm:$0xf]
        %v342 = vld [vmem:[%s330 + $0x2c] sm:$0xf]
        %v343 = vld [vmem:[%s330 + $0x30] sm:$0xf]
        %v344 = vld [vmem:[%s330 + $0x34] sm:$0xf]
        %v345 = vld [vmem:[%s330 + $0x38] sm:$0xf]
        %v346 = vld [vmem:[%s330 + $0x3c] sm:$0xf]
        %v347 = vld [vmem:[%s330 + $0x40] sm:$0xf]
        %v348 = vld [vmem:[%s330 + $0x44] sm:$0xf]
        %v349 = vld [vmem:[%s330 + $0x48] sm:$0xf]
        %v350 = vld [vmem:[%s330 + $0x4c] sm:$0xf]
        %v351 = vld [vmem:[%s330 + $0x50] sm:$0xf]
        %v352 = vld [vmem:[%s330 + $0x54] sm:$0xf]
        %v353 = vld [vmem:[%s330 + $0x58] sm:$0xf]
        %v354 = vld [vmem:[%s330 + $0x5c] sm:$0xf]
        %v355 = vld [vmem:[%s330 + $0x60] sm:$0xf]
        %v356 = vld [vmem:[%s330 + $0x64] sm:$0xf]
        %v357 = vld [vmem:[%s330 + $0x68] sm:$0xf]
        %v358 = vld [vmem:[%s330 + $0x6c] sm:$0xf]
        %v359 = vld [vmem:[%s330 + $0x70] sm:$0xf]
        %v360 = vld [vmem:[%s330 + $0x74] sm:$0xf]
        %v361 = vld [vmem:[%s330 + $0x78] sm:$0xf]
        %v362 = vld [vmem:[%s330 + $0x7c] sm:$0xf]
        %v363 = vld [vmem:[%s1] sm:$0xf]
        %v364 = vld [vmem:[%s1 + $0x4] sm:$0xf]
        %v365 = vld [vmem:[%s1 + $0x8] sm:$0xf]
        %v366 = vld [vmem:[%s1 + $0xc] sm:$0xf]
        %v367 = vld [vmem:[%s1 + $0x10] sm:$0xf]
        %v368 = vld [vmem:[%s1 + $0x14] sm:$0xf]
        %v369 = vld [vmem:[%s1 + $0x18] sm:$0xf]
        %v370 = vld [vmem:[%s1 + $0x1c] sm:$0xf]
        %v371 = vld [vmem:[%s1 + $0x20] sm:$0xf]
        %v372 = vld [vmem:[%s1 + $0x24] sm:$0xf]
        %v373 = vld [vmem:[%s1 + $0x28] sm:$0xf]
        %v374 = vld [vmem:[%s1 + $0x2c] sm:$0xf]
        %v375 = vld [vmem:[%s1 + $0x30] sm:$0xf]
        %v376 = vld [vmem:[%s1 + $0x34] sm:$0xf]
        %v377 = vld [vmem:[%s1 + $0x38] sm:$0xf]
        %v378 = vld [vmem:[%s1 + $0x3c] sm:$0xf]
        %v379 = vld [vmem:[%s2] sm:$0x1]
        %v381 = vperm.slane %v379, 0
        %v415 = vunpack.c.l.b16 %v331
        %v416 = vunpack.c.l.b16 %v332
        %v417 = vunpack.c.l.b16 %v333
        %v418 = vunpack.c.l.b16 %v334
        %v419 = vunpack.c.l.b16 %v335
        %v420 = vunpack.c.l.b16 %v336
        %v421 = vunpack.c.l.b16 %v337
        %v422 = vunpack.c.l.b16 %v338
        %v423 = vunpack.c.l.b16 %v339
        %v424 = vunpack.c.l.b16 %v340
        %v425 = vunpack.c.l.b16 %v341
        %v426 = vunpack.c.l.b16 %v342
        %v427 = vunpack.c.l.b16 %v343
        %v428 = vunpack.c.l.b16 %v344
        %v429 = vunpack.c.l.b16 %v345
        %v430 = vunpack.c.l.b16 %v346
        %v431 = vunpack.c.l.b16 %v347
        %v432 = vunpack.c.l.b16 %v348
        %v433 = vunpack.c.l.b16 %v349
        %v434 = vunpack.c.l.b16 %v350
        %v435 = vunpack.c.l.b16 %v351
        %v436 = vunpack.c.l.b16 %v352
        %v437 = vunpack.c.l.b16 %v353
        %v438 = vunpack.c.l.b16 %v354
        %v439 = vunpack.c.l.b16 %v355
        %v440 = vunpack.c.l.b16 %v356
        %v441 = vunpack.c.l.b16 %v357
        %v442 = vunpack.c.l.b16 %v358
        %v443 = vunpack.c.l.b16 %v359
        %v444 = vunpack.c.l.b16 %v360
        %v445 = vunpack.c.l.b16 %v361
        %v446 = vunpack.c.l.b16 %v362
        %v447 = vpack.c.b16 %v416, %v415
        %v448 = vpack.c.b16 %v418, %v417
        %v449 = vpack.c.b16 %v420, %v419
        %v450 = vpack.c.b16 %v422, %v421
        %v451 = vpack.c.b16 %v424, %v423
        %v452 = vpack.c.b16 %v426, %v425
        %v453 = vpack.c.b16 %v428, %v427
        %v454 = vpack.c.b16 %v430, %v429
        %v455 = vpack.c.b16 %v432, %v431
        %v456 = vpack.c.b16 %v434, %v433
        %v457 = vpack.c.b16 %v436, %v435
        %v458 = vpack.c.b16 %v438, %v437
        %v459 = vpack.c.b16 %v440, %v439
        %v460 = vpack.c.b16 %v442, %v441
        %v461 = vpack.c.b16 %v444, %v443
        %v462 = vpack.c.b16 %v446, %v445
        %v495 = vunpack.c.l.b16 %v363
        %v496 = vunpack.c.l.b16 %v364
        %v497 = vunpack.c.l.b16 %v365
        %v498 = vunpack.c.l.b16 %v366
        %v499 = vunpack.c.l.b16 %v367
        %v500 = vunpack.c.l.b16 %v368
        %v501 = vunpack.c.l.b16 %v369
        %v502 = vunpack.c.l.b16 %v370
        %v503 = vunpack.c.l.b16 %v371
        %v504 = vunpack.c.l.b16 %v372
        %v505 = vunpack.c.l.b16 %v373
        %v506 = vunpack.c.l.b16 %v374
        %v507 = vunpack.c.l.b16 %v375
        %v508 = vunpack.c.l.b16 %v376
        %v509 = vunpack.c.l.b16 %v377
        %v510 = vunpack.c.l.b16 %v378
        %v511 = vpack.c.b16 %v496, %v495
        %v512 = vpack.c.b16 %v498, %v497
        %v513 = vpack.c.b16 %v500, %v499
        %v514 = vpack.c.b16 %v502, %v501
        %v515 = vpack.c.b16 %v504, %v503
        %v516 = vpack.c.b16 %v506, %v505
        %v517 = vpack.c.b16 %v508, %v507
        %v518 = vpack.c.b16 %v510, %v509
        %527 = vmatpush.bf16.msra.mxu0 %v518
        %528 = vmatpush.bf16.msra.mxu0 %v517
        %529 = vmatpush.bf16.msra.mxu0 %v516
        %530 = vmatpush.bf16.msra.mxu0 %v515
        %531 = vmatpush.bf16.msra.mxu0 %v514
        %532 = vmatpush.bf16.msra.mxu0 %v513
        %533 = vmatpush.bf16.msra.mxu0 %v512
        %534 = vmatpush.bf16.msra.mxu0 %v511
        %535 = vmatmul.bf16.gmra.mxu0 %v447
        %v536 = vpop.f32.mrf.mxu0
        %v537 = vadd.f32 %v381, %v536
        %v538 = vpop.f32.mrf.mxu0
        %v539 = vadd.f32 %v381, %v538
        %540 = vmatmul.bf16.gmra.mxu0 %v448
        %v541 = vpop.f32.mrf.mxu0
        %v542 = vadd.f32 %v381, %v541
        %v543 = vpop.f32.mrf.mxu0
        %v544 = vadd.f32 %v381, %v543
        %545 = vmatmul.bf16.gmra.mxu0 %v449
        %v546 = vpop.f32.mrf.mxu0
        %v547 = vadd.f32 %v381, %v546
        %v548 = vpop.f32.mrf.mxu0
        %v549 = vadd.f32 %v381, %v548
        %550 = vmatmul.bf16.gmra.mxu0 %v450
        %v551 = vpop.f32.mrf.mxu0
        %v552 = vadd.f32 %v381, %v551
        %v553 = vpop.f32.mrf.mxu0
        %v554 = vadd.f32 %v381, %v553
        %555 = vmatmul.bf16.gmra.mxu0 %v451
        %v556 = vpop.f32.mrf.mxu0
        %v557 = vadd.f32 %v381, %v556
        %v558 = vpop.f32.mrf.mxu0
        %v559 = vadd.f32 %v381, %v558
        %560 = vmatmul.bf16.gmra.mxu0 %v452
        %v561 = vpop.f32.mrf.mxu0
        %v562 = vadd.f32 %v381, %v561
        %v563 = vpop.f32.mrf.mxu0
        %v564 = vadd.f32 %v381, %v563
        %565 = vmatmul.bf16.gmra.mxu0 %v453
        %v566 = vpop.f32.mrf.mxu0
        %v567 = vadd.f32 %v381, %v566
        %v568 = vpop.f32.mrf.mxu0
        %v569 = vadd.f32 %v381, %v568
        %570 = vmatmul.bf16.gmra.mxu0 %v454
        %v571 = vpop.f32.mrf.mxu0
        %v572 = vadd.f32 %v381, %v571
        %v573 = vpop.f32.mrf.mxu0
        %v574 = vadd.f32 %v381, %v573
        %575 = vmatmul.bf16.gmra.mxu0 %v455
        %v576 = vpop.f32.mrf.mxu0
        %v577 = vadd.f32 %v381, %v576
        %v578 = vpop.f32.mrf.mxu0
        %v579 = vadd.f32 %v381, %v578
        %580 = vmatmul.bf16.gmra.mxu0 %v456
        %v581 = vpop.f32.mrf.mxu0
        %v582 = vadd.f32 %v381, %v581
        %v583 = vpop.f32.mrf.mxu0
        %v584 = vadd.f32 %v381, %v583
        %585 = vmatmul.bf16.gmra.mxu0 %v457
        %v586 = vpop.f32.mrf.mxu0
        %v587 = vadd.f32 %v381, %v586
        %v588 = vpop.f32.mrf.mxu0
        %v589 = vadd.f32 %v381, %v588
        %590 = vmatmul.bf16.gmra.mxu0 %v458
        %v591 = vpop.f32.mrf.mxu0
        %v592 = vadd.f32 %v381, %v591
        %v593 = vpop.f32.mrf.mxu0
        %v594 = vadd.f32 %v381, %v593
        %595 = vmatmul.bf16.gmra.mxu0 %v459
        %v596 = vpop.f32.mrf.mxu0
        %v597 = vadd.f32 %v381, %v596
        %v598 = vpop.f32.mrf.mxu0
        %v599 = vadd.f32 %v381, %v598
        %600 = vmatmul.bf16.gmra.mxu0 %v460
        %v601 = vpop.f32.mrf.mxu0
        %v602 = vadd.f32 %v381, %v601
        %v603 = vpop.f32.mrf.mxu0
        %v604 = vadd.f32 %v381, %v603
        %605 = vmatmul.bf16.gmra.mxu0 %v461
        %v606 = vpop.f32.mrf.mxu0
        %v607 = vadd.f32 %v381, %v606
        %v608 = vpop.f32.mrf.mxu0
        %v609 = vadd.f32 %v381, %v608
        %610 = vmatmul.bf16.gmra.mxu0 %v462
        %v611 = vpop.f32.mrf.mxu0
        %v612 = vadd.f32 %v381, %v611
        %v613 = vpop.f32.mrf.mxu0
        %v614 = vadd.f32 %v381, %v613
        %615 = vdwg.mxu0
        %v616 = vmax.f32 %v537, 0.0
        %v617 = vmax.f32 %v539, 0.0
        %v618 = vmax.f32 %v542, 0.0
        %v619 = vmax.f32 %v544, 0.0
        %v620 = vmax.f32 %v547, 0.0
        %v621 = vmax.f32 %v549, 0.0
        %v622 = vmax.f32 %v552, 0.0
        %v623 = vmax.f32 %v554, 0.0
        %v624 = vmax.f32 %v557, 0.0
        %v625 = vmax.f32 %v559, 0.0
        %v626 = vmax.f32 %v562, 0.0
        %v627 = vmax.f32 %v564, 0.0
        %v628 = vmax.f32 %v567, 0.0
        %v629 = vmax.f32 %v569, 0.0
        %v630 = vmax.f32 %v572, 0.0
        %v631 = vmax.f32 %v574, 0.0
        %v632 = vmax.f32 %v577, 0.0
        %v633 = vmax.f32 %v579, 0.0
        %v634 = vmax.f32 %v582, 0.0
        %v635 = vmax.f32 %v584, 0.0
        %v636 = vmax.f32 %v587, 0.0
        %v637 = vmax.f32 %v589, 0.0
        %v638 = vmax.f32 %v592, 0.0
        %v639 = vmax.f32 %v594, 0.0
        %v640 = vmax.f32 %v597, 0.0
        %v641 = vmax.f32 %v599, 0.0
        %v642 = vmax.f32 %v602, 0.0
        %v643 = vmax.f32 %v604, 0.0
        %v644 = vmax.f32 %v607, 0.0
        %v645 = vmax.f32 %v609, 0.0
        %v646 = vmax.f32 %v612, 0.0
        %v647 = vmax.f32 %v614, 0.0
        %648 = vst [vmem:[#allocation2] sm:$0xff] 0.0
        %649 = vst [vmem:[#allocation2 + $0x8] sm:$0xff] 0.0
        %650 = vst [vmem:[#allocation2 + $0x10] sm:$0x3] 0.0
        %651 = vst [vmem:[#allocation2 + $0x18] sm:$0xff] 0.0
        %652 = vst [vmem:[#allocation2 + $0x20] sm:$0xff] 0.0
        %653 = vst [vmem:[#allocation2 + $0x28] sm:$0x3] 0.0
        %654 = vst [vmem:[#allocation2 + $0x30] sm:$0xff] 0.0
        %655 = vst [vmem:[#allocation2 + $0x38] sm:$0xff] 0.0
        %656 = vst [vmem:[#allocation2 + $0x40] sm:$0x3] 0.0
        %657 = vst [vmem:[#allocation2 + $0x48] sm:$0xff] 0.0
        %658 = vst [vmem:[#allocation2 + $0x50] sm:$0xff] 0.0
        %659 = vst [vmem:[#allocation2 + $0x58] sm:$0x3] 0.0
        %660 = vst [vmem:[#allocation2 + $0x60] sm:$0xff] 0.0
        %661 = vst [vmem:[#allocation2 + $0x68] sm:$0xff] 0.0
        %662 = vst [vmem:[#allocation2 + $0x70] sm:$0x3] 0.0
        %663 = vst [vmem:[#allocation2 + $0x78] sm:$0xff] 0.0
        %664 = vst [vmem:[#allocation2 + $0x80] sm:$0xff] 0.0
        %665 = vst [vmem:[#allocation2 + $0x88] sm:$0x3] 0.0
        %666 = vst [vmem:[#allocation2 + $0x90] sm:$0xff] 0.0
        %667 = vst [vmem:[#allocation2 + $0x98] sm:$0xff] 0.0
        %668 = vst [vmem:[#allocation2 + $0xa0] sm:$0x3] 0.0
        %669 = vst [vmem:[#allocation2 + $0xa8] sm:$0xff] 0.0
        %670 = vst [vmem:[#allocation2 + $0xb0] sm:$0xff] 0.0
        %671 = vst [vmem:[#allocation2 + $0xb8] sm:$0x3] 0.0
        %672 = vst [vmem:[#allocation2 + $0xc0] sm:$0xff] 0.0
        %673 = vst [vmem:[#allocation2 + $0xc8] sm:$0xff] 0.0
        %674 = vst [vmem:[#allocation2 + $0xd0] sm:$0x3] 0.0
        %675 = vst [vmem:[#allocation2 + $0xd8] sm:$0xff] 0.0
        %676 = vst [vmem:[#allocation2 + $0xe0] sm:$0xff] 0.0
        %677 = vst [vmem:[#allocation2 + $0xe8] sm:$0x3] 0.0
        %678 = vst [vmem:[#allocation2 + $0xf0] sm:$0xff] 0.0
        %679 = vst [vmem:[#allocation2 + $0xf8] sm:$0xff] 0.0
        %680 = vst [vmem:[#allocation2 + $0x100] sm:$0x3] 0.0
        %681 = vst [vmem:[#allocation2 + $0x108] sm:$0xff] 0.0
        %682 = vst [vmem:[#allocation2 + $0x110] sm:$0xff] 0.0
        %683 = vst [vmem:[#allocation2 + $0x118] sm:$0x3] 0.0
        %684 = vst [vmem:[#allocation2 + $0x120] sm:$0xff] 0.0
        %685 = vst [vmem:[#allocation2 + $0x128] sm:$0xff] 0.0
        %686 = vst [vmem:[#allocation2 + $0x130] sm:$0x3] 0.0
        %687 = vst [vmem:[#allocation2 + $0x138] sm:$0xff] 0.0
        %688 = vst [vmem:[#allocation2 + $0x140] sm:$0xff] 0.0
        %689 = vst [vmem:[#allocation2 + $0x148] sm:$0x3] 0.0
        %690 = vst [vmem:[#allocation2 + $0x150] sm:$0xff] 0.0
        %691 = vst [vmem:[#allocation2 + $0x158] sm:$0xff] 0.0
        %692 = vst [vmem:[#allocation2 + $0x160] sm:$0x3] 0.0
        %693 = vst [vmem:[#allocation2 + $0x168] sm:$0xff] 0.0
        %694 = vst [vmem:[#allocation2 + $0x170] sm:$0xff] 0.0
        %695 = vst [vmem:[#allocation2 + $0x178] sm:$0x3] 0.0
        %696 = vst [vmem:[#allocation2 + $0x180] sm:$0xff] 0.0
        %697 = vst [vmem:[#allocation2 + $0x188] sm:$0xff] 0.0
        %698 = vst [vmem:[#allocation2 + $0x190] sm:$0x3] 0.0
        %699 = vst [vmem:[#allocation2 + $0x198] sm:$0xff] 0.0
        %700 = vst [vmem:[#allocation2 + $0x1a0] sm:$0xff] 0.0
        %701 = vst [vmem:[#allocation2 + $0x1a8] sm:$0x3] 0.0
        %s702 = scalar_lea.vmem [#allocation2], 24
        %703 = vst [vmem:[%s702 + $0x1] sm:$0xff] %v616
        %704 = vst [vmem:[%s702 + $0x9] sm:$0xff] %v617
        %705 = vst [vmem:[%s702 + $0x19] sm:$0xff] %v618
        %706 = vst [vmem:[%s702 + $0x21] sm:$0xff] %v619
        %707 = vst [vmem:[%s702 + $0x31] sm:$0xff] %v620
        %708 = vst [vmem:[%s702 + $0x39] sm:$0xff] %v621
        %709 = vst [vmem:[%s702 + $0x49] sm:$0xff] %v622
        %710 = vst [vmem:[%s702 + $0x51] sm:$0xff] %v623
        %711 = vst [vmem:[%s702 + $0x61] sm:$0xff] %v624
        %712 = vst [vmem:[%s702 + $0x69] sm:$0xff] %v625
        %713 = vst [vmem:[%s702 + $0x79] sm:$0xff] %v626
        %714 = vst [vmem:[%s702 + $0x81] sm:$0xff] %v627
        %715 = vst [vmem:[%s702 + $0x91] sm:$0xff] %v628
        %716 = vst [vmem:[%s702 + $0x99] sm:$0xff] %v629
        %717 = vst [vmem:[%s702 + $0xa9] sm:$0xff] %v630
        %718 = vst [vmem:[%s702 + $0xb1] sm:$0xff] %v631
        %719 = vst [vmem:[%s702 + $0xc1] sm:$0xff] %v632
        %720 = vst [vmem:[%s702 + $0xc9] sm:$0xff] %v633
        %721 = vst [vmem:[%s702 + $0xd9] sm:$0xff] %v634
        %722 = vst [vmem:[%s702 + $0xe1] sm:$0xff] %v635
        %723 = vst [vmem:[%s702 + $0xf1] sm:$0xff] %v636
        %724 = vst [vmem:[%s702 + $0xf9] sm:$0xff] %v637
        %725 = vst [vmem:[%s702 + $0x109] sm:$0xff] %v638
        %726 = vst [vmem:[%s702 + $0x111] sm:$0xff] %v639
        %727 = vst [vmem:[%s702 + $0x121] sm:$0xff] %v640
        %728 = vst [vmem:[%s702 + $0x129] sm:$0xff] %v641
        %729 = vst [vmem:[%s702 + $0x139] sm:$0xff] %v642
        %730 = vst [vmem:[%s702 + $0x141] sm:$0xff] %v643
        %731 = vst [vmem:[%s702 + $0x151] sm:$0xff] %v644
        %732 = vst [vmem:[%s702 + $0x159] sm:$0xff] %v645
        %733 = vst [vmem:[%s702 + $0x169] sm:$0xff] %v646
        %734 = vst [vmem:[%s702 + $0x171] sm:$0xff] %v647
        %735 = vst [vmem:[#allocation3] sm:$0xff] 0.0
        %736 = vst [vmem:[#allocation3 + $0x8] sm:$0xff] 0.0
        %737 = vst [vmem:[#allocation3 + $0x10] sm:$0xff] 0.0
        %738 = vst [vmem:[#allocation3 + $0x18] sm:$0xff] 0.0
        %739 = vst [vmem:[#allocation3 + $0x20] sm:$0xff] 0.0
        %740 = vst [vmem:[#allocation3 + $0x28] sm:$0xff] 0.0
        %741 = vst [vmem:[#allocation3 + $0x30] sm:$0xff] 0.0
        %742 = vst [vmem:[#allocation3 + $0x38] sm:$0xff] 0.0
        %743 = vst [vmem:[#allocation3 + $0x40] sm:$0xff] 0.0
        %744 = vst [vmem:[#allocation3 + $0x48] sm:$0xff] 0.0
        %745 = vst [vmem:[#allocation3 + $0x50] sm:$0xff] 0.0
        %746 = vst [vmem:[#allocation3 + $0x58] sm:$0xff] 0.0
        %747 = vst [vmem:[#allocation3 + $0x60] sm:$0xff] 0.0
        %748 = vst [vmem:[#allocation3 + $0x68] sm:$0xff] 0.0
        %749 = vst [vmem:[#allocation3 + $0x70] sm:$0xff] 0.0
        %750 = vst [vmem:[#allocation3 + $0x78] sm:$0xff] 0.0
        %751 = vst [vmem:[#allocation3 + $0x80] sm:$0xff] 0.0
        %752 = vst [vmem:[#allocation3 + $0x88] sm:$0xff] 0.0
        %753 = vst [vmem:[#allocation3 + $0x90] sm:$0xff] 0.0
        %754 = vst [vmem:[#allocation3 + $0x98] sm:$0xff] 0.0
        %755 = vst [vmem:[#allocation3 + $0xa0] sm:$0xff] 0.0
        %756 = vst [vmem:[#allocation3 + $0xa8] sm:$0xff] 0.0
        %757 = vst [vmem:[#allocation3 + $0xb0] sm:$0xff] 0.0
        %758 = vst [vmem:[#allocation3 + $0xb8] sm:$0xff] 0.0
        %759 = vst [vmem:[#allocation3 + $0xc0] sm:$0xff] 0.0
        %760 = vst [vmem:[#allocation3 + $0xc8] sm:$0xff] 0.0
        %761 = vst [vmem:[#allocation3 + $0xd0] sm:$0xff] 0.0
        %762 = vst [vmem:[#allocation3 + $0xd8] sm:$0xff] 0.0
        %763 = vst [vmem:[#allocation3 + $0xe0] sm:$0xff] 0.0
        %764 = vst [vmem:[#allocation3 + $0xe8] sm:$0xff] 0.0
        %765 = vst [vmem:[#allocation3 + $0xf0] sm:$0xff] 0.0
        %766 = vst [vmem:[#allocation3 + $0xf8] sm:$0xff] 0.0
        %v767 = vld [vmem:[#allocation2] sm:$0xff]
        %v768 = vld [vmem:[#allocation2 + $0x8] sm:$0xff]
        %v769 = vld [vmem:[#allocation2 + $0x18] sm:$0xff]
        %v770 = vld [vmem:[#allocation2 + $0x20] sm:$0xff]
        %v771 = vld [vmem:[#allocation2 + $0x30] sm:$0xff]
        %v772 = vld [vmem:[#allocation2 + $0x38] sm:$0xff]
        %v773 = vld [vmem:[#allocation2 + $0x48] sm:$0xff]
        %v774 = vld [vmem:[#allocation2 + $0x50] sm:$0xff]
        %v775 = vld [vmem:[#allocation2 + $0x60] sm:$0xff]
        %v776 = vld [vmem:[#allocation2 + $0x68] sm:$0xff]
        %v777 = vld [vmem:[#allocation2 + $0x78] sm:$0xff]
        %v778 = vld [vmem:[#allocation2 + $0x80] sm:$0xff]
        %v779 = vld [vmem:[#allocation2 + $0x90] sm:$0xff]
        %v780 = vld [vmem:[#allocation2 + $0x98] sm:$0xff]
        %v781 = vld [vmem:[#allocation2 + $0xa8] sm:$0xff]
        %v782 = vld [vmem:[#allocation2 + $0xb0] sm:$0xff]
        %v783 = vld [vmem:[#allocation2 + $0xc0] sm:$0xff]
        %v784 = vld [vmem:[#allocation2 + $0xc8] sm:$0xff]
        %v785 = vld [vmem:[#allocation2 + $0xd8] sm:$0xff]
        %v786 = vld [vmem:[#allocation2 + $0xe0] sm:$0xff]
        %v787 = vld [vmem:[#allocation2 + $0xf0] sm:$0xff]
        %v788 = vld [vmem:[#allocation2 + $0xf8] sm:$0xff]
        %v789 = vld [vmem:[#allocation2 + $0x108] sm:$0xff]
        %v790 = vld [vmem:[#allocation2 + $0x110] sm:$0xff]
        %v791 = vld [vmem:[#allocation2 + $0x120] sm:$0xff]
        %v792 = vld [vmem:[#allocation2 + $0x128] sm:$0xff]
        %v793 = vld [vmem:[#allocation2 + $0x138] sm:$0xff]
        %v794 = vld [vmem:[#allocation2 + $0x140] sm:$0xff]
        %v795 = vld [vmem:[#allocation2 + $0x150] sm:$0xff]
        %v796 = vld [vmem:[#allocation2 + $0x158] sm:$0xff]
        %v797 = vld [vmem:[#allocation2 + $0x168] sm:$0xff]
        %v798 = vld [vmem:[#allocation2 + $0x170] sm:$0xff]
        %v799 = vld [vmem:[#allocation3] sm:$0xff]
        %v800 = vld [vmem:[#allocation3 + $0x8] sm:$0xff]
        %v801 = vld [vmem:[#allocation3 + $0x10] sm:$0xff]
        %v802 = vld [vmem:[#allocation3 + $0x18] sm:$0xff]
        %v803 = vld [vmem:[#allocation3 + $0x20] sm:$0xff]
        %v804 = vld [vmem:[#allocation3 + $0x28] sm:$0xff]
        %v805 = vld [vmem:[#allocation3 + $0x30] sm:$0xff]
        %v806 = vld [vmem:[#allocation3 + $0x38] sm:$0xff]
        %v807 = vld [vmem:[#allocation3 + $0x40] sm:$0xff]
        %v808 = vld [vmem:[#allocation3 + $0x48] sm:$0xff]
        %v809 = vld [vmem:[#allocation3 + $0x50] sm:$0xff]
        %v810 = vld [vmem:[#allocation3 + $0x58] sm:$0xff]
        %v811 = vld [vmem:[#allocation3 + $0x60] sm:$0xff]
        %v812 = vld [vmem:[#allocation3 + $0x68] sm:$0xff]
        %v813 = vld [vmem:[#allocation3 + $0x70] sm:$0xff]
        %v814 = vld [vmem:[#allocation3 + $0x78] sm:$0xff]
        %v815 = vld [vmem:[#allocation3 + $0x80] sm:$0xff]
        %v816 = vld [vmem:[#allocation3 + $0x88] sm:$0xff]
        %v817 = vld [vmem:[#allocation3 + $0x90] sm:$0xff]
        %v818 = vld [vmem:[#allocation3 + $0x98] sm:$0xff]
        %v819 = vld [vmem:[#allocation3 + $0xa0] sm:$0xff]
        %v820 = vld [vmem:[#allocation3 + $0xa8] sm:$0xff]
        %v821 = vld [vmem:[#allocation3 + $0xb0] sm:$0xff]
        %v822 = vld [vmem:[#allocation3 + $0xb8] sm:$0xff]
        %v823 = vld [vmem:[#allocation3 + $0xc0] sm:$0xff]
        %v824 = vld [vmem:[#allocation3 + $0xc8] sm:$0xff]
        %v825 = vld [vmem:[#allocation3 + $0xd0] sm:$0xff]
        %v826 = vld [vmem:[#allocation3 + $0xd8] sm:$0xff]
        %v827 = vld [vmem:[#allocation3 + $0xe0] sm:$0xff]
        %v828 = vld [vmem:[#allocation3 + $0xe8] sm:$0xff]
        %v829 = vld [vmem:[#allocation3 + $0xf0] sm:$0xff]
        %v830 = vld [vmem:[#allocation3 + $0xf8] sm:$0xff]
        %v831 = vpack.c.bf16 %v768, %v767
        %v832 = vpack.c.bf16 %v770, %v769
        %v833 = vpack.c.bf16 %v772, %v771
        %v834 = vpack.c.bf16 %v774, %v773
        %v835 = vpack.c.bf16 %v776, %v775
        %v836 = vpack.c.bf16 %v778, %v777
        %v837 = vpack.c.bf16 %v780, %v779
        %v838 = vpack.c.bf16 %v782, %v781
        %v839 = vpack.c.bf16 %v784, %v783
        %v840 = vpack.c.bf16 %v786, %v785
        %v841 = vpack.c.bf16 %v788, %v787
        %v842 = vpack.c.bf16 %v790, %v789
        %v843 = vpack.c.bf16 %v792, %v791
        %v844 = vpack.c.bf16 %v794, %v793
        %v845 = vpack.c.bf16 %v796, %v795
        %v846 = vpack.c.bf16 %v798, %v797
        %v847 = vld [vmem:[%s3] sm:$0xf]
        %v848 = vld [vmem:[%s3 + $0x4] sm:$0xf]
        %v849 = vld [vmem:[%s3 + $0x8] sm:$0xf]
        %v850 = vld [vmem:[%s3 + $0xc] sm:$0xf]
        %v851 = vld [vmem:[%s3 + $0x10] sm:$0xf]
        %v852 = vld [vmem:[%s3 + $0x14] sm:$0xf]
        %v853 = vld [vmem:[%s3 + $0x18] sm:$0xf]
        %v854 = vld [vmem:[%s3 + $0x1c] sm:$0xf]
        %v855 = vld [vmem:[%s3 + $0x20] sm:$0xf]
        %v856 = vld [vmem:[%s3 + $0x24] sm:$0xf]
        %v857 = vld [vmem:[%s3 + $0x28] sm:$0xf]
        %v858 = vld [vmem:[%s3 + $0x2c] sm:$0xf]
        %v859 = vld [vmem:[%s3 + $0x30] sm:$0xf]
        %v860 = vld [vmem:[%s3 + $0x34] sm:$0xf]
        %v861 = vld [vmem:[%s3 + $0x38] sm:$0xf]
        %v862 = vld [vmem:[%s3 + $0x3c] sm:$0xf]
        %v879 = vunpack.c.l.b16 %v847
        %v880 = vunpack.c.l.b16 %v848
        %v881 = vunpack.c.l.b16 %v849
        %v882 = vunpack.c.l.b16 %v850
        %v883 = vunpack.c.l.b16 %v851
        %v884 = vunpack.c.l.b16 %v852
        %v885 = vunpack.c.l.b16 %v853
        %v886 = vunpack.c.l.b16 %v854
        %v887 = vunpack.c.l.b16 %v855
        %v888 = vunpack.c.l.b16 %v856
        %v889 = vunpack.c.l.b16 %v857
        %v890 = vunpack.c.l.b16 %v858
        %v891 = vunpack.c.l.b16 %v859
        %v892 = vunpack.c.l.b16 %v860
        %v893 = vunpack.c.l.b16 %v861
        %v894 = vunpack.c.l.b16 %v862
        %v895 = vpack.c.b16 %v880, %v879
        %v896 = vpack.c.b16 %v882, %v881
        %v897 = vpack.c.b16 %v884, %v883
        %v898 = vpack.c.b16 %v886, %v885
        %v899 = vpack.c.b16 %v888, %v887
        %v900 = vpack.c.b16 %v890, %v889
        %v901 = vpack.c.b16 %v892, %v891
        %v902 = vpack.c.b16 %v894, %v893
        %911 = vmatpush.bf16.msra.mxu0 %v902
        %912 = vmatpush.bf16.msra.mxu0 %v901
        %913 = vmatpush.bf16.msra.mxu0 %v900
        %914 = vmatpush.bf16.msra.mxu0 %v899
        %915 = vmatpush.bf16.msra.mxu0 %v898
        %916 = vmatpush.bf16.msra.mxu0 %v897
        %917 = vmatpush.bf16.msra.mxu0 %v896
        %918 = vmatpush.bf16.msra.mxu0 %v895
        %919 = vmatmul.bf16.gmra.mxu0 %v831
        %v920 = vpop.f32.mrf.mxu0
        %v921 = vadd.f32 0.0, %v920
        %v922 = vpop.f32.mrf.mxu0
        %v923 = vadd.f32 0.0, %v922
        %924 = vmatmul.bf16.gmra.mxu0 %v832
        %v925 = vpop.f32.mrf.mxu0
        %v926 = vadd.f32 0.0, %v925
        %v927 = vpop.f32.mrf.mxu0
        %v928 = vadd.f32 0.0, %v927
        %929 = vmatmul.bf16.gmra.mxu0 %v833
        %v930 = vpop.f32.mrf.mxu0
        %v931 = vadd.f32 0.0, %v930
        %v932 = vpop.f32.mrf.mxu0
        %v933 = vadd.f32 0.0, %v932
        %934 = vmatmul.bf16.gmra.mxu0 %v834
        %v935 = vpop.f32.mrf.mxu0
        %v936 = vadd.f32 0.0, %v935
        %v937 = vpop.f32.mrf.mxu0
        %v938 = vadd.f32 0.0, %v937
        %939 = vmatmul.bf16.gmra.mxu0 %v835
        %v940 = vpop.f32.mrf.mxu0
        %v941 = vadd.f32 0.0, %v940
        %v942 = vpop.f32.mrf.mxu0
        %v943 = vadd.f32 0.0, %v942
        %944 = vmatmul.bf16.gmra.mxu0 %v836
        %v945 = vpop.f32.mrf.mxu0
        %v946 = vadd.f32 0.0, %v945
        %v947 = vpop.f32.mrf.mxu0
        %v948 = vadd.f32 0.0, %v947
        %949 = vmatmul.bf16.gmra.mxu0 %v837
        %v950 = vpop.f32.mrf.mxu0
        %v951 = vadd.f32 0.0, %v950
        %v952 = vpop.f32.mrf.mxu0
        %v953 = vadd.f32 0.0, %v952
        %954 = vmatmul.bf16.gmra.mxu0 %v838
        %v955 = vpop.f32.mrf.mxu0
        %v956 = vadd.f32 0.0, %v955
        %v957 = vpop.f32.mrf.mxu0
        %v958 = vadd.f32 0.0, %v957
        %959 = vmatmul.bf16.gmra.mxu0 %v839
        %v960 = vpop.f32.mrf.mxu0
        %v961 = vadd.f32 0.0, %v960
        %v962 = vpop.f32.mrf.mxu0
        %v963 = vadd.f32 0.0, %v962
        %964 = vmatmul.bf16.gmra.mxu0 %v840
        %v965 = vpop.f32.mrf.mxu0
        %v966 = vadd.f32 0.0, %v965
        %v967 = vpop.f32.mrf.mxu0
        %v968 = vadd.f32 0.0, %v967
        %969 = vmatmul.bf16.gmra.mxu0 %v841
        %v970 = vpop.f32.mrf.mxu0
        %v971 = vadd.f32 0.0, %v970
        %v972 = vpop.f32.mrf.mxu0
        %v973 = vadd.f32 0.0, %v972
        %974 = vmatmul.bf16.gmra.mxu0 %v842
        %v975 = vpop.f32.mrf.mxu0
        %v976 = vadd.f32 0.0, %v975
        %v977 = vpop.f32.mrf.mxu0
        %v978 = vadd.f32 0.0, %v977
        %979 = vmatmul.bf16.gmra.mxu0 %v843
        %v980 = vpop.f32.mrf.mxu0
        %v981 = vadd.f32 0.0, %v980
        %v982 = vpop.f32.mrf.mxu0
        %v983 = vadd.f32 0.0, %v982
        %984 = vmatmul.bf16.gmra.mxu0 %v844
        %v985 = vpop.f32.mrf.mxu0
        %v986 = vadd.f32 0.0, %v985
        %v987 = vpop.f32.mrf.mxu0
        %v988 = vadd.f32 0.0, %v987
        %989 = vmatmul.bf16.gmra.mxu0 %v845
        %v990 = vpop.f32.mrf.mxu0
        %v991 = vadd.f32 0.0, %v990
        %v992 = vpop.f32.mrf.mxu0
        %v993 = vadd.f32 0.0, %v992
        %994 = vmatmul.bf16.gmra.mxu0 %v846
        %v995 = vpop.f32.mrf.mxu0
        %v996 = vadd.f32 0.0, %v995
        %v997 = vpop.f32.mrf.mxu0
        %v998 = vadd.f32 0.0, %v997
        %999 = vdwg.mxu0
        %v1000 = vadd.f32 %v799, %v921
        %v1001 = vadd.f32 %v800, %v923
        %v1002 = vadd.f32 %v801, %v926
        %v1003 = vadd.f32 %v802, %v928
        %v1004 = vadd.f32 %v803, %v931
        %v1005 = vadd.f32 %v804, %v933
        %v1006 = vadd.f32 %v805, %v936
        %v1007 = vadd.f32 %v806, %v938
        %v1008 = vadd.f32 %v807, %v941
        %v1009 = vadd.f32 %v808, %v943
        %v1010 = vadd.f32 %v809, %v946
        %v1011 = vadd.f32 %v810, %v948
        %v1012 = vadd.f32 %v811, %v951
        %v1013 = vadd.f32 %v812, %v953
        %v1014 = vadd.f32 %v813, %v956
        %v1015 = vadd.f32 %v814, %v958
        %v1016 = vadd.f32 %v815, %v961
        %v1017 = vadd.f32 %v816, %v963
        %v1018 = vadd.f32 %v817, %v966
        %v1019 = vadd.f32 %v818, %v968
        %v1020 = vadd.f32 %v819, %v971
        %v1021 = vadd.f32 %v820, %v973
        %v1022 = vadd.f32 %v821, %v976
        %v1023 = vadd.f32 %v822, %v978
        %v1024 = vadd.f32 %v823, %v981
        %v1025 = vadd.f32 %v824, %v983
        %v1026 = vadd.f32 %v825, %v986
        %v1027 = vadd.f32 %v826, %v988
        %v1028 = vadd.f32 %v827, %v991
        %v1029 = vadd.f32 %v828, %v993
        %v1030 = vadd.f32 %v829, %v996
        %v1031 = vadd.f32 %v830, %v998
        %1032 = vst [vmem:[#allocation3] sm:$0xff] %v1000
        %1033 = vst [vmem:[#allocation3 + $0x8] sm:$0xff] %v1001
        %1034 = vst [vmem:[#allocation3 + $0x10] sm:$0xff] %v1002
        %1035 = vst [vmem:[#allocation3 + $0x18] sm:$0xff] %v1003
        %1036 = vst [vmem:[#allocation3 + $0x20] sm:$0xff] %v1004
        %1037 = vst [vmem:[#allocation3 + $0x28] sm:$0xff] %v1005
        %1038 = vst [vmem:[#allocation3 + $0x30] sm:$0xff] %v1006
        %1039 = vst [vmem:[#allocation3 + $0x38] sm:$0xff] %v1007
        %1040 = vst [vmem:[#allocation3 + $0x40] sm:$0xff] %v1008
        %1041 = vst [vmem:[#allocation3 + $0x48] sm:$0xff] %v1009
        %1042 = vst [vmem:[#allocation3 + $0x50] sm:$0xff] %v1010
        %1043 = vst [vmem:[#allocation3 + $0x58] sm:$0xff] %v1011
        %1044 = vst [vmem:[#allocation3 + $0x60] sm:$0xff] %v1012
        %1045 = vst [vmem:[#allocation3 + $0x68] sm:$0xff] %v1013
        %1046 = vst [vmem:[#allocation3 + $0x70] sm:$0xff] %v1014
        %1047 = vst [vmem:[#allocation3 + $0x78] sm:$0xff] %v1015
        %1048 = vst [vmem:[#allocation3 + $0x80] sm:$0xff] %v1016
        %1049 = vst [vmem:[#allocation3 + $0x88] sm:$0xff] %v1017
        %1050 = vst [vmem:[#allocation3 + $0x90] sm:$0xff] %v1018
        %1051 = vst [vmem:[#allocation3 + $0x98] sm:$0xff] %v1019
        %1052 = vst [vmem:[#allocation3 + $0xa0] sm:$0xff] %v1020
        %1053 = vst [vmem:[#allocation3 + $0xa8] sm:$0xff] %v1021
        %1054 = vst [vmem:[#allocation3 + $0xb0] sm:$0xff] %v1022
        %1055 = vst [vmem:[#allocation3 + $0xb8] sm:$0xff] %v1023
        %1056 = vst [vmem:[#allocation3 + $0xc0] sm:$0xff] %v1024
        %1057 = vst [vmem:[#allocation3 + $0xc8] sm:$0xff] %v1025
        %1058 = vst [vmem:[#allocation3 + $0xd0] sm:$0xff] %v1026
        %1059 = vst [vmem:[#allocation3 + $0xd8] sm:$0xff] %v1027
        %1060 = vst [vmem:[#allocation3 + $0xe0] sm:$0xff] %v1028
        %1061 = vst [vmem:[#allocation3 + $0xe8] sm:$0xff] %v1029
        %1062 = vst [vmem:[#allocation3 + $0xf0] sm:$0xff] %v1030
        %1063 = vst [vmem:[#allocation3 + $0xf8] sm:$0xff] %v1031
        %v1064 = vld [vmem:[#allocation2 + $0x1] sm:$0xff]
        %v1065 = vld [vmem:[#allocation2 + $0x9] sm:$0xff]
        %v1066 = vld [vmem:[#allocation2 + $0x19] sm:$0xff]
        %v1067 = vld [vmem:[#allocation2 + $0x21] sm:$0xff]
        %v1068 = vld [vmem:[#allocation2 + $0x31] sm:$0xff]
        %v1069 = vld [vmem:[#allocation2 + $0x39] sm:$0xff]
        %v1070 = vld [vmem:[#allocation2 + $0x49] sm:$0xff]
        %v1071 = vld [vmem:[#allocation2 + $0x51] sm:$0xff]
        %v1072 = vld [vmem:[#allocation2 + $0x61] sm:$0xff]
        %v1073 = vld [vmem:[#allocation2 + $0x69] sm:$0xff]
        %v1074 = vld [vmem:[#allocation2 + $0x79] sm:$0xff]
        %v1075 = vld [vmem:[#allocation2 + $0x81] sm:$0xff]
        %v1076 = vld [vmem:[#allocation2 + $0x91] sm:$0xff]
        %v1077 = vld [vmem:[#allocation2 + $0x99] sm:$0xff]
        %v1078 = vld [vmem:[#allocation2 + $0xa9] sm:$0xff]
        %v1079 = vld [vmem:[#allocation2 + $0xb1] sm:$0xff]
        %v1080 = vld [vmem:[#allocation2 + $0xc1] sm:$0xff]
        %v1081 = vld [vmem:[#allocation2 + $0xc9] sm:$0xff]
        %v1082 = vld [vmem:[#allocation2 + $0xd9] sm:$0xff]
        %v1083 = vld [vmem:[#allocation2 + $0xe1] sm:$0xff]
        %v1084 = vld [vmem:[#allocation2 + $0xf1] sm:$0xff]
        %v1085 = vld [vmem:[#allocation2 + $0xf9] sm:$0xff]
        %v1086 = vld [vmem:[#allocation2 + $0x109] sm:$0xff]
        %v1087 = vld [vmem:[#allocation2 + $0x111] sm:$0xff]
        %v1088 = vld [vmem:[#allocation2 + $0x121] sm:$0xff]
        %v1089 = vld [vmem:[#allocation2 + $0x129] sm:$0xff]
        %v1090 = vld [vmem:[#allocation2 + $0x139] sm:$0xff]
        %v1091 = vld [vmem:[#allocation2 + $0x141] sm:$0xff]
        %v1092 = vld [vmem:[#allocation2 + $0x151] sm:$0xff]
        %v1093 = vld [vmem:[#allocation2 + $0x159] sm:$0xff]
        %v1094 = vld [vmem:[#allocation2 + $0x169] sm:$0xff]
        %v1095 = vld [vmem:[#allocation2 + $0x171] sm:$0xff]
        %v1096 = vld [vmem:[#allocation3] sm:$0xff]
        %v1097 = vld [vmem:[#allocation3 + $0x8] sm:$0xff]
        %v1098 = vld [vmem:[#allocation3 + $0x10] sm:$0xff]
        %v1099 = vld [vmem:[#allocation3 + $0x18] sm:$0xff]
        %v1100 = vld [vmem:[#allocation3 + $0x20] sm:$0xff]
        %v1101 = vld [vmem:[#allocation3 + $0x28] sm:$0xff]
        %v1102 = vld [vmem:[#allocation3 + $0x30] sm:$0xff]
        %v1103 = vld [vmem:[#allocation3 + $0x38] sm:$0xff]
        %v1104 = vld [vmem:[#allocation3 + $0x40] sm:$0xff]
        %v1105 = vld [vmem:[#allocation3 + $0x48] sm:$0xff]
        %v1106 = vld [vmem:[#allocation3 + $0x50] sm:$0xff]
        %v1107 = vld [vmem:[#allocation3 + $0x58] sm:$0xff]
        %v1108 = vld [vmem:[#allocation3 + $0x60] sm:$0xff]
        %v1109 = vld [vmem:[#allocation3 + $0x68] sm:$0xff]
        %v1110 = vld [vmem:[#allocation3 + $0x70] sm:$0xff]
        %v1111 = vld [vmem:[#allocation3 + $0x78] sm:$0xff]
        %v1112 = vld [vmem:[#allocation3 + $0x80] sm:$0xff]
        %v1113 = vld [vmem:[#allocation3 + $0x88] sm:$0xff]
        %v1114 = vld [vmem:[#allocation3 + $0x90] sm:$0xff]
        %v1115 = vld [vmem:[#allocation3 + $0x98] sm:$0xff]
        %v1116 = vld [vmem:[#allocation3 + $0xa0] sm:$0xff]
        %v1117 = vld [vmem:[#allocation3 + $0xa8] sm:$0xff]
        %v1118 = vld [vmem:[#allocation3 + $0xb0] sm:$0xff]
        %v1119 = vld [vmem:[#allocation3 + $0xb8] sm:$0xff]
        %v1120 = vld [vmem:[#allocation3 + $0xc0] sm:$0xff]
        %v1121 = vld [vmem:[#allocation3 + $0xc8] sm:$0xff]
        %v1122 = vld [vmem:[#allocation3 + $0xd0] sm:$0xff]
        %v1123 = vld [vmem:[#allocation3 + $0xd8] sm:$0xff]
        %v1124 = vld [vmem:[#allocation3 + $0xe0] sm:$0xff]
        %v1125 = vld [vmem:[#allocation3 + $0xe8] sm:$0xff]
        %v1126 = vld [vmem:[#allocation3 + $0xf0] sm:$0xff]
        %v1127 = vld [vmem:[#allocation3 + $0xf8] sm:$0xff]
        %v1128 = vpack.c.bf16 %v1065, %v1064
        %v1129 = vpack.c.bf16 %v1067, %v1066
        %v1130 = vpack.c.bf16 %v1069, %v1068
        %v1131 = vpack.c.bf16 %v1071, %v1070
        %v1132 = vpack.c.bf16 %v1073, %v1072
        %v1133 = vpack.c.bf16 %v1075, %v1074
        %v1134 = vpack.c.bf16 %v1077, %v1076
        %v1135 = vpack.c.bf16 %v1079, %v1078
        %v1136 = vpack.c.bf16 %v1081, %v1080
        %v1137 = vpack.c.bf16 %v1083, %v1082
        %v1138 = vpack.c.bf16 %v1085, %v1084
        %v1139 = vpack.c.bf16 %v1087, %v1086
        %v1140 = vpack.c.bf16 %v1089, %v1088
        %v1141 = vpack.c.bf16 %v1091, %v1090
        %v1142 = vpack.c.bf16 %v1093, %v1092
        %v1143 = vpack.c.bf16 %v1095, %v1094
        %s1144 = scalar_lea.vmem %s3, 64
        %v1145 = vld [vmem:[%s1144] sm:$0xf]
        %v1146 = vld [vmem:[%s1144 + $0x4] sm:$0xf]
        %v1147 = vld [vmem:[%s1144 + $0x8] sm:$0xf]
        %v1148 = vld [vmem:[%s1144 + $0xc] sm:$0xf]
        %v1149 = vld [vmem:[%s1144 + $0x10] sm:$0xf]
        %v1150 = vld [vmem:[%s1144 + $0x14] sm:$0xf]
        %v1151 = vld [vmem:[%s1144 + $0x18] sm:$0xf]
        %v1152 = vld [vmem:[%s1144 + $0x1c] sm:$0xf]
        %v1153 = vld [vmem:[%s1144 + $0x20] sm:$0xf]
        %v1154 = vld [vmem:[%s1144 + $0x24] sm:$0xf]
        %v1155 = vld [vmem:[%s1144 + $0x28] sm:$0xf]
        %v1156 = vld [vmem:[%s1144 + $0x2c] sm:$0xf]
        %v1157 = vld [vmem:[%s1144 + $0x30] sm:$0xf]
        %v1158 = vld [vmem:[%s1144 + $0x34] sm:$0xf]
        %v1159 = vld [vmem:[%s1144 + $0x38] sm:$0xf]
        %v1160 = vld [vmem:[%s1144 + $0x3c] sm:$0xf]
        %v1177 = vunpack.c.l.b16 %v1145
        %v1178 = vunpack.c.l.b16 %v1146
        %v1179 = vunpack.c.l.b16 %v1147
        %v1180 = vunpack.c.l.b16 %v1148
        %v1181 = vunpack.c.l.b16 %v1149
        %v1182 = vunpack.c.l.b16 %v1150
        %v1183 = vunpack.c.l.b16 %v1151
        %v1184 = vunpack.c.l.b16 %v1152
        %v1185 = vunpack.c.l.b16 %v1153
        %v1186 = vunpack.c.l.b16 %v1154
        %v1187 = vunpack.c.l.b16 %v1155
        %v1188 = vunpack.c.l.b16 %v1156
        %v1189 = vunpack.c.l.b16 %v1157
        %v1190 = vunpack.c.l.b16 %v1158
        %v1191 = vunpack.c.l.b16 %v1159
        %v1192 = vunpack.c.l.b16 %v1160
        %v1193 = vpack.c.b16 %v1178, %v1177
        %v1194 = vpack.c.b16 %v1180, %v1179
        %v1195 = vpack.c.b16 %v1182, %v1181
        %v1196 = vpack.c.b16 %v1184, %v1183
        %v1197 = vpack.c.b16 %v1186, %v1185
        %v1198 = vpack.c.b16 %v1188, %v1187
        %v1199 = vpack.c.b16 %v1190, %v1189
        %v1200 = vpack.c.b16 %v1192, %v1191
        %1209 = vmatpush.bf16.msra.mxu0 %v1200
        %1210 = vmatpush.bf16.msra.mxu0 %v1199
        %1211 = vmatpush.bf16.msra.mxu0 %v1198
        %1212 = vmatpush.bf16.msra.mxu0 %v1197
        %1213 = vmatpush.bf16.msra.mxu0 %v1196
        %1214 = vmatpush.bf16.msra.mxu0 %v1195
        %1215 = vmatpush.bf16.msra.mxu0 %v1194
        %1216 = vmatpush.bf16.msra.mxu0 %v1193
        %1217 = vmatmul.bf16.gmra.mxu0 %v1128
        %v1218 = vpop.f32.mrf.mxu0
        %v1219 = vadd.f32 0.0, %v1218
        %v1220 = vpop.f32.mrf.mxu0
        %v1221 = vadd.f32 0.0, %v1220
        %1222 = vmatmul.bf16.gmra.mxu0 %v1129
        %v1223 = vpop.f32.mrf.mxu0
        %v1224 = vadd.f32 0.0, %v1223
        %v1225 = vpop.f32.mrf.mxu0
        %v1226 = vadd.f32 0.0, %v1225
        %1227 = vmatmul.bf16.gmra.mxu0 %v1130
        %v1228 = vpop.f32.mrf.mxu0
        %v1229 = vadd.f32 0.0, %v1228
        %v1230 = vpop.f32.mrf.mxu0
        %v1231 = vadd.f32 0.0, %v1230
        %1232 = vmatmul.bf16.gmra.mxu0 %v1131
        %v1233 = vpop.f32.mrf.mxu0
        %v1234 = vadd.f32 0.0, %v1233
        %v1235 = vpop.f32.mrf.mxu0
        %v1236 = vadd.f32 0.0, %v1235
        %1237 = vmatmul.bf16.gmra.mxu0 %v1132
        %v1238 = vpop.f32.mrf.mxu0
        %v1239 = vadd.f32 0.0, %v1238
        %v1240 = vpop.f32.mrf.mxu0
        %v1241 = vadd.f32 0.0, %v1240
        %1242 = vmatmul.bf16.gmra.mxu0 %v1133
        %v1243 = vpop.f32.mrf.mxu0
        %v1244 = vadd.f32 0.0, %v1243
        %v1245 = vpop.f32.mrf.mxu0
        %v1246 = vadd.f32 0.0, %v1245
        %1247 = vmatmul.bf16.gmra.mxu0 %v1134
        %v1248 = vpop.f32.mrf.mxu0
        %v1249 = vadd.f32 0.0, %v1248
        %v1250 = vpop.f32.mrf.mxu0
        %v1251 = vadd.f32 0.0, %v1250
        %1252 = vmatmul.bf16.gmra.mxu0 %v1135
        %v1253 = vpop.f32.mrf.mxu0
        %v1254 = vadd.f32 0.0, %v1253
        %v1255 = vpop.f32.mrf.mxu0
        %v1256 = vadd.f32 0.0, %v1255
        %1257 = vmatmul.bf16.gmra.mxu0 %v1136
        %v1258 = vpop.f32.mrf.mxu0
        %v1259 = vadd.f32 0.0, %v1258
        %v1260 = vpop.f32.mrf.mxu0
        %v1261 = vadd.f32 0.0, %v1260
        %1262 = vmatmul.bf16.gmra.mxu0 %v1137
        %v1263 = vpop.f32.mrf.mxu0
        %v1264 = vadd.f32 0.0, %v1263
        %v1265 = vpop.f32.mrf.mxu0
        %v1266 = vadd.f32 0.0, %v1265
        %1267 = vmatmul.bf16.gmra.mxu0 %v1138
        %v1268 = vpop.f32.mrf.mxu0
        %v1269 = vadd.f32 0.0, %v1268
        %v1270 = vpop.f32.mrf.mxu0
        %v1271 = vadd.f32 0.0, %v1270
        %1272 = vmatmul.bf16.gmra.mxu0 %v1139
        %v1273 = vpop.f32.mrf.mxu0
        %v1274 = vadd.f32 0.0, %v1273
        %v1275 = vpop.f32.mrf.mxu0
        %v1276 = vadd.f32 0.0, %v1275
        %1277 = vmatmul.bf16.gmra.mxu0 %v1140
        %v1278 = vpop.f32.mrf.mxu0
        %v1279 = vadd.f32 0.0, %v1278
        %v1280 = vpop.f32.mrf.mxu0
        %v1281 = vadd.f32 0.0, %v1280
        %1282 = vmatmul.bf16.gmra.mxu0 %v1141
        %v1283 = vpop.f32.mrf.mxu0
        %v1284 = vadd.f32 0.0, %v1283
        %v1285 = vpop.f32.mrf.mxu0
        %v1286 = vadd.f32 0.0, %v1285
        %1287 = vmatmul.bf16.gmra.mxu0 %v1142
        %v1288 = vpop.f32.mrf.mxu0
        %v1289 = vadd.f32 0.0, %v1288
        %v1290 = vpop.f32.mrf.mxu0
        %v1291 = vadd.f32 0.0, %v1290
        %1292 = vmatmul.bf16.gmra.mxu0 %v1143
        %v1293 = vpop.f32.mrf.mxu0
        %v1294 = vadd.f32 0.0, %v1293
        %v1295 = vpop.f32.mrf.mxu0
        %v1296 = vadd.f32 0.0, %v1295
        %1297 = vdwg.mxu0
        %v1298 = vadd.f32 %v1096, %v1219
        %v1299 = vadd.f32 %v1097, %v1221
        %v1300 = vadd.f32 %v1098, %v1224
        %v1301 = vadd.f32 %v1099, %v1226
        %v1302 = vadd.f32 %v1100, %v1229
        %v1303 = vadd.f32 %v1101, %v1231
        %v1304 = vadd.f32 %v1102, %v1234
        %v1305 = vadd.f32 %v1103, %v1236
        %v1306 = vadd.f32 %v1104, %v1239
        %v1307 = vadd.f32 %v1105, %v1241
        %v1308 = vadd.f32 %v1106, %v1244
        %v1309 = vadd.f32 %v1107, %v1246
        %v1310 = vadd.f32 %v1108, %v1249
        %v1311 = vadd.f32 %v1109, %v1251
        %v1312 = vadd.f32 %v1110, %v1254
        %v1313 = vadd.f32 %v1111, %v1256
        %v1314 = vadd.f32 %v1112, %v1259
        %v1315 = vadd.f32 %v1113, %v1261
        %v1316 = vadd.f32 %v1114, %v1264
        %v1317 = vadd.f32 %v1115, %v1266
        %v1318 = vadd.f32 %v1116, %v1269
        %v1319 = vadd.f32 %v1117, %v1271
        %v1320 = vadd.f32 %v1118, %v1274
        %v1321 = vadd.f32 %v1119, %v1276
        %v1322 = vadd.f32 %v1120, %v1279
        %v1323 = vadd.f32 %v1121, %v1281
        %v1324 = vadd.f32 %v1122, %v1284
        %v1325 = vadd.f32 %v1123, %v1286
        %v1326 = vadd.f32 %v1124, %v1289
        %v1327 = vadd.f32 %v1125, %v1291
        %v1328 = vadd.f32 %v1126, %v1294
        %v1329 = vadd.f32 %v1127, %v1296
        %1330 = vst [vmem:[#allocation3] sm:$0xff] %v1298
        %1331 = vst [vmem:[#allocation3 + $0x8] sm:$0xff] %v1299
        %1332 = vst [vmem:[#allocation3 + $0x10] sm:$0xff] %v1300
        %1333 = vst [vmem:[#allocation3 + $0x18] sm:$0xff] %v1301
        %1334 = vst [vmem:[#allocation3 + $0x20] sm:$0xff] %v1302
        %1335 = vst [vmem:[#allocation3 + $0x28] sm:$0xff] %v1303
        %1336 = vst [vmem:[#allocation3 + $0x30] sm:$0xff] %v1304
        %1337 = vst [vmem:[#allocation3 + $0x38] sm:$0xff] %v1305
        %1338 = vst [vmem:[#allocation3 + $0x40] sm:$0xff] %v1306
        %1339 = vst [vmem:[#allocation3 + $0x48] sm:$0xff] %v1307
        %1340 = vst [vmem:[#allocation3 + $0x50] sm:$0xff] %v1308
        %1341 = vst [vmem:[#allocation3 + $0x58] sm:$0xff] %v1309
        %1342 = vst [vmem:[#allocation3 + $0x60] sm:$0xff] %v1310
        %1343 = vst [vmem:[#allocation3 + $0x68] sm:$0xff] %v1311
        %1344 = vst [vmem:[#allocation3 + $0x70] sm:$0xff] %v1312
        %1345 = vst [vmem:[#allocation3 + $0x78] sm:$0xff] %v1313
        %1346 = vst [vmem:[#allocation3 + $0x80] sm:$0xff] %v1314
        %1347 = vst [vmem:[#allocation3 + $0x88] sm:$0xff] %v1315
        %1348 = vst [vmem:[#allocation3 + $0x90] sm:$0xff] %v1316
        %1349 = vst [vmem:[#allocation3 + $0x98] sm:$0xff] %v1317
        %1350 = vst [vmem:[#allocation3 + $0xa0] sm:$0xff] %v1318
        %1351 = vst [vmem:[#allocation3 + $0xa8] sm:$0xff] %v1319
        %1352 = vst [vmem:[#allocation3 + $0xb0] sm:$0xff] %v1320
        %1353 = vst [vmem:[#allocation3 + $0xb8] sm:$0xff] %v1321
        %1354 = vst [vmem:[#allocation3 + $0xc0] sm:$0xff] %v1322
        %1355 = vst [vmem:[#allocation3 + $0xc8] sm:$0xff] %v1323
        %1356 = vst [vmem:[#allocation3 + $0xd0] sm:$0xff] %v1324
        %1357 = vst [vmem:[#allocation3 + $0xd8] sm:$0xff] %v1325
        %1358 = vst [vmem:[#allocation3 + $0xe0] sm:$0xff] %v1326
        %1359 = vst [vmem:[#allocation3 + $0xe8] sm:$0xff] %v1327
        %1360 = vst [vmem:[#allocation3 + $0xf0] sm:$0xff] %v1328
        %1361 = vst [vmem:[#allocation3 + $0xf8] sm:$0xff] %v1329
        %v1362 = vld [vmem:[#allocation2 + $0x2] sm:$0xff]
        %v1363 = vld [vmem:[#allocation2 + $0xa] sm:$0xff]
        %v1364 = vld [vmem:[#allocation2 + $0x1a] sm:$0xff]
        %v1365 = vld [vmem:[#allocation2 + $0x22] sm:$0xff]
        %v1366 = vld [vmem:[#allocation2 + $0x32] sm:$0xff]
        %v1367 = vld [vmem:[#allocation2 + $0x3a] sm:$0xff]
        %v1368 = vld [vmem:[#allocation2 + $0x4a] sm:$0xff]
        %v1369 = vld [vmem:[#allocation2 + $0x52] sm:$0xff]
        %v1370 = vld [vmem:[#allocation2 + $0x62] sm:$0xff]
        %v1371 = vld [vmem:[#allocation2 + $0x6a] sm:$0xff]
        %v1372 = vld [vmem:[#allocation2 + $0x7a] sm:$0xff]
        %v1373 = vld [vmem:[#allocation2 + $0x82] sm:$0xff]
        %v1374 = vld [vmem:[#allocation2 + $0x92] sm:$0xff]
        %v1375 = vld [vmem:[#allocation2 + $0x9a] sm:$0xff]
        %v1376 = vld [vmem:[#allocation2 + $0xaa] sm:$0xff]
        %v1377 = vld [vmem:[#allocation2 + $0xb2] sm:$0xff]
        %v1378 = vld [vmem:[#allocation2 + $0xc2] sm:$0xff]
        %v1379 = vld [vmem:[#allocation2 + $0xca] sm:$0xff]
        %v1380 = vld [vmem:[#allocation2 + $0xda] sm:$0xff]
        %v1381 = vld [vmem:[#allocation2 + $0xe2] sm:$0xff]
        %v1382 = vld [vmem:[#allocation2 + $0xf2] sm:$0xff]
        %v1383 = vld [vmem:[#allocation2 + $0xfa] sm:$0xff]
        %v1384 = vld [vmem:[#allocation2 + $0x10a] sm:$0xff]
        %v1385 = vld [vmem:[#allocation2 + $0x112] sm:$0xff]
        %v1386 = vld [vmem:[#allocation2 + $0x122] sm:$0xff]
        %v1387 = vld [vmem:[#allocation2 + $0x12a] sm:$0xff]
        %v1388 = vld [vmem:[#allocation2 + $0x13a] sm:$0xff]
        %v1389 = vld [vmem:[#allocation2 + $0x142] sm:$0xff]
        %v1390 = vld [vmem:[#allocation2 + $0x152] sm:$0xff]
        %v1391 = vld [vmem:[#allocation2 + $0x15a] sm:$0xff]
        %v1392 = vld [vmem:[#allocation2 + $0x16a] sm:$0xff]
        %v1393 = vld [vmem:[#allocation2 + $0x172] sm:$0xff]
        %v1394 = vld [vmem:[#allocation3] sm:$0xff]
        %v1395 = vld [vmem:[#allocation3 + $0x8] sm:$0xff]
        %v1396 = vld [vmem:[#allocation3 + $0x10] sm:$0xff]
        %v1397 = vld [vmem:[#allocation3 + $0x18] sm:$0xff]
        %v1398 = vld [vmem:[#allocation3 + $0x20] sm:$0xff]
        %v1399 = vld [vmem:[#allocation3 + $0x28] sm:$0xff]
        %v1400 = vld [vmem:[#allocation3 + $0x30] sm:$0xff]
        %v1401 = vld [vmem:[#allocation3 + $0x38] sm:$0xff]
        %v1402 = vld [vmem:[#allocation3 + $0x40] sm:$0xff]
        %v1403 = vld [vmem:[#allocation3 + $0x48] sm:$0xff]
        %v1404 = vld [vmem:[#allocation3 + $0x50] sm:$0xff]
        %v1405 = vld [vmem:[#allocation3 + $0x58] sm:$0xff]
        %v1406 = vld [vmem:[#allocation3 + $0x60] sm:$0xff]
        %v1407 = vld [vmem:[#allocation3 + $0x68] sm:$0xff]
        %v1408 = vld [vmem:[#allocation3 + $0x70] sm:$0xff]
        %v1409 = vld [vmem:[#allocation3 + $0x78] sm:$0xff]
        %v1410 = vld [vmem:[#allocation3 + $0x80] sm:$0xff]
        %v1411 = vld [vmem:[#allocation3 + $0x88] sm:$0xff]
        %v1412 = vld [vmem:[#allocation3 + $0x90] sm:$0xff]
        %v1413 = vld [vmem:[#allocation3 + $0x98] sm:$0xff]
        %v1414 = vld [vmem:[#allocation3 + $0xa0] sm:$0xff]
        %v1415 = vld [vmem:[#allocation3 + $0xa8] sm:$0xff]
        %v1416 = vld [vmem:[#allocation3 + $0xb0] sm:$0xff]
        %v1417 = vld [vmem:[#allocation3 + $0xb8] sm:$0xff]
        %v1418 = vld [vmem:[#allocation3 + $0xc0] sm:$0xff]
        %v1419 = vld [vmem:[#allocation3 + $0xc8] sm:$0xff]
        %v1420 = vld [vmem:[#allocation3 + $0xd0] sm:$0xff]
        %v1421 = vld [vmem:[#allocation3 + $0xd8] sm:$0xff]
        %v1422 = vld [vmem:[#allocation3 + $0xe0] sm:$0xff]
        %v1423 = vld [vmem:[#allocation3 + $0xe8] sm:$0xff]
        %v1424 = vld [vmem:[#allocation3 + $0xf0] sm:$0xff]
        %v1425 = vld [vmem:[#allocation3 + $0xf8] sm:$0xff]
        %v1426 = vpack.c.bf16 %v1363, %v1362
        %v1427 = vpack.c.bf16 %v1365, %v1364
        %v1428 = vpack.c.bf16 %v1367, %v1366
        %v1429 = vpack.c.bf16 %v1369, %v1368
        %v1430 = vpack.c.bf16 %v1371, %v1370
        %v1431 = vpack.c.bf16 %v1373, %v1372
        %v1432 = vpack.c.bf16 %v1375, %v1374
        %v1433 = vpack.c.bf16 %v1377, %v1376
        %v1434 = vpack.c.bf16 %v1379, %v1378
        %v1435 = vpack.c.bf16 %v1381, %v1380
        %v1436 = vpack.c.bf16 %v1383, %v1382
        %v1437 = vpack.c.bf16 %v1385, %v1384
        %v1438 = vpack.c.bf16 %v1387, %v1386
        %v1439 = vpack.c.bf16 %v1389, %v1388
        %v1440 = vpack.c.bf16 %v1391, %v1390
        %v1441 = vpack.c.bf16 %v1393, %v1392
        %s1442 = scalar_lea.vmem %s3, 128
        %v1443 = vld [vmem:[%s1442] sm:$0xf]
        %v1444 = vld [vmem:[%s1442 + $0x4] sm:$0xf]
        %v1445 = vld [vmem:[%s1442 + $0x8] sm:$0xf]
        %v1446 = vld [vmem:[%s1442 + $0xc] sm:$0xf]
        %v1447 = vld [vmem:[%s1442 + $0x10] sm:$0xf]
        %v1448 = vld [vmem:[%s1442 + $0x14] sm:$0xf]
        %v1449 = vld [vmem:[%s1442 + $0x18] sm:$0xf]
        %v1450 = vld [vmem:[%s1442 + $0x1c] sm:$0xf]
        %v1451 = vld [vmem:[%s1442 + $0x20] sm:$0xf]
        %v1452 = vld [vmem:[%s1442 + $0x24] sm:$0xf]
        %v1453 = vld [vmem:[%s1442 + $0x28] sm:$0xf]
        %v1454 = vld [vmem:[%s1442 + $0x2c] sm:$0xf]
        %v1455 = vld [vmem:[%s1442 + $0x30] sm:$0xf]
        %v1456 = vld [vmem:[%s1442 + $0x34] sm:$0xf]
        %v1457 = vld [vmem:[%s1442 + $0x38] sm:$0xf]
        %v1458 = vld [vmem:[%s1442 + $0x3c] sm:$0xf]
        %v1475 = vunpack.c.l.b16 %v1443
        %v1476 = vunpack.c.l.b16 %v1444
        %v1477 = vunpack.c.l.b16 %v1445
        %v1478 = vunpack.c.l.b16 %v1446
        %v1479 = vunpack.c.l.b16 %v1447
        %v1480 = vunpack.c.l.b16 %v1448
        %v1481 = vunpack.c.l.b16 %v1449
        %v1482 = vunpack.c.l.b16 %v1450
        %v1483 = vunpack.c.l.b16 %v1451
        %v1484 = vunpack.c.l.b16 %v1452
        %v1485 = vunpack.c.l.b16 %v1453
        %v1486 = vunpack.c.l.b16 %v1454
        %v1487 = vunpack.c.l.b16 %v1455
        %v1488 = vunpack.c.l.b16 %v1456
        %v1489 = vunpack.c.l.b16 %v1457
        %v1490 = vunpack.c.l.b16 %v1458
        %v1491 = vpack.c.b16 %v1476, %v1475
        %v1492 = vpack.c.b16 %v1478, %v1477
        %v1493 = vpack.c.b16 %v1480, %v1479
        %v1494 = vpack.c.b16 %v1482, %v1481
        %v1495 = vpack.c.b16 %v1484, %v1483
        %v1496 = vpack.c.b16 %v1486, %v1485
        %v1497 = vpack.c.b16 %v1488, %v1487
        %v1498 = vpack.c.b16 %v1490, %v1489
        %1507 = vmatpush.bf16.msra.mxu0 %v1498
        %1508 = vmatpush.bf16.msra.mxu0 %v1497
        %1509 = vmatpush.bf16.msra.mxu0 %v1496
        %1510 = vmatpush.bf16.msra.mxu0 %v1495
        %1511 = vmatpush.bf16.msra.mxu0 %v1494
        %1512 = vmatpush.bf16.msra.mxu0 %v1493
        %1513 = vmatpush.bf16.msra.mxu0 %v1492
        %1514 = vmatpush.bf16.msra.mxu0 %v1491
        %1515 = vmatmul.bf16.gmra.mxu0 %v1426
        %v1516 = vpop.f32.mrf.mxu0
        %v1517 = vadd.f32 0.0, %v1516
        %v1518 = vpop.f32.mrf.mxu0
        %v1519 = vadd.f32 0.0, %v1518
        %1520 = vmatmul.bf16.gmra.mxu0 %v1427
        %v1521 = vpop.f32.mrf.mxu0
        %v1522 = vadd.f32 0.0, %v1521
        %v1523 = vpop.f32.mrf.mxu0
        %v1524 = vadd.f32 0.0, %v1523
        %1525 = vmatmul.bf16.gmra.mxu0 %v1428
        %v1526 = vpop.f32.mrf.mxu0
        %v1527 = vadd.f32 0.0, %v1526
        %v1528 = vpop.f32.mrf.mxu0
        %v1529 = vadd.f32 0.0, %v1528
        %1530 = vmatmul.bf16.gmra.mxu0 %v1429
        %v1531 = vpop.f32.mrf.mxu0
        %v1532 = vadd.f32 0.0, %v1531
        %v1533 = vpop.f32.mrf.mxu0
        %v1534 = vadd.f32 0.0, %v1533
        %1535 = vmatmul.bf16.gmra.mxu0 %v1430
        %v1536 = vpop.f32.mrf.mxu0
        %v1537 = vadd.f32 0.0, %v1536
        %v1538 = vpop.f32.mrf.mxu0
        %v1539 = vadd.f32 0.0, %v1538
        %1540 = vmatmul.bf16.gmra.mxu0 %v1431
        %v1541 = vpop.f32.mrf.mxu0
        %v1542 = vadd.f32 0.0, %v1541
        %v1543 = vpop.f32.mrf.mxu0
        %v1544 = vadd.f32 0.0, %v1543
        %1545 = vmatmul.bf16.gmra.mxu0 %v1432
        %v1546 = vpop.f32.mrf.mxu0
        %v1547 = vadd.f32 0.0, %v1546
        %v1548 = vpop.f32.mrf.mxu0
        %v1549 = vadd.f32 0.0, %v1548
        %1550 = vmatmul.bf16.gmra.mxu0 %v1433
        %v1551 = vpop.f32.mrf.mxu0
        %v1552 = vadd.f32 0.0, %v1551
        %v1553 = vpop.f32.mrf.mxu0
        %v1554 = vadd.f32 0.0, %v1553
        %1555 = vmatmul.bf16.gmra.mxu0 %v1434
        %v1556 = vpop.f32.mrf.mxu0
        %v1557 = vadd.f32 0.0, %v1556
        %v1558 = vpop.f32.mrf.mxu0
        %v1559 = vadd.f32 0.0, %v1558
        %1560 = vmatmul.bf16.gmra.mxu0 %v1435
        %v1561 = vpop.f32.mrf.mxu0
        %v1562 = vadd.f32 0.0, %v1561
        %v1563 = vpop.f32.mrf.mxu0
        %v1564 = vadd.f32 0.0, %v1563
        %1565 = vmatmul.bf16.gmra.mxu0 %v1436
        %v1566 = vpop.f32.mrf.mxu0
        %v1567 = vadd.f32 0.0, %v1566
        %v1568 = vpop.f32.mrf.mxu0
        %v1569 = vadd.f32 0.0, %v1568
        %1570 = vmatmul.bf16.gmra.mxu0 %v1437
        %v1571 = vpop.f32.mrf.mxu0
        %v1572 = vadd.f32 0.0, %v1571
        %v1573 = vpop.f32.mrf.mxu0
        %v1574 = vadd.f32 0.0, %v1573
        %1575 = vmatmul.bf16.gmra.mxu0 %v1438
        %v1576 = vpop.f32.mrf.mxu0
        %v1577 = vadd.f32 0.0, %v1576
        %v1578 = vpop.f32.mrf.mxu0
        %v1579 = vadd.f32 0.0, %v1578
        %1580 = vmatmul.bf16.gmra.mxu0 %v1439
        %v1581 = vpop.f32.mrf.mxu0
        %v1582 = vadd.f32 0.0, %v1581
        %v1583 = vpop.f32.mrf.mxu0
        %v1584 = vadd.f32 0.0, %v1583
        %1585 = vmatmul.bf16.gmra.mxu0 %v1440
        %v1586 = vpop.f32.mrf.mxu0
        %v1587 = vadd.f32 0.0, %v1586
        %v1588 = vpop.f32.mrf.mxu0
        %v1589 = vadd.f32 0.0, %v1588
        %1590 = vmatmul.bf16.gmra.mxu0 %v1441
        %v1591 = vpop.f32.mrf.mxu0
        %v1592 = vadd.f32 0.0, %v1591
        %v1593 = vpop.f32.mrf.mxu0
        %v1594 = vadd.f32 0.0, %v1593
        %1595 = vdwg.mxu0
        %v1596 = vadd.f32 %v1394, %v1517
        %v1597 = vadd.f32 %v1395, %v1519
        %v1598 = vadd.f32 %v1396, %v1522
        %v1599 = vadd.f32 %v1397, %v1524
        %v1600 = vadd.f32 %v1398, %v1527
        %v1601 = vadd.f32 %v1399, %v1529
        %v1602 = vadd.f32 %v1400, %v1532
        %v1603 = vadd.f32 %v1401, %v1534
        %v1604 = vadd.f32 %v1402, %v1537
        %v1605 = vadd.f32 %v1403, %v1539
        %v1606 = vadd.f32 %v1404, %v1542
        %v1607 = vadd.f32 %v1405, %v1544
        %v1608 = vadd.f32 %v1406, %v1547
        %v1609 = vadd.f32 %v1407, %v1549
        %v1610 = vadd.f32 %v1408, %v1552
        %v1611 = vadd.f32 %v1409, %v1554
        %v1612 = vadd.f32 %v1410, %v1557
        %v1613 = vadd.f32 %v1411, %v1559
        %v1614 = vadd.f32 %v1412, %v1562
        %v1615 = vadd.f32 %v1413, %v1564
        %v1616 = vadd.f32 %v1414, %v1567
        %v1617 = vadd.f32 %v1415, %v1569
        %v1618 = vadd.f32 %v1416, %v1572
        %v1619 = vadd.f32 %v1417, %v1574
        %v1620 = vadd.f32 %v1418, %v1577
        %v1621 = vadd.f32 %v1419, %v1579
        %v1622 = vadd.f32 %v1420, %v1582
        %v1623 = vadd.f32 %v1421, %v1584
        %v1624 = vadd.f32 %v1422, %v1587
        %v1625 = vadd.f32 %v1423, %v1589
        %v1626 = vadd.f32 %v1424, %v1592
        %v1627 = vadd.f32 %v1425, %v1594
        %1628 = vst [vmem:[#allocation3] sm:$0xff] %v1596
        %1629 = vst [vmem:[#allocation3 + $0x8] sm:$0xff] %v1597
        %1630 = vst [vmem:[#allocation3 + $0x10] sm:$0xff] %v1598
        %1631 = vst [vmem:[#allocation3 + $0x18] sm:$0xff] %v1599
        %1632 = vst [vmem:[#allocation3 + $0x20] sm:$0xff] %v1600
        %1633 = vst [vmem:[#allocation3 + $0x28] sm:$0xff] %v1601
        %1634 = vst [vmem:[#allocation3 + $0x30] sm:$0xff] %v1602
        %1635 = vst [vmem:[#allocation3 + $0x38] sm:$0xff] %v1603
        %1636 = vst [vmem:[#allocation3 + $0x40] sm:$0xff] %v1604
        %1637 = vst [vmem:[#allocation3 + $0x48] sm:$0xff] %v1605
        %1638 = vst [vmem:[#allocation3 + $0x50] sm:$0xff] %v1606
        %1639 = vst [vmem:[#allocation3 + $0x58] sm:$0xff] %v1607
        %1640 = vst [vmem:[#allocation3 + $0x60] sm:$0xff] %v1608
        %1641 = vst [vmem:[#allocation3 + $0x68] sm:$0xff] %v1609
        %1642 = vst [vmem:[#allocation3 + $0x70] sm:$0xff] %v1610
        %1643 = vst [vmem:[#allocation3 + $0x78] sm:$0xff] %v1611
        %1644 = vst [vmem:[#allocation3 + $0x80] sm:$0xff] %v1612
        %1645 = vst [vmem:[#allocation3 + $0x88] sm:$0xff] %v1613
        %1646 = vst [vmem:[#allocation3 + $0x90] sm:$0xff] %v1614
        %1647 = vst [vmem:[#allocation3 + $0x98] sm:$0xff] %v1615
        %1648 = vst [vmem:[#allocation3 + $0xa0] sm:$0xff] %v1616
        %1649 = vst [vmem:[#allocation3 + $0xa8] sm:$0xff] %v1617
        %1650 = vst [vmem:[#allocation3 + $0xb0] sm:$0xff] %v1618
        %1651 = vst [vmem:[#allocation3 + $0xb8] sm:$0xff] %v1619
        %1652 = vst [vmem:[#allocation3 + $0xc0] sm:$0xff] %v1620
        %1653 = vst [vmem:[#allocation3 + $0xc8] sm:$0xff] %v1621
        %1654 = vst [vmem:[#allocation3 + $0xd0] sm:$0xff] %v1622
        %1655 = vst [vmem:[#allocation3 + $0xd8] sm:$0xff] %v1623
        %1656 = vst [vmem:[#allocation3 + $0xe0] sm:$0xff] %v1624
        %1657 = vst [vmem:[#allocation3 + $0xe8] sm:$0xff] %v1625
        %1658 = vst [vmem:[#allocation3 + $0xf0] sm:$0xff] %v1626
        %1659 = vst [vmem:[#allocation3 + $0xf8] sm:$0xff] %v1627
        %v1660 = vld [vmem:[%s702] sm:$0xff]
        %v1661 = vld [vmem:[%s702 + $0x8] sm:$0xff]
        %v1662 = vld [vmem:[%s702 + $0x18] sm:$0xff]
        %v1663 = vld [vmem:[%s702 + $0x20] sm:$0xff]
        %v1664 = vld [vmem:[%s702 + $0x30] sm:$0xff]
        %v1665 = vld [vmem:[%s702 + $0x38] sm:$0xff]
        %v1666 = vld [vmem:[%s702 + $0x48] sm:$0xff]
        %v1667 = vld [vmem:[%s702 + $0x50] sm:$0xff]
        %v1668 = vld [vmem:[%s702 + $0x60] sm:$0xff]
        %v1669 = vld [vmem:[%s702 + $0x68] sm:$0xff]
        %v1670 = vld [vmem:[%s702 + $0x78] sm:$0xff]
        %v1671 = vld [vmem:[%s702 + $0x80] sm:$0xff]
        %v1672 = vld [vmem:[%s702 + $0x90] sm:$0xff]
        %v1673 = vld [vmem:[%s702 + $0x98] sm:$0xff]
        %v1674 = vld [vmem:[%s702 + $0xa8] sm:$0xff]
        %v1675 = vld [vmem:[%s702 + $0xb0] sm:$0xff]
        %v1676 = vld [vmem:[%s702 + $0xc0] sm:$0xff]
        %v1677 = vld [vmem:[%s702 + $0xc8] sm:$0xff]
        %v1678 = vld [vmem:[%s702 + $0xd8] sm:$0xff]
        %v1679 = vld [vmem:[%s702 + $0xe0] sm:$0xff]
        %v1680 = vld [vmem:[%s702 + $0xf0] sm:$0xff]
        %v1681 = vld [vmem:[%s702 + $0xf8] sm:$0xff]
        %v1682 = vld [vmem:[%s702 + $0x108] sm:$0xff]
        %v1683 = vld [vmem:[%s702 + $0x110] sm:$0xff]
        %v1684 = vld [vmem:[%s702 + $0x120] sm:$0xff]
        %v1685 = vld [vmem:[%s702 + $0x128] sm:$0xff]
        %v1686 = vld [vmem:[%s702 + $0x138] sm:$0xff]
        %v1687 = vld [vmem:[%s702 + $0x140] sm:$0xff]
        %v1688 = vld [vmem:[%s702 + $0x150] sm:$0xff]
        %v1689 = vld [vmem:[%s702 + $0x158] sm:$0xff]
        %v1690 = vld [vmem:[%s702 + $0x168] sm:$0xff]
        %v1691 = vld [vmem:[%s702 + $0x170] sm:$0xff]
        %v1692 = vld [vmem:[#allocation3] sm:$0xff]
        %v1693 = vld [vmem:[#allocation3 + $0x8] sm:$0xff]
        %v1694 = vld [vmem:[#allocation3 + $0x10] sm:$0xff]
        %v1695 = vld [vmem:[#allocation3 + $0x18] sm:$0xff]
        %v1696 = vld [vmem:[#allocation3 + $0x20] sm:$0xff]
        %v1697 = vld [vmem:[#allocation3 + $0x28] sm:$0xff]
        %v1698 = vld [vmem:[#allocation3 + $0x30] sm:$0xff]
        %v1699 = vld [vmem:[#allocation3 + $0x38] sm:$0xff]
        %v1700 = vld [vmem:[#allocation3 + $0x40] sm:$0xff]
        %v1701 = vld [vmem:[#allocation3 + $0x48] sm:$0xff]
        %v1702 = vld [vmem:[#allocation3 + $0x50] sm:$0xff]
        %v1703 = vld [vmem:[#allocation3 + $0x58] sm:$0xff]
        %v1704 = vld [vmem:[#allocation3 + $0x60] sm:$0xff]
        %v1705 = vld [vmem:[#allocation3 + $0x68] sm:$0xff]
        %v1706 = vld [vmem:[#allocation3 + $0x70] sm:$0xff]
        %v1707 = vld [vmem:[#allocation3 + $0x78] sm:$0xff]
        %v1708 = vld [vmem:[#allocation3 + $0x80] sm:$0xff]
        %v1709 = vld [vmem:[#allocation3 + $0x88] sm:$0xff]
        %v1710 = vld [vmem:[#allocation3 + $0x90] sm:$0xff]
        %v1711 = vld [vmem:[#allocation3 + $0x98] sm:$0xff]
        %v1712 = vld [vmem:[#allocation3 + $0xa0] sm:$0xff]
        %v1713 = vld [vmem:[#allocation3 + $0xa8] sm:$0xff]
        %v1714 = vld [vmem:[#allocation3 + $0xb0] sm:$0xff]
        %v1715 = vld [vmem:[#allocation3 + $0xb8] sm:$0xff]
        %v1716 = vld [vmem:[#allocation3 + $0xc0] sm:$0xff]
        %v1717 = vld [vmem:[#allocation3 + $0xc8] sm:$0xff]
        %v1718 = vld [vmem:[#allocation3 + $0xd0] sm:$0xff]
        %v1719 = vld [vmem:[#allocation3 + $0xd8] sm:$0xff]
        %v1720 = vld [vmem:[#allocation3 + $0xe0] sm:$0xff]
        %v1721 = vld [vmem:[#allocation3 + $0xe8] sm:$0xff]
        %v1722 = vld [vmem:[#allocation3 + $0xf0] sm:$0xff]
        %v1723 = vld [vmem:[#allocation3 + $0xf8] sm:$0xff]
        %v1724 = vpack.c.bf16 %v1661, %v1660
        %v1725 = vpack.c.bf16 %v1663, %v1662
        %v1726 = vpack.c.bf16 %v1665, %v1664
        %v1727 = vpack.c.bf16 %v1667, %v1666
        %v1728 = vpack.c.bf16 %v1669, %v1668
        %v1729 = vpack.c.bf16 %v1671, %v1670
        %v1730 = vpack.c.bf16 %v1673, %v1672
        %v1731 = vpack.c.bf16 %v1675, %v1674
        %v1732 = vpack.c.bf16 %v1677, %v1676
        %v1733 = vpack.c.bf16 %v1679, %v1678
        %v1734 = vpack.c.bf16 %v1681, %v1680
        %v1735 = vpack.c.bf16 %v1683, %v1682
        %v1736 = vpack.c.bf16 %v1685, %v1684
        %v1737 = vpack.c.bf16 %v1687, %v1686
        %v1738 = vpack.c.bf16 %v1689, %v1688
        %v1739 = vpack.c.bf16 %v1691, %v1690
        %s1740 = scalar_lea.vmem %s3, 192
        %v1741 = vld [vmem:[%s1740] sm:$0xf]
        %v1742 = vld [vmem:[%s1740 + $0x4] sm:$0xf]
        %v1743 = vld [vmem:[%s1740 + $0x8] sm:$0xf]
        %v1744 = vld [vmem:[%s1740 + $0xc] sm:$0xf]
        %v1745 = vld [vmem:[%s1740 + $0x10] sm:$0xf]
        %v1746 = vld [vmem:[%s1740 + $0x14] sm:$0xf]
        %v1747 = vld [vmem:[%s1740 + $0x18] sm:$0xf]
        %v1748 = vld [vmem:[%s1740 + $0x1c] sm:$0xf]
        %v1749 = vld [vmem:[%s1740 + $0x20] sm:$0xf]
        %v1750 = vld [vmem:[%s1740 + $0x24] sm:$0xf]
        %v1751 = vld [vmem:[%s1740 + $0x28] sm:$0xf]
        %v1752 = vld [vmem:[%s1740 + $0x2c] sm:$0xf]
        %v1753 = vld [vmem:[%s1740 + $0x30] sm:$0xf]
        %v1754 = vld [vmem:[%s1740 + $0x34] sm:$0xf]
        %v1755 = vld [vmem:[%s1740 + $0x38] sm:$0xf]
        %v1756 = vld [vmem:[%s1740 + $0x3c] sm:$0xf]
        %v1773 = vunpack.c.l.b16 %v1741
        %v1774 = vunpack.c.l.b16 %v1742
        %v1775 = vunpack.c.l.b16 %v1743
        %v1776 = vunpack.c.l.b16 %v1744
        %v1777 = vunpack.c.l.b16 %v1745
        %v1778 = vunpack.c.l.b16 %v1746
        %v1779 = vunpack.c.l.b16 %v1747
        %v1780 = vunpack.c.l.b16 %v1748
        %v1781 = vunpack.c.l.b16 %v1749
        %v1782 = vunpack.c.l.b16 %v1750
        %v1783 = vunpack.c.l.b16 %v1751
        %v1784 = vunpack.c.l.b16 %v1752
        %v1785 = vunpack.c.l.b16 %v1753
        %v1786 = vunpack.c.l.b16 %v1754
        %v1787 = vunpack.c.l.b16 %v1755
        %v1788 = vunpack.c.l.b16 %v1756
        %v1789 = vpack.c.b16 %v1774, %v1773
        %v1790 = vpack.c.b16 %v1776, %v1775
        %v1791 = vpack.c.b16 %v1778, %v1777
        %v1792 = vpack.c.b16 %v1780, %v1779
        %v1793 = vpack.c.b16 %v1782, %v1781
        %v1794 = vpack.c.b16 %v1784, %v1783
        %v1795 = vpack.c.b16 %v1786, %v1785
        %v1796 = vpack.c.b16 %v1788, %v1787
        %1805 = vmatpush.bf16.msra.mxu0 %v1796
        %1806 = vmatpush.bf16.msra.mxu0 %v1795
        %1807 = vmatpush.bf16.msra.mxu0 %v1794
        %1808 = vmatpush.bf16.msra.mxu0 %v1793
        %1809 = vmatpush.bf16.msra.mxu0 %v1792
        %1810 = vmatpush.bf16.msra.mxu0 %v1791
        %1811 = vmatpush.bf16.msra.mxu0 %v1790
        %1812 = vmatpush.bf16.msra.mxu0 %v1789
        %1813 = vmatmul.bf16.gmra.mxu0 %v1724
        %v1814 = vpop.f32.mrf.mxu0
        %v1815 = vadd.f32 0.0, %v1814
        %v1816 = vpop.f32.mrf.mxu0
        %v1817 = vadd.f32 0.0, %v1816
        %1818 = vmatmul.bf16.gmra.mxu0 %v1725
        %v1819 = vpop.f32.mrf.mxu0
        %v1820 = vadd.f32 0.0, %v1819
        %v1821 = vpop.f32.mrf.mxu0
        %v1822 = vadd.f32 0.0, %v1821
        %1823 = vmatmul.bf16.gmra.mxu0 %v1726
        %v1824 = vpop.f32.mrf.mxu0
        %v1825 = vadd.f32 0.0, %v1824
        %v1826 = vpop.f32.mrf.mxu0
        %v1827 = vadd.f32 0.0, %v1826
        %1828 = vmatmul.bf16.gmra.mxu0 %v1727
        %v1829 = vpop.f32.mrf.mxu0
        %v1830 = vadd.f32 0.0, %v1829
        %v1831 = vpop.f32.mrf.mxu0
        %v1832 = vadd.f32 0.0, %v1831
        %1833 = vmatmul.bf16.gmra.mxu0 %v1728
        %v1834 = vpop.f32.mrf.mxu0
        %v1835 = vadd.f32 0.0, %v1834
        %v1836 = vpop.f32.mrf.mxu0
        %v1837 = vadd.f32 0.0, %v1836
        %1838 = vmatmul.bf16.gmra.mxu0 %v1729
        %v1839 = vpop.f32.mrf.mxu0
        %v1840 = vadd.f32 0.0, %v1839
        %v1841 = vpop.f32.mrf.mxu0
        %v1842 = vadd.f32 0.0, %v1841
        %1843 = vmatmul.bf16.gmra.mxu0 %v1730
        %v1844 = vpop.f32.mrf.mxu0
        %v1845 = vadd.f32 0.0, %v1844
        %v1846 = vpop.f32.mrf.mxu0
        %v1847 = vadd.f32 0.0, %v1846
        %1848 = vmatmul.bf16.gmra.mxu0 %v1731
        %v1849 = vpop.f32.mrf.mxu0
        %v1850 = vadd.f32 0.0, %v1849
        %v1851 = vpop.f32.mrf.mxu0
        %v1852 = vadd.f32 0.0, %v1851
        %1853 = vmatmul.bf16.gmra.mxu0 %v1732
        %v1854 = vpop.f32.mrf.mxu0
        %v1855 = vadd.f32 0.0, %v1854
        %v1856 = vpop.f32.mrf.mxu0
        %v1857 = vadd.f32 0.0, %v1856
        %1858 = vmatmul.bf16.gmra.mxu0 %v1733
        %v1859 = vpop.f32.mrf.mxu0
        %v1860 = vadd.f32 0.0, %v1859
        %v1861 = vpop.f32.mrf.mxu0
        %v1862 = vadd.f32 0.0, %v1861
        %1863 = vmatmul.bf16.gmra.mxu0 %v1734
        %v1864 = vpop.f32.mrf.mxu0
        %v1865 = vadd.f32 0.0, %v1864
        %v1866 = vpop.f32.mrf.mxu0
        %v1867 = vadd.f32 0.0, %v1866
        %1868 = vmatmul.bf16.gmra.mxu0 %v1735
        %v1869 = vpop.f32.mrf.mxu0
        %v1870 = vadd.f32 0.0, %v1869
        %v1871 = vpop.f32.mrf.mxu0
        %v1872 = vadd.f32 0.0, %v1871
        %1873 = vmatmul.bf16.gmra.mxu0 %v1736
        %v1874 = vpop.f32.mrf.mxu0
        %v1875 = vadd.f32 0.0, %v1874
        %v1876 = vpop.f32.mrf.mxu0
        %v1877 = vadd.f32 0.0, %v1876
        %1878 = vmatmul.bf16.gmra.mxu0 %v1737
        %v1879 = vpop.f32.mrf.mxu0
        %v1880 = vadd.f32 0.0, %v1879
        %v1881 = vpop.f32.mrf.mxu0
        %v1882 = vadd.f32 0.0, %v1881
        %1883 = vmatmul.bf16.gmra.mxu0 %v1738
        %v1884 = vpop.f32.mrf.mxu0
        %v1885 = vadd.f32 0.0, %v1884
        %v1886 = vpop.f32.mrf.mxu0
        %v1887 = vadd.f32 0.0, %v1886
        %1888 = vmatmul.bf16.gmra.mxu0 %v1739
        %v1889 = vpop.f32.mrf.mxu0
        %v1890 = vadd.f32 0.0, %v1889
        %v1891 = vpop.f32.mrf.mxu0
        %v1892 = vadd.f32 0.0, %v1891
        %1893 = vdwg.mxu0
        %v1894 = vadd.f32 %v1692, %v1815
        %v1895 = vadd.f32 %v1693, %v1817
        %v1896 = vadd.f32 %v1694, %v1820
        %v1897 = vadd.f32 %v1695, %v1822
        %v1898 = vadd.f32 %v1696, %v1825
        %v1899 = vadd.f32 %v1697, %v1827
        %v1900 = vadd.f32 %v1698, %v1830
        %v1901 = vadd.f32 %v1699, %v1832
        %v1902 = vadd.f32 %v1700, %v1835
        %v1903 = vadd.f32 %v1701, %v1837
        %v1904 = vadd.f32 %v1702, %v1840
        %v1905 = vadd.f32 %v1703, %v1842
        %v1906 = vadd.f32 %v1704, %v1845
        %v1907 = vadd.f32 %v1705, %v1847
        %v1908 = vadd.f32 %v1706, %v1850
        %v1909 = vadd.f32 %v1707, %v1852
        %v1910 = vadd.f32 %v1708, %v1855
        %v1911 = vadd.f32 %v1709, %v1857
        %v1912 = vadd.f32 %v1710, %v1860
        %v1913 = vadd.f32 %v1711, %v1862
        %v1914 = vadd.f32 %v1712, %v1865
        %v1915 = vadd.f32 %v1713, %v1867
        %v1916 = vadd.f32 %v1714, %v1870
        %v1917 = vadd.f32 %v1715, %v1872
        %v1918 = vadd.f32 %v1716, %v1875
        %v1919 = vadd.f32 %v1717, %v1877
        %v1920 = vadd.f32 %v1718, %v1880
        %v1921 = vadd.f32 %v1719, %v1882
        %v1922 = vadd.f32 %v1720, %v1885
        %v1923 = vadd.f32 %v1721, %v1887
        %v1924 = vadd.f32 %v1722, %v1890
        %v1925 = vadd.f32 %v1723, %v1892
        %1926 = vst [vmem:[#allocation3] sm:$0xff] %v1894
        %1927 = vst [vmem:[#allocation3 + $0x8] sm:$0xff] %v1895
        %1928 = vst [vmem:[#allocation3 + $0x10] sm:$0xff] %v1896
        %1929 = vst [vmem:[#allocation3 + $0x18] sm:$0xff] %v1897
        %1930 = vst [vmem:[#allocation3 + $0x20] sm:$0xff] %v1898
        %1931 = vst [vmem:[#allocation3 + $0x28] sm:$0xff] %v1899
        %1932 = vst [vmem:[#allocation3 + $0x30] sm:$0xff] %v1900
        %1933 = vst [vmem:[#allocation3 + $0x38] sm:$0xff] %v1901
        %1934 = vst [vmem:[#allocation3 + $0x40] sm:$0xff] %v1902
        %1935 = vst [vmem:[#allocation3 + $0x48] sm:$0xff] %v1903
        %1936 = vst [vmem:[#allocation3 + $0x50] sm:$0xff] %v1904
        %1937 = vst [vmem:[#allocation3 + $0x58] sm:$0xff] %v1905
        %1938 = vst [vmem:[#allocation3 + $0x60] sm:$0xff] %v1906
        %1939 = vst [vmem:[#allocation3 + $0x68] sm:$0xff] %v1907
        %1940 = vst [vmem:[#allocation3 + $0x70] sm:$0xff] %v1908
        %1941 = vst [vmem:[#allocation3 + $0x78] sm:$0xff] %v1909
        %1942 = vst [vmem:[#allocation3 + $0x80] sm:$0xff] %v1910
        %1943 = vst [vmem:[#allocation3 + $0x88] sm:$0xff] %v1911
        %1944 = vst [vmem:[#allocation3 + $0x90] sm:$0xff] %v1912
        %1945 = vst [vmem:[#allocation3 + $0x98] sm:$0xff] %v1913
        %1946 = vst [vmem:[#allocation3 + $0xa0] sm:$0xff] %v1914
        %1947 = vst [vmem:[#allocation3 + $0xa8] sm:$0xff] %v1915
        %1948 = vst [vmem:[#allocation3 + $0xb0] sm:$0xff] %v1916
        %1949 = vst [vmem:[#allocation3 + $0xb8] sm:$0xff] %v1917
        %1950 = vst [vmem:[#allocation3 + $0xc0] sm:$0xff] %v1918
        %1951 = vst [vmem:[#allocation3 + $0xc8] sm:$0xff] %v1919
        %1952 = vst [vmem:[#allocation3 + $0xd0] sm:$0xff] %v1920
        %1953 = vst [vmem:[#allocation3 + $0xd8] sm:$0xff] %v1921
        %1954 = vst [vmem:[#allocation3 + $0xe0] sm:$0xff] %v1922
        %1955 = vst [vmem:[#allocation3 + $0xe8] sm:$0xff] %v1923
        %1956 = vst [vmem:[#allocation3 + $0xf0] sm:$0xff] %v1924
        %1957 = vst [vmem:[#allocation3 + $0xf8] sm:$0xff] %v1925
        %v1958 = vld [vmem:[%s702 + $0x1] sm:$0xff]
        %v1959 = vld [vmem:[%s702 + $0x9] sm:$0xff]
        %v1960 = vld [vmem:[%s702 + $0x19] sm:$0xff]
        %v1961 = vld [vmem:[%s702 + $0x21] sm:$0xff]
        %v1962 = vld [vmem:[%s702 + $0x31] sm:$0xff]
        %v1963 = vld [vmem:[%s702 + $0x39] sm:$0xff]
        %v1964 = vld [vmem:[%s702 + $0x49] sm:$0xff]
        %v1965 = vld [vmem:[%s702 + $0x51] sm:$0xff]
        %v1966 = vld [vmem:[%s702 + $0x61] sm:$0xff]
        %v1967 = vld [vmem:[%s702 + $0x69] sm:$0xff]
        %v1968 = vld [vmem:[%s702 + $0x79] sm:$0xff]
        %v1969 = vld [vmem:[%s702 + $0x81] sm:$0xff]
        %v1970 = vld [vmem:[%s702 + $0x91] sm:$0xff]
        %v1971 = vld [vmem:[%s702 + $0x99] sm:$0xff]
        %v1972 = vld [vmem:[%s702 + $0xa9] sm:$0xff]
        %v1973 = vld [vmem:[%s702 + $0xb1] sm:$0xff]
        %v1974 = vld [vmem:[%s702 + $0xc1] sm:$0xff]
        %v1975 = vld [vmem:[%s702 + $0xc9] sm:$0xff]
        %v1976 = vld [vmem:[%s702 + $0xd9] sm:$0xff]
        %v1977 = vld [vmem:[%s702 + $0xe1] sm:$0xff]
        %v1978 = vld [vmem:[%s702 + $0xf1] sm:$0xff]
        %v1979 = vld [vmem:[%s702 + $0xf9] sm:$0xff]
        %v1980 = vld [vmem:[%s702 + $0x109] sm:$0xff]
        %v1981 = vld [vmem:[%s702 + $0x111] sm:$0xff]
        %v1982 = vld [vmem:[%s702 + $0x121] sm:$0xff]
        %v1983 = vld [vmem:[%s702 + $0x129] sm:$0xff]
        %v1984 = vld [vmem:[%s702 + $0x139] sm:$0xff]
        %v1985 = vld [vmem:[%s702 + $0x141] sm:$0xff]
        %v1986 = vld [vmem:[%s702 + $0x151] sm:$0xff]
        %v1987 = vld [vmem:[%s702 + $0x159] sm:$0xff]
        %v1988 = vld [vmem:[%s702 + $0x169] sm:$0xff]
        %v1989 = vld [vmem:[%s702 + $0x171] sm:$0xff]
        %v1990 = vld [vmem:[#allocation3] sm:$0xff]
        %v1991 = vld [vmem:[#allocation3 + $0x8] sm:$0xff]
        %v1992 = vld [vmem:[#allocation3 + $0x10] sm:$0xff]
        %v1993 = vld [vmem:[#allocation3 + $0x18] sm:$0xff]
        %v1994 = vld [vmem:[#allocation3 + $0x20] sm:$0xff]
        %v1995 = vld [vmem:[#allocation3 + $0x28] sm:$0xff]
        %v1996 = vld [vmem:[#allocation3 + $0x30] sm:$0xff]
        %v1997 = vld [vmem:[#allocation3 + $0x38] sm:$0xff]
        %v1998 = vld [vmem:[#allocation3 + $0x40] sm:$0xff]
        %v1999 = vld [vmem:[#allocation3 + $0x48] sm:$0xff]
        %v2000 = vld [vmem:[#allocation3 + $0x50] sm:$0xff]
        %v2001 = vld [vmem:[#allocation3 + $0x58] sm:$0xff]
        %v2002 = vld [vmem:[#allocation3 + $0x60] sm:$0xff]
        %v2003 = vld [vmem:[#allocation3 + $0x68] sm:$0xff]
        %v2004 = vld [vmem:[#allocation3 + $0x70] sm:$0xff]
        %v2005 = vld [vmem:[#allocation3 + $0x78] sm:$0xff]
        %v2006 = vld [vmem:[#allocation3 + $0x80] sm:$0xff]
        %v2007 = vld [vmem:[#allocation3 + $0x88] sm:$0xff]
        %v2008 = vld [vmem:[#allocation3 + $0x90] sm:$0xff]
        %v2009 = vld [vmem:[#allocation3 + $0x98] sm:$0xff]
        %v2010 = vld [vmem:[#allocation3 + $0xa0] sm:$0xff]
        %v2011 = vld [vmem:[#allocation3 + $0xa8] sm:$0xff]
        %v2012 = vld [vmem:[#allocation3 + $0xb0] sm:$0xff]
        %v2013 = vld [vmem:[#allocation3 + $0xb8] sm:$0xff]
        %v2014 = vld [vmem:[#allocation3 + $0xc0] sm:$0xff]
        %v2015 = vld [vmem:[#allocation3 + $0xc8] sm:$0xff]
        %v2016 = vld [vmem:[#allocation3 + $0xd0] sm:$0xff]
        %v2017 = vld [vmem:[#allocation3 + $0xd8] sm:$0xff]
        %v2018 = vld [vmem:[#allocation3 + $0xe0] sm:$0xff]
        %v2019 = vld [vmem:[#allocation3 + $0xe8] sm:$0xff]
        %v2020 = vld [vmem:[#allocation3 + $0xf0] sm:$0xff]
        %v2021 = vld [vmem:[#allocation3 + $0xf8] sm:$0xff]
        %v2022 = vpack.c.bf16 %v1959, %v1958
        %v2023 = vpack.c.bf16 %v1961, %v1960
        %v2024 = vpack.c.bf16 %v1963, %v1962
        %v2025 = vpack.c.bf16 %v1965, %v1964
        %v2026 = vpack.c.bf16 %v1967, %v1966
        %v2027 = vpack.c.bf16 %v1969, %v1968
        %v2028 = vpack.c.bf16 %v1971, %v1970
        %v2029 = vpack.c.bf16 %v1973, %v1972
        %v2030 = vpack.c.bf16 %v1975, %v1974
        %v2031 = vpack.c.bf16 %v1977, %v1976
        %v2032 = vpack.c.bf16 %v1979, %v1978
        %v2033 = vpack.c.bf16 %v1981, %v1980
        %v2034 = vpack.c.bf16 %v1983, %v1982
        %v2035 = vpack.c.bf16 %v1985, %v1984
        %v2036 = vpack.c.bf16 %v1987, %v1986
        %v2037 = vpack.c.bf16 %v1989, %v1988
        %s2038 = scalar_lea.vmem %s3, 256
        %v2039 = vld [vmem:[%s2038] sm:$0xf]
        %v2040 = vld [vmem:[%s2038 + $0x4] sm:$0xf]
        %v2041 = vld [vmem:[%s2038 + $0x8] sm:$0xf]
        %v2042 = vld [vmem:[%s2038 + $0xc] sm:$0xf]
        %v2043 = vld [vmem:[%s2038 + $0x10] sm:$0xf]
        %v2044 = vld [vmem:[%s2038 + $0x14] sm:$0xf]
        %v2045 = vld [vmem:[%s2038 + $0x18] sm:$0xf]
        %v2046 = vld [vmem:[%s2038 + $0x1c] sm:$0xf]
        %v2047 = vld [vmem:[%s2038 + $0x20] sm:$0xf]
        %v2048 = vld [vmem:[%s2038 + $0x24] sm:$0xf]
        %v2049 = vld [vmem:[%s2038 + $0x28] sm:$0xf]
        %v2050 = vld [vmem:[%s2038 + $0x2c] sm:$0xf]
        %v2051 = vld [vmem:[%s2038 + $0x30] sm:$0xf]
        %v2052 = vld [vmem:[%s2038 + $0x34] sm:$0xf]
        %v2053 = vld [vmem:[%s2038 + $0x38] sm:$0xf]
        %v2054 = vld [vmem:[%s2038 + $0x3c] sm:$0xf]
        %v2071 = vunpack.c.l.b16 %v2039
        %v2072 = vunpack.c.l.b16 %v2040
        %v2073 = vunpack.c.l.b16 %v2041
        %v2074 = vunpack.c.l.b16 %v2042
        %v2075 = vunpack.c.l.b16 %v2043
        %v2076 = vunpack.c.l.b16 %v2044
        %v2077 = vunpack.c.l.b16 %v2045
        %v2078 = vunpack.c.l.b16 %v2046
        %v2079 = vunpack.c.l.b16 %v2047
        %v2080 = vunpack.c.l.b16 %v2048
        %v2081 = vunpack.c.l.b16 %v2049
        %v2082 = vunpack.c.l.b16 %v2050
        %v2083 = vunpack.c.l.b16 %v2051
        %v2084 = vunpack.c.l.b16 %v2052
        %v2085 = vunpack.c.l.b16 %v2053
        %v2086 = vunpack.c.l.b16 %v2054
        %v2087 = vpack.c.b16 %v2072, %v2071
        %v2088 = vpack.c.b16 %v2074, %v2073
        %v2089 = vpack.c.b16 %v2076, %v2075
        %v2090 = vpack.c.b16 %v2078, %v2077
        %v2091 = vpack.c.b16 %v2080, %v2079
        %v2092 = vpack.c.b16 %v2082, %v2081
        %v2093 = vpack.c.b16 %v2084, %v2083
        %v2094 = vpack.c.b16 %v2086, %v2085
        %2103 = vmatpush.bf16.msra.mxu0 %v2094
        %2104 = vmatpush.bf16.msra.mxu0 %v2093
        %2105 = vmatpush.bf16.msra.mxu0 %v2092
        %2106 = vmatpush.bf16.msra.mxu0 %v2091
        %2107 = vmatpush.bf16.msra.mxu0 %v2090
        %2108 = vmatpush.bf16.msra.mxu0 %v2089
        %2109 = vmatpush.bf16.msra.mxu0 %v2088
        %2110 = vmatpush.bf16.msra.mxu0 %v2087
        %2111 = vmatmul.bf16.gmra.mxu0 %v2022
        %v2112 = vpop.f32.mrf.mxu0
        %v2113 = vadd.f32 0.0, %v2112
        %v2114 = vpop.f32.mrf.mxu0
        %v2115 = vadd.f32 0.0, %v2114
        %2116 = vmatmul.bf16.gmra.mxu0 %v2023
        %v2117 = vpop.f32.mrf.mxu0
        %v2118 = vadd.f32 0.0, %v2117
        %v2119 = vpop.f32.mrf.mxu0
        %v2120 = vadd.f32 0.0, %v2119
        %2121 = vmatmul.bf16.gmra.mxu0 %v2024
        %v2122 = vpop.f32.mrf.mxu0
        %v2123 = vadd.f32 0.0, %v2122
        %v2124 = vpop.f32.mrf.mxu0
        %v2125 = vadd.f32 0.0, %v2124
        %2126 = vmatmul.bf16.gmra.mxu0 %v2025
        %v2127 = vpop.f32.mrf.mxu0
        %v2128 = vadd.f32 0.0, %v2127
        %v2129 = vpop.f32.mrf.mxu0
        %v2130 = vadd.f32 0.0, %v2129
        %2131 = vmatmul.bf16.gmra.mxu0 %v2026
        %v2132 = vpop.f32.mrf.mxu0
        %v2133 = vadd.f32 0.0, %v2132
        %v2134 = vpop.f32.mrf.mxu0
        %v2135 = vadd.f32 0.0, %v2134
        %2136 = vmatmul.bf16.gmra.mxu0 %v2027
        %v2137 = vpop.f32.mrf.mxu0
        %v2138 = vadd.f32 0.0, %v2137
        %v2139 = vpop.f32.mrf.mxu0
        %v2140 = vadd.f32 0.0, %v2139
        %2141 = vmatmul.bf16.gmra.mxu0 %v2028
        %v2142 = vpop.f32.mrf.mxu0
        %v2143 = vadd.f32 0.0, %v2142
        %v2144 = vpop.f32.mrf.mxu0
        %v2145 = vadd.f32 0.0, %v2144
        %2146 = vmatmul.bf16.gmra.mxu0 %v2029
        %v2147 = vpop.f32.mrf.mxu0
        %v2148 = vadd.f32 0.0, %v2147
        %v2149 = vpop.f32.mrf.mxu0
        %v2150 = vadd.f32 0.0, %v2149
        %2151 = vmatmul.bf16.gmra.mxu0 %v2030
        %v2152 = vpop.f32.mrf.mxu0
        %v2153 = vadd.f32 0.0, %v2152
        %v2154 = vpop.f32.mrf.mxu0
        %v2155 = vadd.f32 0.0, %v2154
        %2156 = vmatmul.bf16.gmra.mxu0 %v2031
        %v2157 = vpop.f32.mrf.mxu0
        %v2158 = vadd.f32 0.0, %v2157
        %v2159 = vpop.f32.mrf.mxu0
        %v2160 = vadd.f32 0.0, %v2159
        %2161 = vmatmul.bf16.gmra.mxu0 %v2032
        %v2162 = vpop.f32.mrf.mxu0
        %v2163 = vadd.f32 0.0, %v2162
        %v2164 = vpop.f32.mrf.mxu0
        %v2165 = vadd.f32 0.0, %v2164
        %2166 = vmatmul.bf16.gmra.mxu0 %v2033
        %v2167 = vpop.f32.mrf.mxu0
        %v2168 = vadd.f32 0.0, %v2167
        %v2169 = vpop.f32.mrf.mxu0
        %v2170 = vadd.f32 0.0, %v2169
        %2171 = vmatmul.bf16.gmra.mxu0 %v2034
        %v2172 = vpop.f32.mrf.mxu0
        %v2173 = vadd.f32 0.0, %v2172
        %v2174 = vpop.f32.mrf.mxu0
        %v2175 = vadd.f32 0.0, %v2174
        %2176 = vmatmul.bf16.gmra.mxu0 %v2035
        %v2177 = vpop.f32.mrf.mxu0
        %v2178 = vadd.f32 0.0, %v2177
        %v2179 = vpop.f32.mrf.mxu0
        %v2180 = vadd.f32 0.0, %v2179
        %2181 = vmatmul.bf16.gmra.mxu0 %v2036
        %v2182 = vpop.f32.mrf.mxu0
        %v2183 = vadd.f32 0.0, %v2182
        %v2184 = vpop.f32.mrf.mxu0
        %v2185 = vadd.f32 0.0, %v2184
        %2186 = vmatmul.bf16.gmra.mxu0 %v2037
        %v2187 = vpop.f32.mrf.mxu0
        %v2188 = vadd.f32 0.0, %v2187
        %v2189 = vpop.f32.mrf.mxu0
        %v2190 = vadd.f32 0.0, %v2189
        %2191 = vdwg.mxu0
        %v2192 = vadd.f32 %v1990, %v2113
        %v2193 = vadd.f32 %v1991, %v2115
        %v2194 = vadd.f32 %v1992, %v2118
        %v2195 = vadd.f32 %v1993, %v2120
        %v2196 = vadd.f32 %v1994, %v2123
        %v2197 = vadd.f32 %v1995, %v2125
        %v2198 = vadd.f32 %v1996, %v2128
        %v2199 = vadd.f32 %v1997, %v2130
        %v2200 = vadd.f32 %v1998, %v2133
        %v2201 = vadd.f32 %v1999, %v2135
        %v2202 = vadd.f32 %v2000, %v2138
        %v2203 = vadd.f32 %v2001, %v2140
        %v2204 = vadd.f32 %v2002, %v2143
        %v2205 = vadd.f32 %v2003, %v2145
        %v2206 = vadd.f32 %v2004, %v2148
        %v2207 = vadd.f32 %v2005, %v2150
        %v2208 = vadd.f32 %v2006, %v2153
        %v2209 = vadd.f32 %v2007, %v2155
        %v2210 = vadd.f32 %v2008, %v2158
        %v2211 = vadd.f32 %v2009, %v2160
        %v2212 = vadd.f32 %v2010, %v2163
        %v2213 = vadd.f32 %v2011, %v2165
        %v2214 = vadd.f32 %v2012, %v2168
        %v2215 = vadd.f32 %v2013, %v2170
        %v2216 = vadd.f32 %v2014, %v2173
        %v2217 = vadd.f32 %v2015, %v2175
        %v2218 = vadd.f32 %v2016, %v2178
        %v2219 = vadd.f32 %v2017, %v2180
        %v2220 = vadd.f32 %v2018, %v2183
        %v2221 = vadd.f32 %v2019, %v2185
        %v2222 = vadd.f32 %v2020, %v2188
        %v2223 = vadd.f32 %v2021, %v2190
        %2224 = vst [vmem:[#allocation3] sm:$0xff] %v2192
        %2225 = vst [vmem:[#allocation3 + $0x8] sm:$0xff] %v2193
        %2226 = vst [vmem:[#allocation3 + $0x10] sm:$0xff] %v2194
        %2227 = vst [vmem:[#allocation3 + $0x18] sm:$0xff] %v2195
        %2228 = vst [vmem:[#allocation3 + $0x20] sm:$0xff] %v2196
        %2229 = vst [vmem:[#allocation3 + $0x28] sm:$0xff] %v2197
        %2230 = vst [vmem:[#allocation3 + $0x30] sm:$0xff] %v2198
        %2231 = vst [vmem:[#allocation3 + $0x38] sm:$0xff] %v2199
        %2232 = vst [vmem:[#allocation3 + $0x40] sm:$0xff] %v2200
        %2233 = vst [vmem:[#allocation3 + $0x48] sm:$0xff] %v2201
        %2234 = vst [vmem:[#allocation3 + $0x50] sm:$0xff] %v2202
        %2235 = vst [vmem:[#allocation3 + $0x58] sm:$0xff] %v2203
        %2236 = vst [vmem:[#allocation3 + $0x60] sm:$0xff] %v2204
        %2237 = vst [vmem:[#allocation3 + $0x68] sm:$0xff] %v2205
        %2238 = vst [vmem:[#allocation3 + $0x70] sm:$0xff] %v2206
        %2239 = vst [vmem:[#allocation3 + $0x78] sm:$0xff] %v2207
        %2240 = vst [vmem:[#allocation3 + $0x80] sm:$0xff] %v2208
        %2241 = vst [vmem:[#allocation3 + $0x88] sm:$0xff] %v2209
        %2242 = vst [vmem:[#allocation3 + $0x90] sm:$0xff] %v2210
        %2243 = vst [vmem:[#allocation3 + $0x98] sm:$0xff] %v2211
        %2244 = vst [vmem:[#allocation3 + $0xa0] sm:$0xff] %v2212
        %2245 = vst [vmem:[#allocation3 + $0xa8] sm:$0xff] %v2213
        %2246 = vst [vmem:[#allocation3 + $0xb0] sm:$0xff] %v2214
        %2247 = vst [vmem:[#allocation3 + $0xb8] sm:$0xff] %v2215
        %2248 = vst [vmem:[#allocation3 + $0xc0] sm:$0xff] %v2216
        %2249 = vst [vmem:[#allocation3 + $0xc8] sm:$0xff] %v2217
        %2250 = vst [vmem:[#allocation3 + $0xd0] sm:$0xff] %v2218
        %2251 = vst [vmem:[#allocation3 + $0xd8] sm:$0xff] %v2219
        %2252 = vst [vmem:[#allocation3 + $0xe0] sm:$0xff] %v2220
        %2253 = vst [vmem:[#allocation3 + $0xe8] sm:$0xff] %v2221
        %2254 = vst [vmem:[#allocation3 + $0xf0] sm:$0xff] %v2222
        %2255 = vst [vmem:[#allocation3 + $0xf8] sm:$0xff] %v2223
        %v2256 = vld [vmem:[%s702 + $0x2] sm:$0xff]
        %v2257 = vld [vmem:[%s702 + $0xa] sm:$0xff]
        %v2258 = vld [vmem:[%s702 + $0x1a] sm:$0xff]
        %v2259 = vld [vmem:[%s702 + $0x22] sm:$0xff]
        %v2260 = vld [vmem:[%s702 + $0x32] sm:$0xff]
        %v2261 = vld [vmem:[%s702 + $0x3a] sm:$0xff]
        %v2262 = vld [vmem:[%s702 + $0x4a] sm:$0xff]
        %v2263 = vld [vmem:[%s702 + $0x52] sm:$0xff]
        %v2264 = vld [vmem:[%s702 + $0x62] sm:$0xff]
        %v2265 = vld [vmem:[%s702 + $0x6a] sm:$0xff]
        %v2266 = vld [vmem:[%s702 + $0x7a] sm:$0xff]
        %v2267 = vld [vmem:[%s702 + $0x82] sm:$0xff]
        %v2268 = vld [vmem:[%s702 + $0x92] sm:$0xff]
        %v2269 = vld [vmem:[%s702 + $0x9a] sm:$0xff]
        %v2270 = vld [vmem:[%s702 + $0xaa] sm:$0xff]
        %v2271 = vld [vmem:[%s702 + $0xb2] sm:$0xff]
        %v2272 = vld [vmem:[%s702 + $0xc2] sm:$0xff]
        %v2273 = vld [vmem:[%s702 + $0xca] sm:$0xff]
        %v2274 = vld [vmem:[%s702 + $0xda] sm:$0xff]
        %v2275 = vld [vmem:[%s702 + $0xe2] sm:$0xff]
        %v2276 = vld [vmem:[%s702 + $0xf2] sm:$0xff]
        %v2277 = vld [vmem:[%s702 + $0xfa] sm:$0xff]
        %v2278 = vld [vmem:[%s702 + $0x10a] sm:$0xff]
        %v2279 = vld [vmem:[%s702 + $0x112] sm:$0xff]
        %v2280 = vld [vmem:[%s702 + $0x122] sm:$0xff]
        %v2281 = vld [vmem:[%s702 + $0x12a] sm:$0xff]
        %v2282 = vld [vmem:[%s702 + $0x13a] sm:$0xff]
        %v2283 = vld [vmem:[%s702 + $0x142] sm:$0xff]
        %v2284 = vld [vmem:[%s702 + $0x152] sm:$0xff]
        %v2285 = vld [vmem:[%s702 + $0x15a] sm:$0xff]
        %v2286 = vld [vmem:[%s702 + $0x16a] sm:$0xff]
        %v2287 = vld [vmem:[%s702 + $0x172] sm:$0xff]
        %v2288 = vld [vmem:[#allocation3] sm:$0xff]
        %v2289 = vld [vmem:[#allocation3 + $0x8] sm:$0xff]
        %v2290 = vld [vmem:[#allocation3 + $0x10] sm:$0xff]
        %v2291 = vld [vmem:[#allocation3 + $0x18] sm:$0xff]
        %v2292 = vld [vmem:[#allocation3 + $0x20] sm:$0xff]
        %v2293 = vld [vmem:[#allocation3 + $0x28] sm:$0xff]
        %v2294 = vld [vmem:[#allocation3 + $0x30] sm:$0xff]
        %v2295 = vld [vmem:[#allocation3 + $0x38] sm:$0xff]
        %v2296 = vld [vmem:[#allocation3 + $0x40] sm:$0xff]
        %v2297 = vld [vmem:[#allocation3 + $0x48] sm:$0xff]
        %v2298 = vld [vmem:[#allocation3 + $0x50] sm:$0xff]
        %v2299 = vld [vmem:[#allocation3 + $0x58] sm:$0xff]
        %v2300 = vld [vmem:[#allocation3 + $0x60] sm:$0xff]
        %v2301 = vld [vmem:[#allocation3 + $0x68] sm:$0xff]
        %v2302 = vld [vmem:[#allocation3 + $0x70] sm:$0xff]
        %v2303 = vld [vmem:[#allocation3 + $0x78] sm:$0xff]
        %v2304 = vld [vmem:[#allocation3 + $0x80] sm:$0xff]
        %v2305 = vld [vmem:[#allocation3 + $0x88] sm:$0xff]
        %v2306 = vld [vmem:[#allocation3 + $0x90] sm:$0xff]
        %v2307 = vld [vmem:[#allocation3 + $0x98] sm:$0xff]
        %v2308 = vld [vmem:[#allocation3 + $0xa0] sm:$0xff]
        %v2309 = vld [vmem:[#allocation3 + $0xa8] sm:$0xff]
        %v2310 = vld [vmem:[#allocation3 + $0xb0] sm:$0xff]
        %v2311 = vld [vmem:[#allocation3 + $0xb8] sm:$0xff]
        %v2312 = vld [vmem:[#allocation3 + $0xc0] sm:$0xff]
        %v2313 = vld [vmem:[#allocation3 + $0xc8] sm:$0xff]
        %v2314 = vld [vmem:[#allocation3 + $0xd0] sm:$0xff]
        %v2315 = vld [vmem:[#allocation3 + $0xd8] sm:$0xff]
        %v2316 = vld [vmem:[#allocation3 + $0xe0] sm:$0xff]
        %v2317 = vld [vmem:[#allocation3 + $0xe8] sm:$0xff]
        %v2318 = vld [vmem:[#allocation3 + $0xf0] sm:$0xff]
        %v2319 = vld [vmem:[#allocation3 + $0xf8] sm:$0xff]
        %v2320 = vpack.c.bf16 %v2257, %v2256
        %v2321 = vpack.c.bf16 %v2259, %v2258
        %v2322 = vpack.c.bf16 %v2261, %v2260
        %v2323 = vpack.c.bf16 %v2263, %v2262
        %v2324 = vpack.c.bf16 %v2265, %v2264
        %v2325 = vpack.c.bf16 %v2267, %v2266
        %v2326 = vpack.c.bf16 %v2269, %v2268
        %v2327 = vpack.c.bf16 %v2271, %v2270
        %v2328 = vpack.c.bf16 %v2273, %v2272
        %v2329 = vpack.c.bf16 %v2275, %v2274
        %v2330 = vpack.c.bf16 %v2277, %v2276
        %v2331 = vpack.c.bf16 %v2279, %v2278
        %v2332 = vpack.c.bf16 %v2281, %v2280
        %v2333 = vpack.c.bf16 %v2283, %v2282
        %v2334 = vpack.c.bf16 %v2285, %v2284
        %v2335 = vpack.c.bf16 %v2287, %v2286
        %s2336 = scalar_lea.vmem %s3, 320
        %v2337 = vld [vmem:[%s2336] sm:$0xf]
        %v2338 = vld [vmem:[%s2336 + $0x4] sm:$0xf]
        %v2339 = vld [vmem:[%s2336 + $0x8] sm:$0xf]
        %v2340 = vld [vmem:[%s2336 + $0xc] sm:$0xf]
        %v2341 = vld [vmem:[%s2336 + $0x10] sm:$0xf]
        %v2342 = vld [vmem:[%s2336 + $0x14] sm:$0xf]
        %v2343 = vld [vmem:[%s2336 + $0x18] sm:$0xf]
        %v2344 = vld [vmem:[%s2336 + $0x1c] sm:$0xf]
        %v2345 = vld [vmem:[%s2336 + $0x20] sm:$0xf]
        %v2346 = vld [vmem:[%s2336 + $0x24] sm:$0xf]
        %v2347 = vld [vmem:[%s2336 + $0x28] sm:$0xf]
        %v2348 = vld [vmem:[%s2336 + $0x2c] sm:$0xf]
        %v2349 = vld [vmem:[%s2336 + $0x30] sm:$0xf]
        %v2350 = vld [vmem:[%s2336 + $0x34] sm:$0xf]
        %v2351 = vld [vmem:[%s2336 + $0x38] sm:$0xf]
        %v2352 = vld [vmem:[%s2336 + $0x3c] sm:$0xf]
        %v2369 = vunpack.c.l.b16 %v2337
        %v2370 = vunpack.c.l.b16 %v2338
        %v2371 = vunpack.c.l.b16 %v2339
        %v2372 = vunpack.c.l.b16 %v2340
        %v2373 = vunpack.c.l.b16 %v2341
        %v2374 = vunpack.c.l.b16 %v2342
        %v2375 = vunpack.c.l.b16 %v2343
        %v2376 = vunpack.c.l.b16 %v2344
        %v2377 = vunpack.c.l.b16 %v2345
        %v2378 = vunpack.c.l.b16 %v2346
        %v2379 = vunpack.c.l.b16 %v2347
        %v2380 = vunpack.c.l.b16 %v2348
        %v2381 = vunpack.c.l.b16 %v2349
        %v2382 = vunpack.c.l.b16 %v2350
        %v2383 = vunpack.c.l.b16 %v2351
        %v2384 = vunpack.c.l.b16 %v2352
        %v2385 = vpack.c.b16 %v2370, %v2369
        %v2386 = vpack.c.b16 %v2372, %v2371
        %v2387 = vpack.c.b16 %v2374, %v2373
        %v2388 = vpack.c.b16 %v2376, %v2375
        %v2389 = vpack.c.b16 %v2378, %v2377
        %v2390 = vpack.c.b16 %v2380, %v2379
        %v2391 = vpack.c.b16 %v2382, %v2381
        %v2392 = vpack.c.b16 %v2384, %v2383
        %2401 = vmatpush.bf16.msra.mxu0 %v2392
        %2402 = vmatpush.bf16.msra.mxu0 %v2391
        %2403 = vmatpush.bf16.msra.mxu0 %v2390
        %2404 = vmatpush.bf16.msra.mxu0 %v2389
        %2405 = vmatpush.bf16.msra.mxu0 %v2388
        %2406 = vmatpush.bf16.msra.mxu0 %v2387
        %2407 = vmatpush.bf16.msra.mxu0 %v2386
        %2408 = vmatpush.bf16.msra.mxu0 %v2385
        %2409 = vmatmul.bf16.gmra.mxu0 %v2320
        %v2410 = vpop.f32.mrf.mxu0
        %v2411 = vadd.f32 0.0, %v2410
        %v2412 = vpop.f32.mrf.mxu0
        %v2413 = vadd.f32 0.0, %v2412
        %2414 = vmatmul.bf16.gmra.mxu0 %v2321
        %v2415 = vpop.f32.mrf.mxu0
        %v2416 = vadd.f32 0.0, %v2415
        %v2417 = vpop.f32.mrf.mxu0
        %v2418 = vadd.f32 0.0, %v2417
        %2419 = vmatmul.bf16.gmra.mxu0 %v2322
        %v2420 = vpop.f32.mrf.mxu0
        %v2421 = vadd.f32 0.0, %v2420
        %v2422 = vpop.f32.mrf.mxu0
        %v2423 = vadd.f32 0.0, %v2422
        %2424 = vmatmul.bf16.gmra.mxu0 %v2323
        %v2425 = vpop.f32.mrf.mxu0
        %v2426 = vadd.f32 0.0, %v2425
        %v2427 = vpop.f32.mrf.mxu0
        %v2428 = vadd.f32 0.0, %v2427
        %2429 = vmatmul.bf16.gmra.mxu0 %v2324
        %v2430 = vpop.f32.mrf.mxu0
        %v2431 = vadd.f32 0.0, %v2430
        %v2432 = vpop.f32.mrf.mxu0
        %v2433 = vadd.f32 0.0, %v2432
        %2434 = vmatmul.bf16.gmra.mxu0 %v2325
        %v2435 = vpop.f32.mrf.mxu0
        %v2436 = vadd.f32 0.0, %v2435
        %v2437 = vpop.f32.mrf.mxu0
        %v2438 = vadd.f32 0.0, %v2437
        %2439 = vmatmul.bf16.gmra.mxu0 %v2326
        %v2440 = vpop.f32.mrf.mxu0
        %v2441 = vadd.f32 0.0, %v2440
        %v2442 = vpop.f32.mrf.mxu0
        %v2443 = vadd.f32 0.0, %v2442
        %2444 = vmatmul.bf16.gmra.mxu0 %v2327
        %v2445 = vpop.f32.mrf.mxu0
        %v2446 = vadd.f32 0.0, %v2445
        %v2447 = vpop.f32.mrf.mxu0
        %v2448 = vadd.f32 0.0, %v2447
        %2449 = vmatmul.bf16.gmra.mxu0 %v2328
        %v2450 = vpop.f32.mrf.mxu0
        %v2451 = vadd.f32 0.0, %v2450
        %v2452 = vpop.f32.mrf.mxu0
        %v2453 = vadd.f32 0.0, %v2452
        %2454 = vmatmul.bf16.gmra.mxu0 %v2329
        %v2455 = vpop.f32.mrf.mxu0
        %v2456 = vadd.f32 0.0, %v2455
        %v2457 = vpop.f32.mrf.mxu0
        %v2458 = vadd.f32 0.0, %v2457
        %2459 = vmatmul.bf16.gmra.mxu0 %v2330
        %v2460 = vpop.f32.mrf.mxu0
        %v2461 = vadd.f32 0.0, %v2460
        %v2462 = vpop.f32.mrf.mxu0
        %v2463 = vadd.f32 0.0, %v2462
        %2464 = vmatmul.bf16.gmra.mxu0 %v2331
        %v2465 = vpop.f32.mrf.mxu0
        %v2466 = vadd.f32 0.0, %v2465
        %v2467 = vpop.f32.mrf.mxu0
        %v2468 = vadd.f32 0.0, %v2467
        %2469 = vmatmul.bf16.gmra.mxu0 %v2332
        %v2470 = vpop.f32.mrf.mxu0
        %v2471 = vadd.f32 0.0, %v2470
        %v2472 = vpop.f32.mrf.mxu0
        %v2473 = vadd.f32 0.0, %v2472
        %2474 = vmatmul.bf16.gmra.mxu0 %v2333
        %v2475 = vpop.f32.mrf.mxu0
        %v2476 = vadd.f32 0.0, %v2475
        %v2477 = vpop.f32.mrf.mxu0
        %v2478 = vadd.f32 0.0, %v2477
        %2479 = vmatmul.bf16.gmra.mxu0 %v2334
        %v2480 = vpop.f32.mrf.mxu0
        %v2481 = vadd.f32 0.0, %v2480
        %v2482 = vpop.f32.mrf.mxu0
        %v2483 = vadd.f32 0.0, %v2482
        %2484 = vmatmul.bf16.gmra.mxu0 %v2335
        %v2485 = vpop.f32.mrf.mxu0
        %v2486 = vadd.f32 0.0, %v2485
        %v2487 = vpop.f32.mrf.mxu0
        %v2488 = vadd.f32 0.0, %v2487
        %2489 = vdwg.mxu0
        %v2490 = vadd.f32 %v2288, %v2411
        %v2491 = vadd.f32 %v2289, %v2413
        %v2492 = vadd.f32 %v2290, %v2416
        %v2493 = vadd.f32 %v2291, %v2418
        %v2494 = vadd.f32 %v2292, %v2421
        %v2495 = vadd.f32 %v2293, %v2423
        %v2496 = vadd.f32 %v2294, %v2426
        %v2497 = vadd.f32 %v2295, %v2428
        %v2498 = vadd.f32 %v2296, %v2431
        %v2499 = vadd.f32 %v2297, %v2433
        %v2500 = vadd.f32 %v2298, %v2436
        %v2501 = vadd.f32 %v2299, %v2438
        %v2502 = vadd.f32 %v2300, %v2441
        %v2503 = vadd.f32 %v2301, %v2443
        %v2504 = vadd.f32 %v2302, %v2446
        %v2505 = vadd.f32 %v2303, %v2448
        %v2506 = vadd.f32 %v2304, %v2451
        %v2507 = vadd.f32 %v2305, %v2453
        %v2508 = vadd.f32 %v2306, %v2456
        %v2509 = vadd.f32 %v2307, %v2458
        %v2510 = vadd.f32 %v2308, %v2461
        %v2511 = vadd.f32 %v2309, %v2463
        %v2512 = vadd.f32 %v2310, %v2466
        %v2513 = vadd.f32 %v2311, %v2468
        %v2514 = vadd.f32 %v2312, %v2471
        %v2515 = vadd.f32 %v2313, %v2473
        %v2516 = vadd.f32 %v2314, %v2476
        %v2517 = vadd.f32 %v2315, %v2478
        %v2518 = vadd.f32 %v2316, %v2481
        %v2519 = vadd.f32 %v2317, %v2483
        %v2520 = vadd.f32 %v2318, %v2486
        %v2521 = vadd.f32 %v2319, %v2488
        %2522 = vst [vmem:[#allocation3] sm:$0xff] %v2490
        %2523 = vst [vmem:[#allocation3 + $0x8] sm:$0xff] %v2491
        %2524 = vst [vmem:[#allocation3 + $0x10] sm:$0xff] %v2492
        %2525 = vst [vmem:[#allocation3 + $0x18] sm:$0xff] %v2493
        %2526 = vst [vmem:[#allocation3 + $0x20] sm:$0xff] %v2494
        %2527 = vst [vmem:[#allocation3 + $0x28] sm:$0xff] %v2495
        %2528 = vst [vmem:[#allocation3 + $0x30] sm:$0xff] %v2496
        %2529 = vst [vmem:[#allocation3 + $0x38] sm:$0xff] %v2497
        %2530 = vst [vmem:[#allocation3 + $0x40] sm:$0xff] %v2498
        %2531 = vst [vmem:[#allocation3 + $0x48] sm:$0xff] %v2499
        %2532 = vst [vmem:[#allocation3 + $0x50] sm:$0xff] %v2500
        %2533 = vst [vmem:[#allocation3 + $0x58] sm:$0xff] %v2501
        %2534 = vst [vmem:[#allocation3 + $0x60] sm:$0xff] %v2502
        %2535 = vst [vmem:[#allocation3 + $0x68] sm:$0xff] %v2503
        %2536 = vst [vmem:[#allocation3 + $0x70] sm:$0xff] %v2504
        %2537 = vst [vmem:[#allocation3 + $0x78] sm:$0xff] %v2505
        %2538 = vst [vmem:[#allocation3 + $0x80] sm:$0xff] %v2506
        %2539 = vst [vmem:[#allocation3 + $0x88] sm:$0xff] %v2507
        %2540 = vst [vmem:[#allocation3 + $0x90] sm:$0xff] %v2508
        %2541 = vst [vmem:[#allocation3 + $0x98] sm:$0xff] %v2509
        %2542 = vst [vmem:[#allocation3 + $0xa0] sm:$0xff] %v2510
        %2543 = vst [vmem:[#allocation3 + $0xa8] sm:$0xff] %v2511
        %2544 = vst [vmem:[#allocation3 + $0xb0] sm:$0xff] %v2512
        %2545 = vst [vmem:[#allocation3 + $0xb8] sm:$0xff] %v2513
        %2546 = vst [vmem:[#allocation3 + $0xc0] sm:$0xff] %v2514
        %2547 = vst [vmem:[#allocation3 + $0xc8] sm:$0xff] %v2515
        %2548 = vst [vmem:[#allocation3 + $0xd0] sm:$0xff] %v2516
        %2549 = vst [vmem:[#allocation3 + $0xd8] sm:$0xff] %v2517
        %2550 = vst [vmem:[#allocation3 + $0xe0] sm:$0xff] %v2518
        %2551 = vst [vmem:[#allocation3 + $0xe8] sm:$0xff] %v2519
        %2552 = vst [vmem:[#allocation3 + $0xf0] sm:$0xff] %v2520
        %2553 = vst [vmem:[#allocation3 + $0xf8] sm:$0xff] %v2521
        %s2554 = scalar_lea.vmem [#allocation2], 48
        %v2555 = vld [vmem:[%s2554] sm:$0xff]
        %v2556 = vld [vmem:[%s2554 + $0x8] sm:$0xff]
        %v2557 = vld [vmem:[%s2554 + $0x18] sm:$0xff]
        %v2558 = vld [vmem:[%s2554 + $0x20] sm:$0xff]
        %v2559 = vld [vmem:[%s2554 + $0x30] sm:$0xff]
        %v2560 = vld [vmem:[%s2554 + $0x38] sm:$0xff]
        %v2561 = vld [vmem:[%s2554 + $0x48] sm:$0xff]
        %v2562 = vld [vmem:[%s2554 + $0x50] sm:$0xff]
        %v2563 = vld [vmem:[%s2554 + $0x60] sm:$0xff]
        %v2564 = vld [vmem:[%s2554 + $0x68] sm:$0xff]
        %v2565 = vld [vmem:[%s2554 + $0x78] sm:$0xff]
        %v2566 = vld [vmem:[%s2554 + $0x80] sm:$0xff]
        %v2567 = vld [vmem:[%s2554 + $0x90] sm:$0xff]
        %v2568 = vld [vmem:[%s2554 + $0x98] sm:$0xff]
        %v2569 = vld [vmem:[%s2554 + $0xa8] sm:$0xff]
        %v2570 = vld [vmem:[%s2554 + $0xb0] sm:$0xff]
        %v2571 = vld [vmem:[%s2554 + $0xc0] sm:$0xff]
        %v2572 = vld [vmem:[%s2554 + $0xc8] sm:$0xff]
        %v2573 = vld [vmem:[%s2554 + $0xd8] sm:$0xff]
        %v2574 = vld [vmem:[%s2554 + $0xe0] sm:$0xff]
        %v2575 = vld [vmem:[%s2554 + $0xf0] sm:$0xff]
        %v2576 = vld [vmem:[%s2554 + $0xf8] sm:$0xff]
        %v2577 = vld [vmem:[%s2554 + $0x108] sm:$0xff]
        %v2578 = vld [vmem:[%s2554 + $0x110] sm:$0xff]
        %v2579 = vld [vmem:[%s2554 + $0x120] sm:$0xff]
        %v2580 = vld [vmem:[%s2554 + $0x128] sm:$0xff]
        %v2581 = vld [vmem:[%s2554 + $0x138] sm:$0xff]
        %v2582 = vld [vmem:[%s2554 + $0x140] sm:$0xff]
        %v2583 = vld [vmem:[%s2554 + $0x150] sm:$0xff]
        %v2584 = vld [vmem:[%s2554 + $0x158] sm:$0xff]
        %v2585 = vld [vmem:[%s2554 + $0x168] sm:$0xff]
        %v2586 = vld [vmem:[%s2554 + $0x170] sm:$0xff]
        %v2587 = vld [vmem:[#allocation3] sm:$0xff]
        %v2588 = vld [vmem:[#allocation3 + $0x8] sm:$0xff]
        %v2589 = vld [vmem:[#allocation3 + $0x10] sm:$0xff]
        %v2590 = vld [vmem:[#allocation3 + $0x18] sm:$0xff]
        %v2591 = vld [vmem:[#allocation3 + $0x20] sm:$0xff]
        %v2592 = vld [vmem:[#allocation3 + $0x28] sm:$0xff]
        %v2593 = vld [vmem:[#allocation3 + $0x30] sm:$0xff]
        %v2594 = vld [vmem:[#allocation3 + $0x38] sm:$0xff]
        %v2595 = vld [vmem:[#allocation3 + $0x40] sm:$0xff]
        %v2596 = vld [vmem:[#allocation3 + $0x48] sm:$0xff]
        %v2597 = vld [vmem:[#allocation3 + $0x50] sm:$0xff]
        %v2598 = vld [vmem:[#allocation3 + $0x58] sm:$0xff]
        %v2599 = vld [vmem:[#allocation3 + $0x60] sm:$0xff]
        %v2600 = vld [vmem:[#allocation3 + $0x68] sm:$0xff]
        %v2601 = vld [vmem:[#allocation3 + $0x70] sm:$0xff]
        %v2602 = vld [vmem:[#allocation3 + $0x78] sm:$0xff]
        %v2603 = vld [vmem:[#allocation3 + $0x80] sm:$0xff]
        %v2604 = vld [vmem:[#allocation3 + $0x88] sm:$0xff]
        %v2605 = vld [vmem:[#allocation3 + $0x90] sm:$0xff]
        %v2606 = vld [vmem:[#allocation3 + $0x98] sm:$0xff]
        %v2607 = vld [vmem:[#allocation3 + $0xa0] sm:$0xff]
        %v2608 = vld [vmem:[#allocation3 + $0xa8] sm:$0xff]
        %v2609 = vld [vmem:[#allocation3 + $0xb0] sm:$0xff]
        %v2610 = vld [vmem:[#allocation3 + $0xb8] sm:$0xff]
        %v2611 = vld [vmem:[#allocation3 + $0xc0] sm:$0xff]
        %v2612 = vld [vmem:[#allocation3 + $0xc8] sm:$0xff]
        %v2613 = vld [vmem:[#allocation3 + $0xd0] sm:$0xff]
        %v2614 = vld [vmem:[#allocation3 + $0xd8] sm:$0xff]
        %v2615 = vld [vmem:[#allocation3 + $0xe0] sm:$0xff]
        %v2616 = vld [vmem:[#allocation3 + $0xe8] sm:$0xff]
        %v2617 = vld [vmem:[#allocation3 + $0xf0] sm:$0xff]
        %v2618 = vld [vmem:[#allocation3 + $0xf8] sm:$0xff]
        %v2619 = vpack.c.bf16 %v2556, %v2555
        %v2620 = vpack.c.bf16 %v2558, %v2557
        %v2621 = vpack.c.bf16 %v2560, %v2559
        %v2622 = vpack.c.bf16 %v2562, %v2561
        %v2623 = vpack.c.bf16 %v2564, %v2563
        %v2624 = vpack.c.bf16 %v2566, %v2565
        %v2625 = vpack.c.bf16 %v2568, %v2567
        %v2626 = vpack.c.bf16 %v2570, %v2569
        %v2627 = vpack.c.bf16 %v2572, %v2571
        %v2628 = vpack.c.bf16 %v2574, %v2573
        %v2629 = vpack.c.bf16 %v2576, %v2575
        %v2630 = vpack.c.bf16 %v2578, %v2577
        %v2631 = vpack.c.bf16 %v2580, %v2579
        %v2632 = vpack.c.bf16 %v2582, %v2581
        %v2633 = vpack.c.bf16 %v2584, %v2583
        %v2634 = vpack.c.bf16 %v2586, %v2585
        %s2635 = scalar_lea.vmem %s3, 384
        %v2636 = vld [vmem:[%s2635] sm:$0xf]
        %v2637 = vld [vmem:[%s2635 + $0x4] sm:$0xf]
        %v2638 = vld [vmem:[%s2635 + $0x8] sm:$0xf]
        %v2639 = vld [vmem:[%s2635 + $0xc] sm:$0xf]
        %v2640 = vld [vmem:[%s2635 + $0x10] sm:$0xf]
        %v2641 = vld [vmem:[%s2635 + $0x14] sm:$0xf]
        %v2642 = vld [vmem:[%s2635 + $0x18] sm:$0xf]
        %v2643 = vld [vmem:[%s2635 + $0x1c] sm:$0xf]
        %v2644 = vld [vmem:[%s2635 + $0x20] sm:$0xf]
        %v2645 = vld [vmem:[%s2635 + $0x24] sm:$0xf]
        %v2646 = vld [vmem:[%s2635 + $0x28] sm:$0xf]
        %v2647 = vld [vmem:[%s2635 + $0x2c] sm:$0xf]
        %v2648 = vld [vmem:[%s2635 + $0x30] sm:$0xf]
        %v2649 = vld [vmem:[%s2635 + $0x34] sm:$0xf]
        %v2650 = vld [vmem:[%s2635 + $0x38] sm:$0xf]
        %v2651 = vld [vmem:[%s2635 + $0x3c] sm:$0xf]
        %v2668 = vunpack.c.l.b16 %v2636
        %v2669 = vunpack.c.l.b16 %v2637
        %v2670 = vunpack.c.l.b16 %v2638
        %v2671 = vunpack.c.l.b16 %v2639
        %v2672 = vunpack.c.l.b16 %v2640
        %v2673 = vunpack.c.l.b16 %v2641
        %v2674 = vunpack.c.l.b16 %v2642
        %v2675 = vunpack.c.l.b16 %v2643
        %v2676 = vunpack.c.l.b16 %v2644
        %v2677 = vunpack.c.l.b16 %v2645
        %v2678 = vunpack.c.l.b16 %v2646
        %v2679 = vunpack.c.l.b16 %v2647
        %v2680 = vunpack.c.l.b16 %v2648
        %v2681 = vunpack.c.l.b16 %v2649
        %v2682 = vunpack.c.l.b16 %v2650
        %v2683 = vunpack.c.l.b16 %v2651
        %v2684 = vpack.c.b16 %v2669, %v2668
        %v2685 = vpack.c.b16 %v2671, %v2670
        %v2686 = vpack.c.b16 %v2673, %v2672
        %v2687 = vpack.c.b16 %v2675, %v2674
        %v2688 = vpack.c.b16 %v2677, %v2676
        %v2689 = vpack.c.b16 %v2679, %v2678
        %v2690 = vpack.c.b16 %v2681, %v2680
        %v2691 = vpack.c.b16 %v2683, %v2682
        %2700 = vmatpush.bf16.msra.mxu0 %v2691
        %2701 = vmatpush.bf16.msra.mxu0 %v2690
        %2702 = vmatpush.bf16.msra.mxu0 %v2689
        %2703 = vmatpush.bf16.msra.mxu0 %v2688
        %2704 = vmatpush.bf16.msra.mxu0 %v2687
        %2705 = vmatpush.bf16.msra.mxu0 %v2686
        %2706 = vmatpush.bf16.msra.mxu0 %v2685
        %2707 = vmatpush.bf16.msra.mxu0 %v2684
        %2708 = vmatmul.bf16.gmra.mxu0 %v2619
        %v2709 = vpop.f32.mrf.mxu0
        %v2710 = vadd.f32 0.0, %v2709
        %v2711 = vpop.f32.mrf.mxu0
        %v2712 = vadd.f32 0.0, %v2711
        %2713 = vmatmul.bf16.gmra.mxu0 %v2620
        %v2714 = vpop.f32.mrf.mxu0
        %v2715 = vadd.f32 0.0, %v2714
        %v2716 = vpop.f32.mrf.mxu0
        %v2717 = vadd.f32 0.0, %v2716
        %2718 = vmatmul.bf16.gmra.mxu0 %v2621
        %v2719 = vpop.f32.mrf.mxu0
        %v2720 = vadd.f32 0.0, %v2719
        %v2721 = vpop.f32.mrf.mxu0
        %v2722 = vadd.f32 0.0, %v2721
        %2723 = vmatmul.bf16.gmra.mxu0 %v2622
        %v2724 = vpop.f32.mrf.mxu0
        %v2725 = vadd.f32 0.0, %v2724
        %v2726 = vpop.f32.mrf.mxu0
        %v2727 = vadd.f32 0.0, %v2726
        %2728 = vmatmul.bf16.gmra.mxu0 %v2623
        %v2729 = vpop.f32.mrf.mxu0
        %v2730 = vadd.f32 0.0, %v2729
        %v2731 = vpop.f32.mrf.mxu0
        %v2732 = vadd.f32 0.0, %v2731
        %2733 = vmatmul.bf16.gmra.mxu0 %v2624
        %v2734 = vpop.f32.mrf.mxu0
        %v2735 = vadd.f32 0.0, %v2734
        %v2736 = vpop.f32.mrf.mxu0
        %v2737 = vadd.f32 0.0, %v2736
        %2738 = vmatmul.bf16.gmra.mxu0 %v2625
        %v2739 = vpop.f32.mrf.mxu0
        %v2740 = vadd.f32 0.0, %v2739
        %v2741 = vpop.f32.mrf.mxu0
        %v2742 = vadd.f32 0.0, %v2741
        %2743 = vmatmul.bf16.gmra.mxu0 %v2626
        %v2744 = vpop.f32.mrf.mxu0
        %v2745 = vadd.f32 0.0, %v2744
        %v2746 = vpop.f32.mrf.mxu0
        %v2747 = vadd.f32 0.0, %v2746
        %2748 = vmatmul.bf16.gmra.mxu0 %v2627
        %v2749 = vpop.f32.mrf.mxu0
        %v2750 = vadd.f32 0.0, %v2749
        %v2751 = vpop.f32.mrf.mxu0
        %v2752 = vadd.f32 0.0, %v2751
        %2753 = vmatmul.bf16.gmra.mxu0 %v2628
        %v2754 = vpop.f32.mrf.mxu0
        %v2755 = vadd.f32 0.0, %v2754
        %v2756 = vpop.f32.mrf.mxu0
        %v2757 = vadd.f32 0.0, %v2756
        %2758 = vmatmul.bf16.gmra.mxu0 %v2629
        %v2759 = vpop.f32.mrf.mxu0
        %v2760 = vadd.f32 0.0, %v2759
        %v2761 = vpop.f32.mrf.mxu0
        %v2762 = vadd.f32 0.0, %v2761
        %2763 = vmatmul.bf16.gmra.mxu0 %v2630
        %v2764 = vpop.f32.mrf.mxu0
        %v2765 = vadd.f32 0.0, %v2764
        %v2766 = vpop.f32.mrf.mxu0
        %v2767 = vadd.f32 0.0, %v2766
        %2768 = vmatmul.bf16.gmra.mxu0 %v2631
        %v2769 = vpop.f32.mrf.mxu0
        %v2770 = vadd.f32 0.0, %v2769
        %v2771 = vpop.f32.mrf.mxu0
        %v2772 = vadd.f32 0.0, %v2771
        %2773 = vmatmul.bf16.gmra.mxu0 %v2632
        %v2774 = vpop.f32.mrf.mxu0
        %v2775 = vadd.f32 0.0, %v2774
        %v2776 = vpop.f32.mrf.mxu0
        %v2777 = vadd.f32 0.0, %v2776
        %2778 = vmatmul.bf16.gmra.mxu0 %v2633
        %v2779 = vpop.f32.mrf.mxu0
        %v2780 = vadd.f32 0.0, %v2779
        %v2781 = vpop.f32.mrf.mxu0
        %v2782 = vadd.f32 0.0, %v2781
        %2783 = vmatmul.bf16.gmra.mxu0 %v2634
        %v2784 = vpop.f32.mrf.mxu0
        %v2785 = vadd.f32 0.0, %v2784
        %v2786 = vpop.f32.mrf.mxu0
        %v2787 = vadd.f32 0.0, %v2786
        %2788 = vdwg.mxu0
        %v2789 = vadd.f32 %v2587, %v2710
        %v2790 = vadd.f32 %v2588, %v2712
        %v2791 = vadd.f32 %v2589, %v2715
        %v2792 = vadd.f32 %v2590, %v2717
        %v2793 = vadd.f32 %v2591, %v2720
        %v2794 = vadd.f32 %v2592, %v2722
        %v2795 = vadd.f32 %v2593, %v2725
        %v2796 = vadd.f32 %v2594, %v2727
        %v2797 = vadd.f32 %v2595, %v2730
        %v2798 = vadd.f32 %v2596, %v2732
        %v2799 = vadd.f32 %v2597, %v2735
        %v2800 = vadd.f32 %v2598, %v2737
        %v2801 = vadd.f32 %v2599, %v2740
        %v2802 = vadd.f32 %v2600, %v2742
        %v2803 = vadd.f32 %v2601, %v2745
        %v2804 = vadd.f32 %v2602, %v2747
        %v2805 = vadd.f32 %v2603, %v2750
        %v2806 = vadd.f32 %v2604, %v2752
        %v2807 = vadd.f32 %v2605, %v2755
        %v2808 = vadd.f32 %v2606, %v2757
        %v2809 = vadd.f32 %v2607, %v2760
        %v2810 = vadd.f32 %v2608, %v2762
        %v2811 = vadd.f32 %v2609, %v2765
        %v2812 = vadd.f32 %v2610, %v2767
        %v2813 = vadd.f32 %v2611, %v2770
        %v2814 = vadd.f32 %v2612, %v2772
        %v2815 = vadd.f32 %v2613, %v2775
        %v2816 = vadd.f32 %v2614, %v2777
        %v2817 = vadd.f32 %v2615, %v2780
        %v2818 = vadd.f32 %v2616, %v2782
        %v2819 = vadd.f32 %v2617, %v2785
        %v2820 = vadd.f32 %v2618, %v2787
        %2821 = vst [vmem:[#allocation3] sm:$0xff] %v2789
        %2822 = vst [vmem:[#allocation3 + $0x8] sm:$0xff] %v2790
        %2823 = vst [vmem:[#allocation3 + $0x10] sm:$0xff] %v2791
        %2824 = vst [vmem:[#allocation3 + $0x18] sm:$0xff] %v2792
        %2825 = vst [vmem:[#allocation3 + $0x20] sm:$0xff] %v2793
        %2826 = vst [vmem:[#allocation3 + $0x28] sm:$0xff] %v2794
        %2827 = vst [vmem:[#allocation3 + $0x30] sm:$0xff] %v2795
        %2828 = vst [vmem:[#allocation3 + $0x38] sm:$0xff] %v2796
        %2829 = vst [vmem:[#allocation3 + $0x40] sm:$0xff] %v2797
        %2830 = vst [vmem:[#allocation3 + $0x48] sm:$0xff] %v2798
        %2831 = vst [vmem:[#allocation3 + $0x50] sm:$0xff] %v2799
        %2832 = vst [vmem:[#allocation3 + $0x58] sm:$0xff] %v2800
        %2833 = vst [vmem:[#allocation3 + $0x60] sm:$0xff] %v2801
        %2834 = vst [vmem:[#allocation3 + $0x68] sm:$0xff] %v2802
        %2835 = vst [vmem:[#allocation3 + $0x70] sm:$0xff] %v2803
        %2836 = vst [vmem:[#allocation3 + $0x78] sm:$0xff] %v2804
        %2837 = vst [vmem:[#allocation3 + $0x80] sm:$0xff] %v2805
        %2838 = vst [vmem:[#allocation3 + $0x88] sm:$0xff] %v2806
        %2839 = vst [vmem:[#allocation3 + $0x90] sm:$0xff] %v2807
        %2840 = vst [vmem:[#allocation3 + $0x98] sm:$0xff] %v2808
        %2841 = vst [vmem:[#allocation3 + $0xa0] sm:$0xff] %v2809
        %2842 = vst [vmem:[#allocation3 + $0xa8] sm:$0xff] %v2810
        %2843 = vst [vmem:[#allocation3 + $0xb0] sm:$0xff] %v2811
        %2844 = vst [vmem:[#allocation3 + $0xb8] sm:$0xff] %v2812
        %2845 = vst [vmem:[#allocation3 + $0xc0] sm:$0xff] %v2813
        %2846 = vst [vmem:[#allocation3 + $0xc8] sm:$0xff] %v2814
        %2847 = vst [vmem:[#allocation3 + $0xd0] sm:$0xff] %v2815
        %2848 = vst [vmem:[#allocation3 + $0xd8] sm:$0xff] %v2816
        %2849 = vst [vmem:[#allocation3 + $0xe0] sm:$0xff] %v2817
        %2850 = vst [vmem:[#allocation3 + $0xe8] sm:$0xff] %v2818
        %2851 = vst [vmem:[#allocation3 + $0xf0] sm:$0xff] %v2819
        %2852 = vst [vmem:[#allocation3 + $0xf8] sm:$0xff] %v2820
        %v2853 = vld [vmem:[%s2554 + $0x1] sm:$0xff]
        %v2854 = vld [vmem:[%s2554 + $0x9] sm:$0xff]
        %v2855 = vld [vmem:[%s2554 + $0x19] sm:$0xff]
        %v2856 = vld [vmem:[%s2554 + $0x21] sm:$0xff]
        %v2857 = vld [vmem:[%s2554 + $0x31] sm:$0xff]
        %v2858 = vld [vmem:[%s2554 + $0x39] sm:$0xff]
        %v2859 = vld [vmem:[%s2554 + $0x49] sm:$0xff]
        %v2860 = vld [vmem:[%s2554 + $0x51] sm:$0xff]
        %v2861 = vld [vmem:[%s2554 + $0x61] sm:$0xff]
        %v2862 = vld [vmem:[%s2554 + $0x69] sm:$0xff]
        %v2863 = vld [vmem:[%s2554 + $0x79] sm:$0xff]
        %v2864 = vld [vmem:[%s2554 + $0x81] sm:$0xff]
        %v2865 = vld [vmem:[%s2554 + $0x91] sm:$0xff]
        %v2866 = vld [vmem:[%s2554 + $0x99] sm:$0xff]
        %v2867 = vld [vmem:[%s2554 + $0xa9] sm:$0xff]
        %v2868 = vld [vmem:[%s2554 + $0xb1] sm:$0xff]
        %v2869 = vld [vmem:[%s2554 + $0xc1] sm:$0xff]
        %v2870 = vld [vmem:[%s2554 + $0xc9] sm:$0xff]
        %v2871 = vld [vmem:[%s2554 + $0xd9] sm:$0xff]
        %v2872 = vld [vmem:[%s2554 + $0xe1] sm:$0xff]
        %v2873 = vld [vmem:[%s2554 + $0xf1] sm:$0xff]
        %v2874 = vld [vmem:[%s2554 + $0xf9] sm:$0xff]
        %v2875 = vld [vmem:[%s2554 + $0x109] sm:$0xff]
        %v2876 = vld [vmem:[%s2554 + $0x111] sm:$0xff]
        %v2877 = vld [vmem:[%s2554 + $0x121] sm:$0xff]
        %v2878 = vld [vmem:[%s2554 + $0x129] sm:$0xff]
        %v2879 = vld [vmem:[%s2554 + $0x139] sm:$0xff]
        %v2880 = vld [vmem:[%s2554 + $0x141] sm:$0xff]
        %v2881 = vld [vmem:[%s2554 + $0x151] sm:$0xff]
        %v2882 = vld [vmem:[%s2554 + $0x159] sm:$0xff]
        %v2883 = vld [vmem:[%s2554 + $0x169] sm:$0xff]
        %v2884 = vld [vmem:[%s2554 + $0x171] sm:$0xff]
        %v2885 = vld [vmem:[#allocation3] sm:$0xff]
        %v2886 = vld [vmem:[#allocation3 + $0x8] sm:$0xff]
        %v2887 = vld [vmem:[#allocation3 + $0x10] sm:$0xff]
        %v2888 = vld [vmem:[#allocation3 + $0x18] sm:$0xff]
        %v2889 = vld [vmem:[#allocation3 + $0x20] sm:$0xff]
        %v2890 = vld [vmem:[#allocation3 + $0x28] sm:$0xff]
        %v2891 = vld [vmem:[#allocation3 + $0x30] sm:$0xff]
        %v2892 = vld [vmem:[#allocation3 + $0x38] sm:$0xff]
        %v2893 = vld [vmem:[#allocation3 + $0x40] sm:$0xff]
        %v2894 = vld [vmem:[#allocation3 + $0x48] sm:$0xff]
        %v2895 = vld [vmem:[#allocation3 + $0x50] sm:$0xff]
        %v2896 = vld [vmem:[#allocation3 + $0x58] sm:$0xff]
        %v2897 = vld [vmem:[#allocation3 + $0x60] sm:$0xff]
        %v2898 = vld [vmem:[#allocation3 + $0x68] sm:$0xff]
        %v2899 = vld [vmem:[#allocation3 + $0x70] sm:$0xff]
        %v2900 = vld [vmem:[#allocation3 + $0x78] sm:$0xff]
        %v2901 = vld [vmem:[#allocation3 + $0x80] sm:$0xff]
        %v2902 = vld [vmem:[#allocation3 + $0x88] sm:$0xff]
        %v2903 = vld [vmem:[#allocation3 + $0x90] sm:$0xff]
        %v2904 = vld [vmem:[#allocation3 + $0x98] sm:$0xff]
        %v2905 = vld [vmem:[#allocation3 + $0xa0] sm:$0xff]
        %v2906 = vld [vmem:[#allocation3 + $0xa8] sm:$0xff]
        %v2907 = vld [vmem:[#allocation3 + $0xb0] sm:$0xff]
        %v2908 = vld [vmem:[#allocation3 + $0xb8] sm:$0xff]
        %v2909 = vld [vmem:[#allocation3 + $0xc0] sm:$0xff]
        %v2910 = vld [vmem:[#allocation3 + $0xc8] sm:$0xff]
        %v2911 = vld [vmem:[#allocation3 + $0xd0] sm:$0xff]
        %v2912 = vld [vmem:[#allocation3 + $0xd8] sm:$0xff]
        %v2913 = vld [vmem:[#allocation3 + $0xe0] sm:$0xff]
        %v2914 = vld [vmem:[#allocation3 + $0xe8] sm:$0xff]
        %v2915 = vld [vmem:[#allocation3 + $0xf0] sm:$0xff]
        %v2916 = vld [vmem:[#allocation3 + $0xf8] sm:$0xff]
        %v2917 = vpack.c.bf16 %v2854, %v2853
        %v2918 = vpack.c.bf16 %v2856, %v2855
        %v2919 = vpack.c.bf16 %v2858, %v2857
        %v2920 = vpack.c.bf16 %v2860, %v2859
        %v2921 = vpack.c.bf16 %v2862, %v2861
        %v2922 = vpack.c.bf16 %v2864, %v2863
        %v2923 = vpack.c.bf16 %v2866, %v2865
        %v2924 = vpack.c.bf16 %v2868, %v2867
        %v2925 = vpack.c.bf16 %v2870, %v2869
        %v2926 = vpack.c.bf16 %v2872, %v2871
        %v2927 = vpack.c.bf16 %v2874, %v2873
        %v2928 = vpack.c.bf16 %v2876, %v2875
        %v2929 = vpack.c.bf16 %v2878, %v2877
        %v2930 = vpack.c.bf16 %v2880, %v2879
        %v2931 = vpack.c.bf16 %v2882, %v2881
        %v2932 = vpack.c.bf16 %v2884, %v2883
        %s2933 = scalar_lea.vmem %s3, 448
        %v2934 = vld [vmem:[%s2933] sm:$0xf]
        %v2935 = vld [vmem:[%s2933 + $0x4] sm:$0xf]
        %v2936 = vld [vmem:[%s2933 + $0x8] sm:$0xf]
        %v2937 = vld [vmem:[%s2933 + $0xc] sm:$0xf]
        %v2938 = vld [vmem:[%s2933 + $0x10] sm:$0xf]
        %v2939 = vld [vmem:[%s2933 + $0x14] sm:$0xf]
        %v2940 = vld [vmem:[%s2933 + $0x18] sm:$0xf]
        %v2941 = vld [vmem:[%s2933 + $0x1c] sm:$0xf]
        %v2942 = vld [vmem:[%s2933 + $0x20] sm:$0xf]
        %v2943 = vld [vmem:[%s2933 + $0x24] sm:$0xf]
        %v2944 = vld [vmem:[%s2933 + $0x28] sm:$0xf]
        %v2945 = vld [vmem:[%s2933 + $0x2c] sm:$0xf]
        %v2946 = vld [vmem:[%s2933 + $0x30] sm:$0xf]
        %v2947 = vld [vmem:[%s2933 + $0x34] sm:$0xf]
        %v2948 = vld [vmem:[%s2933 + $0x38] sm:$0xf]
        %v2949 = vld [vmem:[%s2933 + $0x3c] sm:$0xf]
        %v2966 = vunpack.c.l.b16 %v2934
        %v2967 = vunpack.c.l.b16 %v2935
        %v2968 = vunpack.c.l.b16 %v2936
        %v2969 = vunpack.c.l.b16 %v2937
        %v2970 = vunpack.c.l.b16 %v2938
        %v2971 = vunpack.c.l.b16 %v2939
        %v2972 = vunpack.c.l.b16 %v2940
        %v2973 = vunpack.c.l.b16 %v2941
        %v2974 = vunpack.c.l.b16 %v2942
        %v2975 = vunpack.c.l.b16 %v2943
        %v2976 = vunpack.c.l.b16 %v2944
        %v2977 = vunpack.c.l.b16 %v2945
        %v2978 = vunpack.c.l.b16 %v2946
        %v2979 = vunpack.c.l.b16 %v2947
        %v2980 = vunpack.c.l.b16 %v2948
        %v2981 = vunpack.c.l.b16 %v2949
        %v2982 = vpack.c.b16 %v2967, %v2966
        %v2983 = vpack.c.b16 %v2969, %v2968
        %v2984 = vpack.c.b16 %v2971, %v2970
        %v2985 = vpack.c.b16 %v2973, %v2972
        %v2986 = vpack.c.b16 %v2975, %v2974
        %v2987 = vpack.c.b16 %v2977, %v2976
        %v2988 = vpack.c.b16 %v2979, %v2978
        %v2989 = vpack.c.b16 %v2981, %v2980
        %2998 = vmatpush.bf16.msra.mxu0 %v2989
        %2999 = vmatpush.bf16.msra.mxu0 %v2988
        %3000 = vmatpush.bf16.msra.mxu0 %v2987
        %3001 = vmatpush.bf16.msra.mxu0 %v2986
        %3002 = vmatpush.bf16.msra.mxu0 %v2985
        %3003 = vmatpush.bf16.msra.mxu0 %v2984
        %3004 = vmatpush.bf16.msra.mxu0 %v2983
        %3005 = vmatpush.bf16.msra.mxu0 %v2982
        %3006 = vmatmul.bf16.gmra.mxu0 %v2917
        %v3007 = vpop.f32.mrf.mxu0
        %v3008 = vadd.f32 0.0, %v3007
        %v3009 = vpop.f32.mrf.mxu0
        %v3010 = vadd.f32 0.0, %v3009
        %3011 = vmatmul.bf16.gmra.mxu0 %v2918
        %v3012 = vpop.f32.mrf.mxu0
        %v3013 = vadd.f32 0.0, %v3012
        %v3014 = vpop.f32.mrf.mxu0
        %v3015 = vadd.f32 0.0, %v3014
        %3016 = vmatmul.bf16.gmra.mxu0 %v2919
        %v3017 = vpop.f32.mrf.mxu0
        %v3018 = vadd.f32 0.0, %v3017
        %v3019 = vpop.f32.mrf.mxu0
        %v3020 = vadd.f32 0.0, %v3019
        %3021 = vmatmul.bf16.gmra.mxu0 %v2920
        %v3022 = vpop.f32.mrf.mxu0
        %v3023 = vadd.f32 0.0, %v3022
        %v3024 = vpop.f32.mrf.mxu0
        %v3025 = vadd.f32 0.0, %v3024
        %3026 = vmatmul.bf16.gmra.mxu0 %v2921
        %v3027 = vpop.f32.mrf.mxu0
        %v3028 = vadd.f32 0.0, %v3027
        %v3029 = vpop.f32.mrf.mxu0
        %v3030 = vadd.f32 0.0, %v3029
        %3031 = vmatmul.bf16.gmra.mxu0 %v2922
        %v3032 = vpop.f32.mrf.mxu0
        %v3033 = vadd.f32 0.0, %v3032
        %v3034 = vpop.f32.mrf.mxu0
        %v3035 = vadd.f32 0.0, %v3034
        %3036 = vmatmul.bf16.gmra.mxu0 %v2923
        %v3037 = vpop.f32.mrf.mxu0
        %v3038 = vadd.f32 0.0, %v3037
        %v3039 = vpop.f32.mrf.mxu0
        %v3040 = vadd.f32 0.0, %v3039
        %3041 = vmatmul.bf16.gmra.mxu0 %v2924
        %v3042 = vpop.f32.mrf.mxu0
        %v3043 = vadd.f32 0.0, %v3042
        %v3044 = vpop.f32.mrf.mxu0
        %v3045 = vadd.f32 0.0, %v3044
        %3046 = vmatmul.bf16.gmra.mxu0 %v2925
        %v3047 = vpop.f32.mrf.mxu0
        %v3048 = vadd.f32 0.0, %v3047
        %v3049 = vpop.f32.mrf.mxu0
        %v3050 = vadd.f32 0.0, %v3049
        %3051 = vmatmul.bf16.gmra.mxu0 %v2926
        %v3052 = vpop.f32.mrf.mxu0
        %v3053 = vadd.f32 0.0, %v3052
        %v3054 = vpop.f32.mrf.mxu0
        %v3055 = vadd.f32 0.0, %v3054
        %3056 = vmatmul.bf16.gmra.mxu0 %v2927
        %v3057 = vpop.f32.mrf.mxu0
        %v3058 = vadd.f32 0.0, %v3057
        %v3059 = vpop.f32.mrf.mxu0
        %v3060 = vadd.f32 0.0, %v3059
        %3061 = vmatmul.bf16.gmra.mxu0 %v2928
        %v3062 = vpop.f32.mrf.mxu0
        %v3063 = vadd.f32 0.0, %v3062
        %v3064 = vpop.f32.mrf.mxu0
        %v3065 = vadd.f32 0.0, %v3064
        %3066 = vmatmul.bf16.gmra.mxu0 %v2929
        %v3067 = vpop.f32.mrf.mxu0
        %v3068 = vadd.f32 0.0, %v3067
        %v3069 = vpop.f32.mrf.mxu0
        %v3070 = vadd.f32 0.0, %v3069
        %3071 = vmatmul.bf16.gmra.mxu0 %v2930
        %v3072 = vpop.f32.mrf.mxu0
        %v3073 = vadd.f32 0.0, %v3072
        %v3074 = vpop.f32.mrf.mxu0
        %v3075 = vadd.f32 0.0, %v3074
        %3076 = vmatmul.bf16.gmra.mxu0 %v2931
        %v3077 = vpop.f32.mrf.mxu0
        %v3078 = vadd.f32 0.0, %v3077
        %v3079 = vpop.f32.mrf.mxu0
        %v3080 = vadd.f32 0.0, %v3079
        %3081 = vmatmul.bf16.gmra.mxu0 %v2932
        %v3082 = vpop.f32.mrf.mxu0
        %v3083 = vadd.f32 0.0, %v3082
        %v3084 = vpop.f32.mrf.mxu0
        %v3085 = vadd.f32 0.0, %v3084
        %3086 = vdwg.mxu0
        %v3087 = vadd.f32 %v2885, %v3008
        %v3088 = vadd.f32 %v2886, %v3010
        %v3089 = vadd.f32 %v2887, %v3013
        %v3090 = vadd.f32 %v2888, %v3015
        %v3091 = vadd.f32 %v2889, %v3018
        %v3092 = vadd.f32 %v2890, %v3020
        %v3093 = vadd.f32 %v2891, %v3023
        %v3094 = vadd.f32 %v2892, %v3025
        %v3095 = vadd.f32 %v2893, %v3028
        %v3096 = vadd.f32 %v2894, %v3030
        %v3097 = vadd.f32 %v2895, %v3033
        %v3098 = vadd.f32 %v2896, %v3035
        %v3099 = vadd.f32 %v2897, %v3038
        %v3100 = vadd.f32 %v2898, %v3040
        %v3101 = vadd.f32 %v2899, %v3043
        %v3102 = vadd.f32 %v2900, %v3045
        %v3103 = vadd.f32 %v2901, %v3048
        %v3104 = vadd.f32 %v2902, %v3050
        %v3105 = vadd.f32 %v2903, %v3053
        %v3106 = vadd.f32 %v2904, %v3055
        %v3107 = vadd.f32 %v2905, %v3058
        %v3108 = vadd.f32 %v2906, %v3060
        %v3109 = vadd.f32 %v2907, %v3063
        %v3110 = vadd.f32 %v2908, %v3065
        %v3111 = vadd.f32 %v2909, %v3068
        %v3112 = vadd.f32 %v2910, %v3070
        %v3113 = vadd.f32 %v2911, %v3073
        %v3114 = vadd.f32 %v2912, %v3075
        %v3115 = vadd.f32 %v2913, %v3078
        %v3116 = vadd.f32 %v2914, %v3080
        %v3117 = vadd.f32 %v2915, %v3083
        %v3118 = vadd.f32 %v2916, %v3085
        %3119 = vst [vmem:[#allocation3] sm:$0xff] %v3087
        %3120 = vst [vmem:[#allocation3 + $0x8] sm:$0xff] %v3088
        %3121 = vst [vmem:[#allocation3 + $0x10] sm:$0xff] %v3089
        %3122 = vst [vmem:[#allocation3 + $0x18] sm:$0xff] %v3090
        %3123 = vst [vmem:[#allocation3 + $0x20] sm:$0xff] %v3091
        %3124 = vst [vmem:[#allocation3 + $0x28] sm:$0xff] %v3092
        %3125 = vst [vmem:[#allocation3 + $0x30] sm:$0xff] %v3093
        %3126 = vst [vmem:[#allocation3 + $0x38] sm:$0xff] %v3094
        %3127 = vst [vmem:[#allocation3 + $0x40] sm:$0xff] %v3095
        %3128 = vst [vmem:[#allocation3 + $0x48] sm:$0xff] %v3096
        %3129 = vst [vmem:[#allocation3 + $0x50] sm:$0xff] %v3097
        %3130 = vst [vmem:[#allocation3 + $0x58] sm:$0xff] %v3098
        %3131 = vst [vmem:[#allocation3 + $0x60] sm:$0xff] %v3099
        %3132 = vst [vmem:[#allocation3 + $0x68] sm:$0xff] %v3100
        %3133 = vst [vmem:[#allocation3 + $0x70] sm:$0xff] %v3101
        %3134 = vst [vmem:[#allocation3 + $0x78] sm:$0xff] %v3102
        %3135 = vst [vmem:[#allocation3 + $0x80] sm:$0xff] %v3103
        %3136 = vst [vmem:[#allocation3 + $0x88] sm:$0xff] %v3104
        %3137 = vst [vmem:[#allocation3 + $0x90] sm:$0xff] %v3105
        %3138 = vst [vmem:[#allocation3 + $0x98] sm:$0xff] %v3106
        %3139 = vst [vmem:[#allocation3 + $0xa0] sm:$0xff] %v3107
        %3140 = vst [vmem:[#allocation3 + $0xa8] sm:$0xff] %v3108
        %3141 = vst [vmem:[#allocation3 + $0xb0] sm:$0xff] %v3109
        %3142 = vst [vmem:[#allocation3 + $0xb8] sm:$0xff] %v3110
        %3143 = vst [vmem:[#allocation3 + $0xc0] sm:$0xff] %v3111
        %3144 = vst [vmem:[#allocation3 + $0xc8] sm:$0xff] %v3112
        %3145 = vst [vmem:[#allocation3 + $0xd0] sm:$0xff] %v3113
        %3146 = vst [vmem:[#allocation3 + $0xd8] sm:$0xff] %v3114
        %3147 = vst [vmem:[#allocation3 + $0xe0] sm:$0xff] %v3115
        %3148 = vst [vmem:[#allocation3 + $0xe8] sm:$0xff] %v3116
        %3149 = vst [vmem:[#allocation3 + $0xf0] sm:$0xff] %v3117
        %3150 = vst [vmem:[#allocation3 + $0xf8] sm:$0xff] %v3118
        %v3151 = vld [vmem:[%s2554 + $0x2] sm:$0xff]
        %v3152 = vld [vmem:[%s2554 + $0xa] sm:$0xff]
        %v3153 = vld [vmem:[%s2554 + $0x1a] sm:$0xff]
        %v3154 = vld [vmem:[%s2554 + $0x22] sm:$0xff]
        %v3155 = vld [vmem:[%s2554 + $0x32] sm:$0xff]
        %v3156 = vld [vmem:[%s2554 + $0x3a] sm:$0xff]
        %v3157 = vld [vmem:[%s2554 + $0x4a] sm:$0xff]
        %v3158 = vld [vmem:[%s2554 + $0x52] sm:$0xff]
        %v3159 = vld [vmem:[%s2554 + $0x62] sm:$0xff]
        %v3160 = vld [vmem:[%s2554 + $0x6a] sm:$0xff]
        %v3161 = vld [vmem:[%s2554 + $0x7a] sm:$0xff]
        %v3162 = vld [vmem:[%s2554 + $0x82] sm:$0xff]
        %v3163 = vld [vmem:[%s2554 + $0x92] sm:$0xff]
        %v3164 = vld [vmem:[%s2554 + $0x9a] sm:$0xff]
        %v3165 = vld [vmem:[%s2554 + $0xaa] sm:$0xff]
        %v3166 = vld [vmem:[%s2554 + $0xb2] sm:$0xff]
        %v3167 = vld [vmem:[%s2554 + $0xc2] sm:$0xff]
        %v3168 = vld [vmem:[%s2554 + $0xca] sm:$0xff]
        %v3169 = vld [vmem:[%s2554 + $0xda] sm:$0xff]
        %v3170 = vld [vmem:[%s2554 + $0xe2] sm:$0xff]
        %v3171 = vld [vmem:[%s2554 + $0xf2] sm:$0xff]
        %v3172 = vld [vmem:[%s2554 + $0xfa] sm:$0xff]
        %v3173 = vld [vmem:[%s2554 + $0x10a] sm:$0xff]
        %v3174 = vld [vmem:[%s2554 + $0x112] sm:$0xff]
        %v3175 = vld [vmem:[%s2554 + $0x122] sm:$0xff]
        %v3176 = vld [vmem:[%s2554 + $0x12a] sm:$0xff]
        %v3177 = vld [vmem:[%s2554 + $0x13a] sm:$0xff]
        %v3178 = vld [vmem:[%s2554 + $0x142] sm:$0xff]
        %v3179 = vld [vmem:[%s2554 + $0x152] sm:$0xff]
        %v3180 = vld [vmem:[%s2554 + $0x15a] sm:$0xff]
        %v3181 = vld [vmem:[%s2554 + $0x16a] sm:$0xff]
        %v3182 = vld [vmem:[%s2554 + $0x172] sm:$0xff]
        %v3183 = vld [vmem:[#allocation3] sm:$0xff]
        %v3184 = vld [vmem:[#allocation3 + $0x8] sm:$0xff]
        %v3185 = vld [vmem:[#allocation3 + $0x10] sm:$0xff]
        %v3186 = vld [vmem:[#allocation3 + $0x18] sm:$0xff]
        %v3187 = vld [vmem:[#allocation3 + $0x20] sm:$0xff]
        %v3188 = vld [vmem:[#allocation3 + $0x28] sm:$0xff]
        %v3189 = vld [vmem:[#allocation3 + $0x30] sm:$0xff]
        %v3190 = vld [vmem:[#allocation3 + $0x38] sm:$0xff]
        %v3191 = vld [vmem:[#allocation3 + $0x40] sm:$0xff]
        %v3192 = vld [vmem:[#allocation3 + $0x48] sm:$0xff]
        %v3193 = vld [vmem:[#allocation3 + $0x50] sm:$0xff]
        %v3194 = vld [vmem:[#allocation3 + $0x58] sm:$0xff]
        %v3195 = vld [vmem:[#allocation3 + $0x60] sm:$0xff]
        %v3196 = vld [vmem:[#allocation3 + $0x68] sm:$0xff]
        %v3197 = vld [vmem:[#allocation3 + $0x70] sm:$0xff]
        %v3198 = vld [vmem:[#allocation3 + $0x78] sm:$0xff]
        %v3199 = vld [vmem:[#allocation3 + $0x80] sm:$0xff]
        %v3200 = vld [vmem:[#allocation3 + $0x88] sm:$0xff]
        %v3201 = vld [vmem:[#allocation3 + $0x90] sm:$0xff]
        %v3202 = vld [vmem:[#allocation3 + $0x98] sm:$0xff]
        %v3203 = vld [vmem:[#allocation3 + $0xa0] sm:$0xff]
        %v3204 = vld [vmem:[#allocation3 + $0xa8] sm:$0xff]
        %v3205 = vld [vmem:[#allocation3 + $0xb0] sm:$0xff]
        %v3206 = vld [vmem:[#allocation3 + $0xb8] sm:$0xff]
        %v3207 = vld [vmem:[#allocation3 + $0xc0] sm:$0xff]
        %v3208 = vld [vmem:[#allocation3 + $0xc8] sm:$0xff]
        %v3209 = vld [vmem:[#allocation3 + $0xd0] sm:$0xff]
        %v3210 = vld [vmem:[#allocation3 + $0xd8] sm:$0xff]
        %v3211 = vld [vmem:[#allocation3 + $0xe0] sm:$0xff]
        %v3212 = vld [vmem:[#allocation3 + $0xe8] sm:$0xff]
        %v3213 = vld [vmem:[#allocation3 + $0xf0] sm:$0xff]
        %v3214 = vld [vmem:[#allocation3 + $0xf8] sm:$0xff]
        %v3215 = vpack.c.bf16 %v3152, %v3151
        %v3216 = vpack.c.bf16 %v3154, %v3153
        %v3217 = vpack.c.bf16 %v3156, %v3155
        %v3218 = vpack.c.bf16 %v3158, %v3157
        %v3219 = vpack.c.bf16 %v3160, %v3159
        %v3220 = vpack.c.bf16 %v3162, %v3161
        %v3221 = vpack.c.bf16 %v3164, %v3163
        %v3222 = vpack.c.bf16 %v3166, %v3165
        %v3223 = vpack.c.bf16 %v3168, %v3167
        %v3224 = vpack.c.bf16 %v3170, %v3169
        %v3225 = vpack.c.bf16 %v3172, %v3171
        %v3226 = vpack.c.bf16 %v3174, %v3173
        %v3227 = vpack.c.bf16 %v3176, %v3175
        %v3228 = vpack.c.bf16 %v3178, %v3177
        %v3229 = vpack.c.bf16 %v3180, %v3179
        %v3230 = vpack.c.bf16 %v3182, %v3181
        %s3231 = scalar_lea.vmem %s3, 512
        %v3232 = vld [vmem:[%s3231] sm:$0xf]
        %v3233 = vld [vmem:[%s3231 + $0x4] sm:$0xf]
        %v3234 = vld [vmem:[%s3231 + $0x8] sm:$0xf]
        %v3235 = vld [vmem:[%s3231 + $0xc] sm:$0xf]
        %v3236 = vld [vmem:[%s3231 + $0x10] sm:$0xf]
        %v3237 = vld [vmem:[%s3231 + $0x14] sm:$0xf]
        %v3238 = vld [vmem:[%s3231 + $0x18] sm:$0xf]
        %v3239 = vld [vmem:[%s3231 + $0x1c] sm:$0xf]
        %v3240 = vld [vmem:[%s3231 + $0x20] sm:$0xf]
        %v3241 = vld [vmem:[%s3231 + $0x24] sm:$0xf]
        %v3242 = vld [vmem:[%s3231 + $0x28] sm:$0xf]
        %v3243 = vld [vmem:[%s3231 + $0x2c] sm:$0xf]
        %v3244 = vld [vmem:[%s3231 + $0x30] sm:$0xf]
        %v3245 = vld [vmem:[%s3231 + $0x34] sm:$0xf]
        %v3246 = vld [vmem:[%s3231 + $0x38] sm:$0xf]
        %v3247 = vld [vmem:[%s3231 + $0x3c] sm:$0xf]
        %v3264 = vunpack.c.l.b16 %v3232
        %v3265 = vunpack.c.l.b16 %v3233
        %v3266 = vunpack.c.l.b16 %v3234
        %v3267 = vunpack.c.l.b16 %v3235
        %v3268 = vunpack.c.l.b16 %v3236
        %v3269 = vunpack.c.l.b16 %v3237
        %v3270 = vunpack.c.l.b16 %v3238
        %v3271 = vunpack.c.l.b16 %v3239
        %v3272 = vunpack.c.l.b16 %v3240
        %v3273 = vunpack.c.l.b16 %v3241
        %v3274 = vunpack.c.l.b16 %v3242
        %v3275 = vunpack.c.l.b16 %v3243
        %v3276 = vunpack.c.l.b16 %v3244
        %v3277 = vunpack.c.l.b16 %v3245
        %v3278 = vunpack.c.l.b16 %v3246
        %v3279 = vunpack.c.l.b16 %v3247
        %v3280 = vpack.c.b16 %v3265, %v3264
        %v3281 = vpack.c.b16 %v3267, %v3266
        %v3282 = vpack.c.b16 %v3269, %v3268
        %v3283 = vpack.c.b16 %v3271, %v3270
        %v3284 = vpack.c.b16 %v3273, %v3272
        %v3285 = vpack.c.b16 %v3275, %v3274
        %v3286 = vpack.c.b16 %v3277, %v3276
        %v3287 = vpack.c.b16 %v3279, %v3278
        %3296 = vmatpush.bf16.msra.mxu0 %v3287
        %3297 = vmatpush.bf16.msra.mxu0 %v3286
        %3298 = vmatpush.bf16.msra.mxu0 %v3285
        %3299 = vmatpush.bf16.msra.mxu0 %v3284
        %3300 = vmatpush.bf16.msra.mxu0 %v3283
        %3301 = vmatpush.bf16.msra.mxu0 %v3282
        %3302 = vmatpush.bf16.msra.mxu0 %v3281
        %3303 = vmatpush.bf16.msra.mxu0 %v3280
        %3304 = vmatmul.bf16.gmra.mxu0 %v3215
        %v3305 = vpop.f32.mrf.mxu0
        %v3306 = vadd.f32 0.0, %v3305
        %v3307 = vpop.f32.mrf.mxu0
        %v3308 = vadd.f32 0.0, %v3307
        %3309 = vmatmul.bf16.gmra.mxu0 %v3216
        %v3310 = vpop.f32.mrf.mxu0
        %v3311 = vadd.f32 0.0, %v3310
        %v3312 = vpop.f32.mrf.mxu0
        %v3313 = vadd.f32 0.0, %v3312
        %3314 = vmatmul.bf16.gmra.mxu0 %v3217
        %v3315 = vpop.f32.mrf.mxu0
        %v3316 = vadd.f32 0.0, %v3315
        %v3317 = vpop.f32.mrf.mxu0
        %v3318 = vadd.f32 0.0, %v3317
        %3319 = vmatmul.bf16.gmra.mxu0 %v3218
        %v3320 = vpop.f32.mrf.mxu0
        %v3321 = vadd.f32 0.0, %v3320
        %v3322 = vpop.f32.mrf.mxu0
        %v3323 = vadd.f32 0.0, %v3322
        %3324 = vmatmul.bf16.gmra.mxu0 %v3219
        %v3325 = vpop.f32.mrf.mxu0
        %v3326 = vadd.f32 0.0, %v3325
        %v3327 = vpop.f32.mrf.mxu0
        %v3328 = vadd.f32 0.0, %v3327
        %3329 = vmatmul.bf16.gmra.mxu0 %v3220
        %v3330 = vpop.f32.mrf.mxu0
        %v3331 = vadd.f32 0.0, %v3330
        %v3332 = vpop.f32.mrf.mxu0
        %v3333 = vadd.f32 0.0, %v3332
        %3334 = vmatmul.bf16.gmra.mxu0 %v3221
        %v3335 = vpop.f32.mrf.mxu0
        %v3336 = vadd.f32 0.0, %v3335
        %v3337 = vpop.f32.mrf.mxu0
        %v3338 = vadd.f32 0.0, %v3337
        %3339 = vmatmul.bf16.gmra.mxu0 %v3222
        %v3340 = vpop.f32.mrf.mxu0
        %v3341 = vadd.f32 0.0, %v3340
        %v3342 = vpop.f32.mrf.mxu0
        %v3343 = vadd.f32 0.0, %v3342
        %3344 = vmatmul.bf16.gmra.mxu0 %v3223
        %v3345 = vpop.f32.mrf.mxu0
        %v3346 = vadd.f32 0.0, %v3345
        %v3347 = vpop.f32.mrf.mxu0
        %v3348 = vadd.f32 0.0, %v3347
        %3349 = vmatmul.bf16.gmra.mxu0 %v3224
        %v3350 = vpop.f32.mrf.mxu0
        %v3351 = vadd.f32 0.0, %v3350
        %v3352 = vpop.f32.mrf.mxu0
        %v3353 = vadd.f32 0.0, %v3352
        %3354 = vmatmul.bf16.gmra.mxu0 %v3225
        %v3355 = vpop.f32.mrf.mxu0
        %v3356 = vadd.f32 0.0, %v3355
        %v3357 = vpop.f32.mrf.mxu0
        %v3358 = vadd.f32 0.0, %v3357
        %3359 = vmatmul.bf16.gmra.mxu0 %v3226
        %v3360 = vpop.f32.mrf.mxu0
        %v3361 = vadd.f32 0.0, %v3360
        %v3362 = vpop.f32.mrf.mxu0
        %v3363 = vadd.f32 0.0, %v3362
        %3364 = vmatmul.bf16.gmra.mxu0 %v3227
        %v3365 = vpop.f32.mrf.mxu0
        %v3366 = vadd.f32 0.0, %v3365
        %v3367 = vpop.f32.mrf.mxu0
        %v3368 = vadd.f32 0.0, %v3367
        %3369 = vmatmul.bf16.gmra.mxu0 %v3228
        %v3370 = vpop.f32.mrf.mxu0
        %v3371 = vadd.f32 0.0, %v3370
        %v3372 = vpop.f32.mrf.mxu0
        %v3373 = vadd.f32 0.0, %v3372
        %3374 = vmatmul.bf16.gmra.mxu0 %v3229
        %v3375 = vpop.f32.mrf.mxu0
        %v3376 = vadd.f32 0.0, %v3375
        %v3377 = vpop.f32.mrf.mxu0
        %v3378 = vadd.f32 0.0, %v3377
        %3379 = vmatmul.bf16.gmra.mxu0 %v3230
        %v3380 = vpop.f32.mrf.mxu0
        %v3381 = vadd.f32 0.0, %v3380
        %v3382 = vpop.f32.mrf.mxu0
        %v3383 = vadd.f32 0.0, %v3382
        %3384 = vdwg.mxu0
        %v3385 = vadd.f32 %v3183, %v3306
        %v3386 = vadd.f32 %v3184, %v3308
        %v3387 = vadd.f32 %v3185, %v3311
        %v3388 = vadd.f32 %v3186, %v3313
        %v3389 = vadd.f32 %v3187, %v3316
        %v3390 = vadd.f32 %v3188, %v3318
        %v3391 = vadd.f32 %v3189, %v3321
        %v3392 = vadd.f32 %v3190, %v3323
        %v3393 = vadd.f32 %v3191, %v3326
        %v3394 = vadd.f32 %v3192, %v3328
        %v3395 = vadd.f32 %v3193, %v3331
        %v3396 = vadd.f32 %v3194, %v3333
        %v3397 = vadd.f32 %v3195, %v3336
        %v3398 = vadd.f32 %v3196, %v3338
        %v3399 = vadd.f32 %v3197, %v3341
        %v3400 = vadd.f32 %v3198, %v3343
        %v3401 = vadd.f32 %v3199, %v3346
        %v3402 = vadd.f32 %v3200, %v3348
        %v3403 = vadd.f32 %v3201, %v3351
        %v3404 = vadd.f32 %v3202, %v3353
        %v3405 = vadd.f32 %v3203, %v3356
        %v3406 = vadd.f32 %v3204, %v3358
        %v3407 = vadd.f32 %v3205, %v3361
        %v3408 = vadd.f32 %v3206, %v3363
        %v3409 = vadd.f32 %v3207, %v3366
        %v3410 = vadd.f32 %v3208, %v3368
        %v3411 = vadd.f32 %v3209, %v3371
        %v3412 = vadd.f32 %v3210, %v3373
        %v3413 = vadd.f32 %v3211, %v3376
        %v3414 = vadd.f32 %v3212, %v3378
        %v3415 = vadd.f32 %v3213, %v3381
        %v3416 = vadd.f32 %v3214, %v3383
        %3417 = vst [vmem:[#allocation3] sm:$0xff] %v3385
        %3418 = vst [vmem:[#allocation3 + $0x8] sm:$0xff] %v3386
        %3419 = vst [vmem:[#allocation3 + $0x10] sm:$0xff] %v3387
        %3420 = vst [vmem:[#allocation3 + $0x18] sm:$0xff] %v3388
        %3421 = vst [vmem:[#allocation3 + $0x20] sm:$0xff] %v3389
        %3422 = vst [vmem:[#allocation3 + $0x28] sm:$0xff] %v3390
        %3423 = vst [vmem:[#allocation3 + $0x30] sm:$0xff] %v3391
        %3424 = vst [vmem:[#allocation3 + $0x38] sm:$0xff] %v3392
        %3425 = vst [vmem:[#allocation3 + $0x40] sm:$0xff] %v3393
        %3426 = vst [vmem:[#allocation3 + $0x48] sm:$0xff] %v3394
        %3427 = vst [vmem:[#allocation3 + $0x50] sm:$0xff] %v3395
        %3428 = vst [vmem:[#allocation3 + $0x58] sm:$0xff] %v3396
        %3429 = vst [vmem:[#allocation3 + $0x60] sm:$0xff] %v3397
        %3430 = vst [vmem:[#allocation3 + $0x68] sm:$0xff] %v3398
        %3431 = vst [vmem:[#allocation3 + $0x70] sm:$0xff] %v3399
        %3432 = vst [vmem:[#allocation3 + $0x78] sm:$0xff] %v3400
        %3433 = vst [vmem:[#allocation3 + $0x80] sm:$0xff] %v3401
        %3434 = vst [vmem:[#allocation3 + $0x88] sm:$0xff] %v3402
        %3435 = vst [vmem:[#allocation3 + $0x90] sm:$0xff] %v3403
        %3436 = vst [vmem:[#allocation3 + $0x98] sm:$0xff] %v3404
        %3437 = vst [vmem:[#allocation3 + $0xa0] sm:$0xff] %v3405
        %3438 = vst [vmem:[#allocation3 + $0xa8] sm:$0xff] %v3406
        %3439 = vst [vmem:[#allocation3 + $0xb0] sm:$0xff] %v3407
        %3440 = vst [vmem:[#allocation3 + $0xb8] sm:$0xff] %v3408
        %3441 = vst [vmem:[#allocation3 + $0xc0] sm:$0xff] %v3409
        %3442 = vst [vmem:[#allocation3 + $0xc8] sm:$0xff] %v3410
        %3443 = vst [vmem:[#allocation3 + $0xd0] sm:$0xff] %v3411
        %3444 = vst [vmem:[#allocation3 + $0xd8] sm:$0xff] %v3412
        %3445 = vst [vmem:[#allocation3 + $0xe0] sm:$0xff] %v3413
        %3446 = vst [vmem:[#allocation3 + $0xe8] sm:$0xff] %v3414
        %3447 = vst [vmem:[#allocation3 + $0xf0] sm:$0xff] %v3415
        %3448 = vst [vmem:[#allocation3 + $0xf8] sm:$0xff] %v3416
        %v3449 = vld [vmem:[#allocation3] sm:$0xff]
        %v3450 = vld [vmem:[#allocation3 + $0x8] sm:$0xff]
        %v3451 = vld [vmem:[#allocation3 + $0x10] sm:$0xff]
        %v3452 = vld [vmem:[#allocation3 + $0x18] sm:$0xff]
        %v3453 = vld [vmem:[#allocation3 + $0x20] sm:$0xff]
        %v3454 = vld [vmem:[#allocation3 + $0x28] sm:$0xff]
        %v3455 = vld [vmem:[#allocation3 + $0x30] sm:$0xff]
        %v3456 = vld [vmem:[#allocation3 + $0x38] sm:$0xff]
        %v3457 = vld [vmem:[#allocation3 + $0x40] sm:$0xff]
        %v3458 = vld [vmem:[#allocation3 + $0x48] sm:$0xff]
        %v3459 = vld [vmem:[#allocation3 + $0x50] sm:$0xff]
        %v3460 = vld [vmem:[#allocation3 + $0x58] sm:$0xff]
        %v3461 = vld [vmem:[#allocation3 + $0x60] sm:$0xff]
        %v3462 = vld [vmem:[#allocation3 + $0x68] sm:$0xff]
        %v3463 = vld [vmem:[#allocation3 + $0x70] sm:$0xff]
        %v3464 = vld [vmem:[#allocation3 + $0x78] sm:$0xff]
        %v3465 = vld [vmem:[#allocation3 + $0x80] sm:$0xff]
        %v3466 = vld [vmem:[#allocation3 + $0x88] sm:$0xff]
        %v3467 = vld [vmem:[#allocation3 + $0x90] sm:$0xff]
        %v3468 = vld [vmem:[#allocation3 + $0x98] sm:$0xff]
        %v3469 = vld [vmem:[#allocation3 + $0xa0] sm:$0xff]
        %v3470 = vld [vmem:[#allocation3 + $0xa8] sm:$0xff]
        %v3471 = vld [vmem:[#allocation3 + $0xb0] sm:$0xff]
        %v3472 = vld [vmem:[#allocation3 + $0xb8] sm:$0xff]
        %v3473 = vld [vmem:[#allocation3 + $0xc0] sm:$0xff]
        %v3474 = vld [vmem:[#allocation3 + $0xc8] sm:$0xff]
        %v3475 = vld [vmem:[#allocation3 + $0xd0] sm:$0xff]
        %v3476 = vld [vmem:[#allocation3 + $0xd8] sm:$0xff]
        %v3477 = vld [vmem:[#allocation3 + $0xe0] sm:$0xff]
        %v3478 = vld [vmem:[#allocation3 + $0xe8] sm:$0xff]
        %v3479 = vld [vmem:[#allocation3 + $0xf0] sm:$0xff]
        %v3480 = vld [vmem:[#allocation3 + $0xf8] sm:$0xff]
        %v3481 = vld [vmem:[%s4] sm:$0x1]
        %v3483 = vperm.slane %v3481, 0
        %v3485 = vadd.f32 %v3449, %v3483
        %v3486 = vadd.f32 %v3450, %v3483
        %v3487 = vadd.f32 %v3451, %v3483
        %v3488 = vadd.f32 %v3452, %v3483
        %v3489 = vadd.f32 %v3453, %v3483
        %v3490 = vadd.f32 %v3454, %v3483
        %v3491 = vadd.f32 %v3455, %v3483
        %v3492 = vadd.f32 %v3456, %v3483
        %v3493 = vadd.f32 %v3457, %v3483
        %v3494 = vadd.f32 %v3458, %v3483
        %v3495 = vadd.f32 %v3459, %v3483
        %v3496 = vadd.f32 %v3460, %v3483
        %v3497 = vadd.f32 %v3461, %v3483
        %v3498 = vadd.f32 %v3462, %v3483
        %v3499 = vadd.f32 %v3463, %v3483
        %v3500 = vadd.f32 %v3464, %v3483
        %v3501 = vadd.f32 %v3465, %v3483
        %v3502 = vadd.f32 %v3466, %v3483
        %v3503 = vadd.f32 %v3467, %v3483
        %v3504 = vadd.f32 %v3468, %v3483
        %v3505 = vadd.f32 %v3469, %v3483
        %v3506 = vadd.f32 %v3470, %v3483
        %v3507 = vadd.f32 %v3471, %v3483
        %v3508 = vadd.f32 %v3472, %v3483
        %v3509 = vadd.f32 %v3473, %v3483
        %v3510 = vadd.f32 %v3474, %v3483
        %v3511 = vadd.f32 %v3475, %v3483
        %v3512 = vadd.f32 %v3476, %v3483
        %v3513 = vadd.f32 %v3477, %v3483
        %v3514 = vadd.f32 %v3478, %v3483
        %v3515 = vadd.f32 %v3479, %v3483
        %v3516 = vadd.f32 %v3480, %v3483
        %v3517 = vmax.f32 %v3485, 0.0
        %v3518 = vmax.f32 %v3486, 0.0
        %v3519 = vmax.f32 %v3487, 0.0
        %v3520 = vmax.f32 %v3488, 0.0
        %v3521 = vmax.f32 %v3489, 0.0
        %v3522 = vmax.f32 %v3490, 0.0
        %v3523 = vmax.f32 %v3491, 0.0
        %v3524 = vmax.f32 %v3492, 0.0
        %v3525 = vmax.f32 %v3493, 0.0
        %v3526 = vmax.f32 %v3494, 0.0
        %v3527 = vmax.f32 %v3495, 0.0
        %v3528 = vmax.f32 %v3496, 0.0
        %v3529 = vmax.f32 %v3497, 0.0
        %v3530 = vmax.f32 %v3498, 0.0
        %v3531 = vmax.f32 %v3499, 0.0
        %v3532 = vmax.f32 %v3500, 0.0
        %v3533 = vmax.f32 %v3501, 0.0
        %v3534 = vmax.f32 %v3502, 0.0
        %v3535 = vmax.f32 %v3503, 0.0
        %v3536 = vmax.f32 %v3504, 0.0
        %v3537 = vmax.f32 %v3505, 0.0
        %v3538 = vmax.f32 %v3506, 0.0
        %v3539 = vmax.f32 %v3507, 0.0
        %v3540 = vmax.f32 %v3508, 0.0
        %v3541 = vmax.f32 %v3509, 0.0
        %v3542 = vmax.f32 %v3510, 0.0
        %v3543 = vmax.f32 %v3511, 0.0
        %v3544 = vmax.f32 %v3512, 0.0
        %v3545 = vmax.f32 %v3513, 0.0
        %v3546 = vmax.f32 %v3514, 0.0
        %v3547 = vmax.f32 %v3515, 0.0
        %v3548 = vmax.f32 %v3516, 0.0
        %v3549 = vpack.c.bf16 %v3518, %v3517
        %v3550 = vpack.c.bf16 %v3520, %v3519
        %v3551 = vpack.c.bf16 %v3522, %v3521
        %v3552 = vpack.c.bf16 %v3524, %v3523
        %v3553 = vpack.c.bf16 %v3526, %v3525
        %v3554 = vpack.c.bf16 %v3528, %v3527
        %v3555 = vpack.c.bf16 %v3530, %v3529
        %v3556 = vpack.c.bf16 %v3532, %v3531
        %v3557 = vpack.c.bf16 %v3534, %v3533
        %v3558 = vpack.c.bf16 %v3536, %v3535
        %v3559 = vpack.c.bf16 %v3538, %v3537
        %v3560 = vpack.c.bf16 %v3540, %v3539
        %v3561 = vpack.c.bf16 %v3542, %v3541
        %v3562 = vpack.c.bf16 %v3544, %v3543
        %v3563 = vpack.c.bf16 %v3546, %v3545
        %v3564 = vpack.c.bf16 %v3548, %v3547
        %v3565 = vld [vmem:[%s5] sm:$0xf]
        %v3566 = vld [vmem:[%s5 + $0x4] sm:$0xf]
        %v3567 = vld [vmem:[%s5 + $0x8] sm:$0xf]
        %v3568 = vld [vmem:[%s5 + $0xc] sm:$0xf]
        %v3569 = vld [vmem:[%s5 + $0x10] sm:$0xf]
        %v3570 = vld [vmem:[%s5 + $0x14] sm:$0xf]
        %v3571 = vld [vmem:[%s5 + $0x18] sm:$0xf]
        %v3572 = vld [vmem:[%s5 + $0x1c] sm:$0xf]
        %v3573 = vld [vmem:[%s5 + $0x20] sm:$0xf]
        %v3574 = vld [vmem:[%s5 + $0x24] sm:$0xf]
        %v3575 = vld [vmem:[%s5 + $0x28] sm:$0xf]
        %v3576 = vld [vmem:[%s5 + $0x2c] sm:$0xf]
        %v3577 = vld [vmem:[%s5 + $0x30] sm:$0xf]
        %v3578 = vld [vmem:[%s5 + $0x34] sm:$0xf]
        %v3579 = vld [vmem:[%s5 + $0x38] sm:$0xf]
        %v3580 = vld [vmem:[%s5 + $0x3c] sm:$0xf]
        %v3581 = vld [vmem:[%s6] sm:$0x1]
        %v3583 = vperm.slane %v3581, 0
        %v3601 = vunpack.c.l.b16 %v3565
        %v3602 = vunpack.c.l.b16 %v3566
        %v3603 = vunpack.c.l.b16 %v3567
        %v3604 = vunpack.c.l.b16 %v3568
        %v3605 = vunpack.c.l.b16 %v3569
        %v3606 = vunpack.c.l.b16 %v3570
        %v3607 = vunpack.c.l.b16 %v3571
        %v3608 = vunpack.c.l.b16 %v3572
        %v3609 = vunpack.c.l.b16 %v3573
        %v3610 = vunpack.c.l.b16 %v3574
        %v3611 = vunpack.c.l.b16 %v3575
        %v3612 = vunpack.c.l.b16 %v3576
        %v3613 = vunpack.c.l.b16 %v3577
        %v3614 = vunpack.c.l.b16 %v3578
        %v3615 = vunpack.c.l.b16 %v3579
        %v3616 = vunpack.c.l.b16 %v3580
        %v3617 = vpack.c.b16 %v3602, %v3601
        %v3618 = vpack.c.b16 %v3604, %v3603
        %v3619 = vpack.c.b16 %v3606, %v3605
        %v3620 = vpack.c.b16 %v3608, %v3607
        %v3621 = vpack.c.b16 %v3610, %v3609
        %v3622 = vpack.c.b16 %v3612, %v3611
        %v3623 = vpack.c.b16 %v3614, %v3613
        %v3624 = vpack.c.b16 %v3616, %v3615
        %3633 = vmatpush.bf16.msra.mxu0 %v3624
        %3634 = vmatpush.bf16.msra.mxu0 %v3623
        %3635 = vmatpush.bf16.msra.mxu0 %v3622
        %3636 = vmatpush.bf16.msra.mxu0 %v3621
        %3637 = vmatpush.bf16.msra.mxu0 %v3620
        %3638 = vmatpush.bf16.msra.mxu0 %v3619
        %3639 = vmatpush.bf16.msra.mxu0 %v3618
        %3640 = vmatpush.bf16.msra.mxu0 %v3617
        %3641 = vmatmul.bf16.gmra.mxu0 %v3549
        %v3642 = vpop.f32.mrf.mxu0
        %v3643 = vadd.f32 %v3583, %v3642
        %v3644 = vpop.f32.mrf.mxu0
        %v3645 = vadd.f32 %v3583, %v3644
        %3646 = vmatmul.bf16.gmra.mxu0 %v3550
        %v3647 = vpop.f32.mrf.mxu0
        %v3648 = vadd.f32 %v3583, %v3647
        %v3649 = vpop.f32.mrf.mxu0
        %v3650 = vadd.f32 %v3583, %v3649
        %3651 = vmatmul.bf16.gmra.mxu0 %v3551
        %v3652 = vpop.f32.mrf.mxu0
        %v3653 = vadd.f32 %v3583, %v3652
        %v3654 = vpop.f32.mrf.mxu0
        %v3655 = vadd.f32 %v3583, %v3654
        %3656 = vmatmul.bf16.gmra.mxu0 %v3552
        %v3657 = vpop.f32.mrf.mxu0
        %v3658 = vadd.f32 %v3583, %v3657
        %v3659 = vpop.f32.mrf.mxu0
        %v3660 = vadd.f32 %v3583, %v3659
        %3661 = vmatmul.bf16.gmra.mxu0 %v3553
        %v3662 = vpop.f32.mrf.mxu0
        %v3663 = vadd.f32 %v3583, %v3662
        %v3664 = vpop.f32.mrf.mxu0
        %v3665 = vadd.f32 %v3583, %v3664
        %3666 = vmatmul.bf16.gmra.mxu0 %v3554
        %v3667 = vpop.f32.mrf.mxu0
        %v3668 = vadd.f32 %v3583, %v3667
        %v3669 = vpop.f32.mrf.mxu0
        %v3670 = vadd.f32 %v3583, %v3669
        %3671 = vmatmul.bf16.gmra.mxu0 %v3555
        %v3672 = vpop.f32.mrf.mxu0
        %v3673 = vadd.f32 %v3583, %v3672
        %v3674 = vpop.f32.mrf.mxu0
        %v3675 = vadd.f32 %v3583, %v3674
        %3676 = vmatmul.bf16.gmra.mxu0 %v3556
        %v3677 = vpop.f32.mrf.mxu0
        %v3678 = vadd.f32 %v3583, %v3677
        %v3679 = vpop.f32.mrf.mxu0
        %v3680 = vadd.f32 %v3583, %v3679
        %3681 = vmatmul.bf16.gmra.mxu0 %v3557
        %v3682 = vpop.f32.mrf.mxu0
        %v3683 = vadd.f32 %v3583, %v3682
        %v3684 = vpop.f32.mrf.mxu0
        %v3685 = vadd.f32 %v3583, %v3684
        %3686 = vmatmul.bf16.gmra.mxu0 %v3558
        %v3687 = vpop.f32.mrf.mxu0
        %v3688 = vadd.f32 %v3583, %v3687
        %v3689 = vpop.f32.mrf.mxu0
        %v3690 = vadd.f32 %v3583, %v3689
        %3691 = vmatmul.bf16.gmra.mxu0 %v3559
        %v3692 = vpop.f32.mrf.mxu0
        %v3693 = vadd.f32 %v3583, %v3692
        %v3694 = vpop.f32.mrf.mxu0
        %v3695 = vadd.f32 %v3583, %v3694
        %3696 = vmatmul.bf16.gmra.mxu0 %v3560
        %v3697 = vpop.f32.mrf.mxu0
        %v3698 = vadd.f32 %v3583, %v3697
        %v3699 = vpop.f32.mrf.mxu0
        %v3700 = vadd.f32 %v3583, %v3699
        %3701 = vmatmul.bf16.gmra.mxu0 %v3561
        %v3702 = vpop.f32.mrf.mxu0
        %v3703 = vadd.f32 %v3583, %v3702
        %v3704 = vpop.f32.mrf.mxu0
        %v3705 = vadd.f32 %v3583, %v3704
        %3706 = vmatmul.bf16.gmra.mxu0 %v3562
        %v3707 = vpop.f32.mrf.mxu0
        %v3708 = vadd.f32 %v3583, %v3707
        %v3709 = vpop.f32.mrf.mxu0
        %v3710 = vadd.f32 %v3583, %v3709
        %3711 = vmatmul.bf16.gmra.mxu0 %v3563
        %v3712 = vpop.f32.mrf.mxu0
        %v3713 = vadd.f32 %v3583, %v3712
        %v3714 = vpop.f32.mrf.mxu0
        %v3715 = vadd.f32 %v3583, %v3714
        %3716 = vmatmul.bf16.gmra.mxu0 %v3564
        %v3717 = vpop.f32.mrf.mxu0
        %v3718 = vadd.f32 %v3583, %v3717
        %v3719 = vpop.f32.mrf.mxu0
        %v3720 = vadd.f32 %v3583, %v3719
        %3721 = vdwg.mxu0
        %v3722 = vmax.f32 %v3643, 0.0
        %v3723 = vmax.f32 %v3645, 0.0
        %v3724 = vmax.f32 %v3648, 0.0
        %v3725 = vmax.f32 %v3650, 0.0
        %v3726 = vmax.f32 %v3653, 0.0
        %v3727 = vmax.f32 %v3655, 0.0
        %v3728 = vmax.f32 %v3658, 0.0
        %v3729 = vmax.f32 %v3660, 0.0
        %v3730 = vmax.f32 %v3663, 0.0
        %v3731 = vmax.f32 %v3665, 0.0
        %v3732 = vmax.f32 %v3668, 0.0
        %v3733 = vmax.f32 %v3670, 0.0
        %v3734 = vmax.f32 %v3673, 0.0
        %v3735 = vmax.f32 %v3675, 0.0
        %v3736 = vmax.f32 %v3678, 0.0
        %v3737 = vmax.f32 %v3680, 0.0
        %v3738 = vmax.f32 %v3683, 0.0
        %v3739 = vmax.f32 %v3685, 0.0
        %v3740 = vmax.f32 %v3688, 0.0
        %v3741 = vmax.f32 %v3690, 0.0
        %v3742 = vmax.f32 %v3693, 0.0
        %v3743 = vmax.f32 %v3695, 0.0
        %v3744 = vmax.f32 %v3698, 0.0
        %v3745 = vmax.f32 %v3700, 0.0
        %v3746 = vmax.f32 %v3703, 0.0
        %v3747 = vmax.f32 %v3705, 0.0
        %v3748 = vmax.f32 %v3708, 0.0
        %v3749 = vmax.f32 %v3710, 0.0
        %v3750 = vmax.f32 %v3713, 0.0
        %v3751 = vmax.f32 %v3715, 0.0
        %v3752 = vmax.f32 %v3718, 0.0
        %v3753 = vmax.f32 %v3720, 0.0
        %v3754 = vld [vmem:[%s7] sm:$0xf]
        %v3755 = vld [vmem:[%s7 + $0x4] sm:$0xf]
        %v3756 = vld [vmem:[%s7 + $0x8] sm:$0xf]
        %v3757 = vld [vmem:[%s7 + $0xc] sm:$0xf]
        %v3758 = vld [vmem:[%s7 + $0x10] sm:$0xf]
        %v3759 = vld [vmem:[%s7 + $0x14] sm:$0xf]
        %v3760 = vld [vmem:[%s7 + $0x18] sm:$0xf]
        %v3761 = vld [vmem:[%s7 + $0x1c] sm:$0xf]
        %v3762 = vld [vmem:[%s7 + $0x20] sm:$0xf]
        %v3763 = vld [vmem:[%s7 + $0x24] sm:$0xf]
        %v3764 = vld [vmem:[%s7 + $0x28] sm:$0xf]
        %v3765 = vld [vmem:[%s7 + $0x2c] sm:$0xf]
        %v3766 = vld [vmem:[%s7 + $0x30] sm:$0xf]
        %v3767 = vld [vmem:[%s7 + $0x34] sm:$0xf]
        %v3768 = vld [vmem:[%s7 + $0x38] sm:$0xf]
        %v3769 = vld [vmem:[%s7 + $0x3c] sm:$0xf]
        %v3770 = vld [vmem:[%s8] sm:$0x1]
        %v3772 = vperm.slane %v3770, 0
        %v3790 = vunpack.c.l.b16 %v3754
        %v3791 = vunpack.c.l.b16 %v3755
        %v3792 = vunpack.c.l.b16 %v3756
        %v3793 = vunpack.c.l.b16 %v3757
        %v3794 = vunpack.c.l.b16 %v3758
        %v3795 = vunpack.c.l.b16 %v3759
        %v3796 = vunpack.c.l.b16 %v3760
        %v3797 = vunpack.c.l.b16 %v3761
        %v3798 = vunpack.c.l.b16 %v3762
        %v3799 = vunpack.c.l.b16 %v3763
        %v3800 = vunpack.c.l.b16 %v3764
        %v3801 = vunpack.c.l.b16 %v3765
        %v3802 = vunpack.c.l.b16 %v3766
        %v3803 = vunpack.c.l.b16 %v3767
        %v3804 = vunpack.c.l.b16 %v3768
        %v3805 = vunpack.c.l.b16 %v3769
        %v3806 = vpack.c.b16 %v3791, %v3790
        %v3807 = vpack.c.b16 %v3793, %v3792
        %v3808 = vpack.c.b16 %v3795, %v3794
        %v3809 = vpack.c.b16 %v3797, %v3796
        %v3810 = vpack.c.b16 %v3799, %v3798
        %v3811 = vpack.c.b16 %v3801, %v3800
        %v3812 = vpack.c.b16 %v3803, %v3802
        %v3813 = vpack.c.b16 %v3805, %v3804
        %3822 = vmatpush.bf16.msra.mxu0 %v3813
        %3823 = vmatpush.bf16.msra.mxu0 %v3812
        %3824 = vmatpush.bf16.msra.mxu0 %v3811
        %3825 = vmatpush.bf16.msra.mxu0 %v3810
        %3826 = vmatpush.bf16.msra.mxu0 %v3809
        %3827 = vmatpush.bf16.msra.mxu0 %v3808
        %3828 = vmatpush.bf16.msra.mxu0 %v3807
        %3829 = vmatpush.bf16.msra.mxu0 %v3806
        %3830 = vmatmul.bf16.gmra.mxu0 %v447
        %v3831 = vpop.f32.mrf.mxu0
        %v3832 = vadd.f32 %v3772, %v3831
        %v3833 = vpop.f32.mrf.mxu0
        %v3834 = vadd.f32 %v3772, %v3833
        %3835 = vmatmul.bf16.gmra.mxu0 %v448
        %v3836 = vpop.f32.mrf.mxu0
        %v3837 = vadd.f32 %v3772, %v3836
        %v3838 = vpop.f32.mrf.mxu0
        %v3839 = vadd.f32 %v3772, %v3838
        %3840 = vmatmul.bf16.gmra.mxu0 %v449
        %v3841 = vpop.f32.mrf.mxu0
        %v3842 = vadd.f32 %v3772, %v3841
        %v3843 = vpop.f32.mrf.mxu0
        %v3844 = vadd.f32 %v3772, %v3843
        %3845 = vmatmul.bf16.gmra.mxu0 %v450
        %v3846 = vpop.f32.mrf.mxu0
        %v3847 = vadd.f32 %v3772, %v3846
        %v3848 = vpop.f32.mrf.mxu0
        %v3849 = vadd.f32 %v3772, %v3848
        %3850 = vmatmul.bf16.gmra.mxu0 %v451
        %v3851 = vpop.f32.mrf.mxu0
        %v3852 = vadd.f32 %v3772, %v3851
        %v3853 = vpop.f32.mrf.mxu0
        %v3854 = vadd.f32 %v3772, %v3853
        %3855 = vmatmul.bf16.gmra.mxu0 %v452
        %v3856 = vpop.f32.mrf.mxu0
        %v3857 = vadd.f32 %v3772, %v3856
        %v3858 = vpop.f32.mrf.mxu0
        %v3859 = vadd.f32 %v3772, %v3858
        %3860 = vmatmul.bf16.gmra.mxu0 %v453
        %v3861 = vpop.f32.mrf.mxu0
        %v3862 = vadd.f32 %v3772, %v3861
        %v3863 = vpop.f32.mrf.mxu0
        %v3864 = vadd.f32 %v3772, %v3863
        %3865 = vmatmul.bf16.gmra.mxu0 %v454
        %v3866 = vpop.f32.mrf.mxu0
        %v3867 = vadd.f32 %v3772, %v3866
        %v3868 = vpop.f32.mrf.mxu0
        %v3869 = vadd.f32 %v3772, %v3868
        %3870 = vmatmul.bf16.gmra.mxu0 %v455
        %v3871 = vpop.f32.mrf.mxu0
        %v3872 = vadd.f32 %v3772, %v3871
        %v3873 = vpop.f32.mrf.mxu0
        %v3874 = vadd.f32 %v3772, %v3873
        %3875 = vmatmul.bf16.gmra.mxu0 %v456
        %v3876 = vpop.f32.mrf.mxu0
        %v3877 = vadd.f32 %v3772, %v3876
        %v3878 = vpop.f32.mrf.mxu0
        %v3879 = vadd.f32 %v3772, %v3878
        %3880 = vmatmul.bf16.gmra.mxu0 %v457
        %v3881 = vpop.f32.mrf.mxu0
        %v3882 = vadd.f32 %v3772, %v3881
        %v3883 = vpop.f32.mrf.mxu0
        %v3884 = vadd.f32 %v3772, %v3883
        %3885 = vmatmul.bf16.gmra.mxu0 %v458
        %v3886 = vpop.f32.mrf.mxu0
        %v3887 = vadd.f32 %v3772, %v3886
        %v3888 = vpop.f32.mrf.mxu0
        %v3889 = vadd.f32 %v3772, %v3888
        %3890 = vmatmul.bf16.gmra.mxu0 %v459
        %v3891 = vpop.f32.mrf.mxu0
        %v3892 = vadd.f32 %v3772, %v3891
        %v3893 = vpop.f32.mrf.mxu0
        %v3894 = vadd.f32 %v3772, %v3893
        %3895 = vmatmul.bf16.gmra.mxu0 %v460
        %v3896 = vpop.f32.mrf.mxu0
        %v3897 = vadd.f32 %v3772, %v3896
        %v3898 = vpop.f32.mrf.mxu0
        %v3899 = vadd.f32 %v3772, %v3898
        %3900 = vmatmul.bf16.gmra.mxu0 %v461
        %v3901 = vpop.f32.mrf.mxu0
        %v3902 = vadd.f32 %v3772, %v3901
        %v3903 = vpop.f32.mrf.mxu0
        %v3904 = vadd.f32 %v3772, %v3903
        %3905 = vmatmul.bf16.gmra.mxu0 %v462
        %v3906 = vpop.f32.mrf.mxu0
        %v3907 = vadd.f32 %v3772, %v3906
        %v3908 = vpop.f32.mrf.mxu0
        %v3909 = vadd.f32 %v3772, %v3908
        %3910 = vdwg.mxu0
        %v3911 = vadd.f32 %v3722, %v3832
        %v3912 = vadd.f32 %v3723, %v3834
        %v3913 = vadd.f32 %v3724, %v3837
        %v3914 = vadd.f32 %v3725, %v3839
        %v3915 = vadd.f32 %v3726, %v3842
        %v3916 = vadd.f32 %v3727, %v3844
        %v3917 = vadd.f32 %v3728, %v3847
        %v3918 = vadd.f32 %v3729, %v3849
        %v3919 = vadd.f32 %v3730, %v3852
        %v3920 = vadd.f32 %v3731, %v3854
        %v3921 = vadd.f32 %v3732, %v3857
        %v3922 = vadd.f32 %v3733, %v3859
        %v3923 = vadd.f32 %v3734, %v3862
        %v3924 = vadd.f32 %v3735, %v3864
        %v3925 = vadd.f32 %v3736, %v3867
        %v3926 = vadd.f32 %v3737, %v3869
        %v3927 = vadd.f32 %v3738, %v3872
        %v3928 = vadd.f32 %v3739, %v3874
        %v3929 = vadd.f32 %v3740, %v3877
        %v3930 = vadd.f32 %v3741, %v3879
        %v3931 = vadd.f32 %v3742, %v3882
        %v3932 = vadd.f32 %v3743, %v3884
        %v3933 = vadd.f32 %v3744, %v3887
        %v3934 = vadd.f32 %v3745, %v3889
        %v3935 = vadd.f32 %v3746, %v3892
        %v3936 = vadd.f32 %v3747, %v3894
        %v3937 = vadd.f32 %v3748, %v3897
        %v3938 = vadd.f32 %v3749, %v3899
        %v3939 = vadd.f32 %v3750, %v3902
        %v3940 = vadd.f32 %v3751, %v3904
        %v3941 = vadd.f32 %v3752, %v3907
        %v3942 = vadd.f32 %v3753, %v3909
        %3943 = vst [vmem:[%s325] sm:$0xff] %v3911
        %3944 = vst [vmem:[%s325 + $0x8] sm:$0xff] %v3912
        %3945 = vst [vmem:[%s325 + $0x10] sm:$0xff] %v3913
        %3946 = vst [vmem:[%s325 + $0x18] sm:$0xff] %v3914
        %3947 = vst [vmem:[%s325 + $0x20] sm:$0xff] %v3915
        %3948 = vst [vmem:[%s325 + $0x28] sm:$0xff] %v3916
        %3949 = vst [vmem:[%s325 + $0x30] sm:$0xff] %v3917
        %3950 = vst [vmem:[%s325 + $0x38] sm:$0xff] %v3918
        %3951 = vst [vmem:[%s325 + $0x40] sm:$0xff] %v3919
        %3952 = vst [vmem:[%s325 + $0x48] sm:$0xff] %v3920
        %3953 = vst [vmem:[%s325 + $0x50] sm:$0xff] %v3921
        %3954 = vst [vmem:[%s325 + $0x58] sm:$0xff] %v3922
        %3955 = vst [vmem:[%s325 + $0x60] sm:$0xff] %v3923
        %3956 = vst [vmem:[%s325 + $0x68] sm:$0xff] %v3924
        %3957 = vst [vmem:[%s325 + $0x70] sm:$0xff] %v3925
        %3958 = vst [vmem:[%s325 + $0x78] sm:$0xff] %v3926
        %3959 = vst [vmem:[%s325 + $0x80] sm:$0xff] %v3927
        %3960 = vst [vmem:[%s325 + $0x88] sm:$0xff] %v3928
        %3961 = vst [vmem:[%s325 + $0x90] sm:$0xff] %v3929
        %3962 = vst [vmem:[%s325 + $0x98] sm:$0xff] %v3930
        %3963 = vst [vmem:[%s325 + $0xa0] sm:$0xff] %v3931
        %3964 = vst [vmem:[%s325 + $0xa8] sm:$0xff] %v3932
        %3965 = vst [vmem:[%s325 + $0xb0] sm:$0xff] %v3933
        %3966 = vst [vmem:[%s325 + $0xb8] sm:$0xff] %v3934
        %3967 = vst [vmem:[%s325 + $0xc0] sm:$0xff] %v3935
        %3968 = vst [vmem:[%s325 + $0xc8] sm:$0xff] %v3936
        %3969 = vst [vmem:[%s325 + $0xd0] sm:$0xff] %v3937
        %3970 = vst [vmem:[%s325 + $0xd8] sm:$0xff] %v3938
        %3971 = vst [vmem:[%s325 + $0xe0] sm:$0xff] %v3939
        %3972 = vst [vmem:[%s325 + $0xe8] sm:$0xff] %v3940
        %3973 = vst [vmem:[%s325 + $0xf0] sm:$0xff] %v3941
        %3974 = vst [vmem:[%s325 + $0xf8] sm:$0xff] %v3942
        %s3975 = sand.u32 %s225, 1
        %s3976 = scalar_lea.sflag [#allocation5], %s3975
        %s3977 = sand.u32 %s225, 1
        %s3978 = smul.addr %s3977, 256
        %s3979 = scalar_lea.vmem [#allocation4], %s3978
        // Predicated region
        $region57: #{_forward_impl.1} parent=55 // pred_check
          %p3980 = pneg %p235
        $region58: #{_forward_impl.1} parent=55 // pred_check_branch
          %3982 = sbr.rel (%p3980) target = $region60
        $region59: #{_forward_impl.1} parent=55 // pred_region
          %3984 = vsyncadd %s3976, 0
          %s3985 = smul.addr %s23, 32
          %s3986 = smul.addr %s3985, 8
          %s3987 = scalar_lea.hbm %s9, %s3986
          %s3988 = sshll.u32 %s3979, 4
          %s3989 = int_to_ptr.vmem [resolvable:$true] %s3988
          %s3990 = sshll.u32 %s3987, 4
          %s3991 = int_to_ptr.hbm [resolvable:$true] %s3990
          %3996 = dma.vmem_to_hbm [thread:$0]  %s3989, 4096, %s3991, %s3976, 128, 128, 8
        $region60: #{_forward_impl.1} parent=55 // pred_fallthru
          _
      $region56: #{_forward_impl.1} parent=5 // pred_fallthru
        _
      %p3997 = scmp.le.s32.totalorder 2, %s18
      // Predicated region
      $region61: #{_forward_impl.1} parent=5 // pred_check
        %p3998 = pneg %p3997
      $region62: #{_forward_impl.1} parent=5 // pred_check_branch
        %4000 = sbr.rel (%p3998) target = $region64
      $region63: #{_forward_impl.1} parent=5 // pred_region
        %s4001 = ssub.s32 %s18, 2
        // Predicated region
        $region65: #{_forward_impl.1} parent=63 // pred_check
          %p4002 = pneg %p241
        $region66: #{_forward_impl.1} parent=63 // pred_check_branch
          %4004 = sbr.rel (%p4002) target = $region68
        $region67: #{_forward_impl.1} parent=63 // pred_region
          %s4005 = sand.u32 %s226, 1
          %s4006 = scalar_lea.sflag [#allocation5], %s4005
          %s4007 = sand.u32 %s226, 1
          %s4008 = smul.addr %s4007, 256
          %s4009 = scalar_lea.vmem [#allocation4], %s4008
          %4011 = dma.done %s4006, 4096
        $region68: #{_forward_impl.1} parent=63 // pred_fallthru
          _
      $region64: #{_forward_impl.1} parent=5 // pred_fallthru
        _
    $region6: #{_forward_impl.1} parent=1 // loop_footer
      %s22 = sadd.s32 1, %s18
    $region7: #{_forward_impl.1} parent=1 // loop_footer_branch
      %17 = sbr.rel target = $region3
    $region8: #{_forward_impl.1} parent=1 // loop_exit
      _
    %4012 = vsyncpa [#allocation5], 1
    %s4013 = scalar_lea.sflag [#allocation5], 1
    %4014 = vsyncpa %s4013, 1

</llo_original>
